<compile_context>
chip_gen: v5e
topology: v5e:2x2
jax: 0.10.0
libtpu: 0.0.40
codegen_flags: <defaults>
</compile_context>

<pallas_src>
import functools
import math

import jax
import jax.numpy as jnp
from jax.experimental import pallas as pl
from jax.experimental.pallas import tpu as pltpu

# ----------------------------- config (scaled-down SqueezeBERT) --------------
VOCAB_SIZE = 512
MAX_POS = 64
TYPE_VOCAB = 2
HIDDEN = 128            # real model: 768
INTERMEDIATE = 512      # real model: 3072
NUM_LAYERS = 2          # real model: 12
NUM_HEADS = 4           # real model: 12
HEAD_DIM = HIDDEN // NUM_HEADS
Q_GROUPS = K_GROUPS = V_GROUPS = 4
POST_GROUPS = 1
INT_GROUPS = OUT_GROUPS = 4
NUM_REL = 8             # const.NUM_REL
HEAD_PAD = 128          # classifier output padded to a full lane tile
DROPOUT_RATE = 0.1      # const.DROPOUT_RATE (identity at inference/eval)
LN_EPS = 1e-12

BATCH = 2
SEQ = 16


# ----------------------------- small math helpers ----------------------------
def _gelu(x):
    # TODO(synk): torch.nn.GELU() defaults to the erf form; tanh approximation
    # used here (Mosaic-friendly), max abs deviation ~1e-3.
    return 0.5 * x * (1.0 + jnp.tanh(0.7978845608028654 * (x + 0.044715 * x * x * x)))


def _layernorm(x, gamma, beta):
    # Normalize over the last (channel / lane) axis.
    mean = jnp.mean(x, axis=-1, keepdims=True)
    xc = x - mean
    var = jnp.mean(xc * xc, axis=-1, keepdims=True)
    return xc * jax.lax.rsqrt(var + LN_EPS) * gamma + beta


# ----------------------------- the fused Pallas kernel -----------------------
def _squeezebert_kernel(emb_ref, bias_ref,
                        wqkv_ref, bqkv_ref, wpost_ref, bpost_ref,
                        ln1g_ref, ln1b_ref, wint_ref, bint_ref,
                        wout_ref, bout_ref, ln2g_ref, ln2b_ref,
                        embg_ref, embb_ref,
                        prew_ref, preb_ref, clsw_ref, clsb_ref,
                        logits_ref, h_ref, *, batch, seq):
    l = pl.program_id(0)

    # ---- layer 0: embedding LayerNorm (embedding dropout = identity, eval) --
    @pl.when(l == 0)
    def _():
        logits_ref[...] = jnp.zeros_like(logits_ref)
        h_ref[...] = _layernorm(emb_ref[...], embg_ref[...], embb_ref[...])

    h = h_ref[...]                                            # (B*seq, C) f32

    # ---- fused Q/K/V grouped 1x1 convs: one block-diagonal (128,384) matmul -
    # 1/sqrt(head_dim) is folded into the Q weights/bias at pack time.
    qkv = jnp.dot(h.astype(jnp.bfloat16), wqkv_ref[...],
                  preferred_element_type=jnp.float32) + bqkv_ref[...]
    qkv_bf = qkv.astype(jnp.bfloat16)                         # bf16 MXU operands

    def split_heads(off):
        # (B*seq, HIDDEN) lane block at `off` -> (NUM_HEADS*B, seq, HEAD_DIM),
        # leading index = head * batch + b.  Only aligned lane slices, leading
        # reshapes and a major-axis concat (no lane-crossing relayouts).
        parts = [qkv_bf[:, off + hh * HEAD_DIM: off + (hh + 1) * HEAD_DIM]
                 .reshape(batch, seq, HEAD_DIM) for hh in range(NUM_HEADS)]
        return jnp.concatenate(parts, axis=0)

    qb = split_heads(0)                                       # (B*H, seq, d) bf16
    kb = split_heads(HIDDEN)
    vb = split_heads(2 * HIDDEN)

    # ---- batched multi-head attention: softmax computed ONCE on the stack ---
    s = jnp.einsum('bqd,bkd->bqk', qb, kb,
                   preferred_element_type=jnp.float32)        # (B*H, seq, seq) f32
    s = s + bias_ref[...]                                     # pre-broadcast bias
    s = s - jnp.max(s, axis=-1, keepdims=True)
    e = jnp.exp(s)
    p = e * pl.reciprocal(jnp.sum(e, axis=-1, keepdims=True), approx=True)
    # attention-prob dropout: identity in eval mode
    ctx3 = jnp.einsum('bqk,bkd->bqd', p.astype(jnp.bfloat16), vb,
                      preferred_element_type=jnp.float32)     # (B*H, seq, d)
    ctx = jnp.concatenate(
        [ctx3[hh * batch:(hh + 1) * batch].reshape(batch * seq, HEAD_DIM)
         for hh in range(NUM_HEADS)], axis=1)                 # (B*seq, C)

    # ---- post-attention conv + residual add + channel LayerNorm ------------
    post = jnp.dot(ctx.astype(jnp.bfloat16), wpost_ref[...],
                   preferred_element_type=jnp.float32) + bpost_ref[...]
    h1 = _layernorm(post + h, ln1g_ref[...], ln1b_ref[...])   # dropout = identity

    # ---- FFN: intermediate grouped conv (GELU) + output conv + add&LN ------
    inter = _gelu(jnp.dot(h1.astype(jnp.bfloat16), wint_ref[...],
                          preferred_element_type=jnp.float32) + bint_ref[...])
    out = jnp.dot(inter.astype(jnp.bfloat16), wout_ref[...],
                  preferred_element_type=jnp.float32) + bout_ref[...]
    h2 = _layernorm(out + h1, ln2g_ref[...], ln2b_ref[...])
    h_ref[...] = h2

    # ---- classifier head on the last layer ----------------------------------
    @pl.when(l == pl.num_programs(0) - 1)
    def _():
        # pooler = hidden_state[:, 0] -> one strided sublane read (rows b*seq)
        pooled = h_ref[pl.ds(0, batch, stride=seq), :]        # (B, C)
        p1 = _gelu(jnp.dot(pooled.astype(jnp.bfloat16), prew_ref[...],
                           preferred_element_type=jnp.float32) + preb_ref[...])
        # classifier dropout: identity in eval mode
        logits_ref[...] = jnp.dot(p1.astype(jnp.bfloat16), clsw_ref[...],
                                  preferred_element_type=jnp.float32) + clsb_ref[...]


# ----------------------------- wrapper ---------------------------------------
def _rep_spec(shape):
    n = len(shape)
    return pl.BlockSpec(shape, lambda l, n=n: (0,) * n)


def _layer_spec(tail_shape):
    # Leading layer axis squeezed away: kernel sees a 2-D weight ref.
    n = len(tail_shape)
    return pl.BlockSpec((pl.Squeezed(),) + tuple(tail_shape),
                        lambda l, n=n: (l,) + (0,) * n)


def squeezebert_class_forward(packed, input_ids, attention_mask, token_type_ids):
    B, W = input_ids.shape
    # --- SqueezeBertEmbeddings: table gathers are plain-JAX glue -------------
    emb = (packed["word_emb"][input_ids]
           + packed["pos_emb"][jnp.arange(W)][None, :, :]
           + packed["type_emb"][token_type_ids])                      # (B, W, C)
    emb_flat = emb.reshape(B * W, HIDDEN).astype(jnp.float32)         # lane-dense
    # Additive attention mask, pre-broadcast per (head, batch) so the kernel
    # adds it once to the stacked scores (no in-kernel broadcast/tile).
    bias = (1.0 - attention_mask.astype(jnp.float32)) * -10000.0      # (B, W)
    bias = jnp.broadcast_to(bias[:, None, :], (B, W, W))              # (B, Wq, Wk)
    bias_hb = jnp.tile(bias, (NUM_HEADS, 1, 1))                       # (H*B, Wq, Wk)

    kernel = functools.partial(_squeezebert_kernel, batch=B, seq=W)
    in_specs = [
        _rep_spec((B * W, HIDDEN)),              # emb_flat
        _rep_spec((NUM_HEADS * B, W, W)),        # mask bias (head-stacked)
        _layer_spec((HIDDEN, 3 * HIDDEN)),       # w_qkv
        _layer_spec((1, 3 * HIDDEN)),            # b_qkv
        _layer_spec((HIDDEN, HIDDEN)),           # w_post
        _layer_spec((1, HIDDEN)),                # b_post
        _layer_spec((1, HIDDEN)),                # ln1_g
        _layer_spec((1, HIDDEN)),                # ln1_b
        _layer_spec((HIDDEN, INTERMEDIATE)),     # w_int
        _layer_spec((1, INTERMEDIATE)),          # b_int
        _layer_spec((INTERMEDIATE, HIDDEN)),     # w_out
        _layer_spec((1, HIDDEN)),                # b_out
        _layer_spec((1, HIDDEN)),                # ln2_g
        _layer_spec((1, HIDDEN)),                # ln2_b
        _rep_spec((1, HIDDEN)),                  # emb_ln_g
        _rep_spec((1, HIDDEN)),                  # emb_ln_b
        _rep_spec((HIDDEN, HIDDEN)),             # pre_classifier W^T (bf16)
        _rep_spec((1, HIDDEN)),                  # pre_classifier b
        _rep_spec((HIDDEN, HEAD_PAD)),           # classifier W^T (lane-padded)
        _rep_spec((1, HEAD_PAD)),                # classifier b (lane-padded)
    ]
    logits_pad = pl.pallas_call(
        kernel,
        out_shape=jax.ShapeDtypeStruct((B, HEAD_PAD), jnp.float32),
        grid=(NUM_LAYERS,),
        in_specs=in_specs,
        out_specs=pl.BlockSpec((B, HEAD_PAD), lambda l: (0, 0)),
        scratch_shapes=[pltpu.VMEM((B * W, HIDDEN), jnp.float32)],
        compiler_params=pltpu.CompilerParams(
            dimension_semantics=("arbitrary",)),  # layers carry state sequentially
    )(emb_flat, bias_hb,
      packed["w_qkv"], packed["b_qkv"], packed["w_post"], packed["b_post"],
      packed["ln1_g"], packed["ln1_b"], packed["w_int"], packed["b_int"],
      packed["w_out"], packed["b_out"], packed["ln2_g"], packed["ln2_b"],
      packed["emb_ln_g"], packed["emb_ln_b"],
      packed["pre_w"], packed["pre_b"], packed["cls_w"], packed["cls_b"])
    return logits_pad[:, :NUM_REL]


# ----------------------------- parameters ------------------------------------
def init_params(key):
    def nrm(key, shape):
        return 0.02 * jax.random.normal(key, shape, jnp.float32)

    keys = jax.random.split(key, 8 + NUM_LAYERS)
    p = {
        "word_emb": nrm(keys[0], (VOCAB_SIZE, HIDDEN)),
        "pos_emb": nrm(keys[1], (MAX_POS, HIDDEN)),
        "type_emb": nrm(keys[2], (TYPE_VOCAB, HIDDEN)),
        "emb_ln_g": jnp.ones((HIDDEN,), jnp.float32),
        "emb_ln_b": jnp.zeros((HIDDEN,), jnp.float32),
        "pre_w": nrm(keys[3], (HIDDEN, HIDDEN)),        # torch Linear (out, in)
        "pre_b": jnp.zeros((HIDDEN,), jnp.float32),
        "cls_w": nrm(keys[4], (NUM_REL, HIDDEN)),
        "cls_b": jnp.zeros((NUM_REL,), jnp.float32),
        "layers": [],
    }
    for li in range(NUM_LAYERS):
        lk = jax.random.split(keys[8 + li], 6)
        p["layers"].append({
            "q_w": nrm(lk[0], (HIDDEN, HIDDEN // Q_GROUPS)),
            "q_b": jnp.zeros((HIDDEN,), jnp.float32),
            "k_w": nrm(lk[1], (HIDDEN, HIDDEN // K_GROUPS)),
            "k_b": jnp.zeros((HIDDEN,), jnp.float32),
            "v_w": nrm(lk[2], (HIDDEN, HIDDEN // V_GROUPS)),
            "v_b": jnp.zeros((HIDDEN,), jnp.float32),
            "post_w": nrm(lk[3], (HIDDEN, HIDDEN // POST_GROUPS)),
            "post_b": jnp.zeros((HIDDEN,), jnp.float32),
            "post_ln_g": jnp.ones((HIDDEN,), jnp.float32),
            "post_ln_b": jnp.zeros((HIDDEN,), jnp.float32),
            "int_w": nrm(lk[4], (INTERMEDIATE, HIDDEN // INT_GROUPS)),
            "int_b": jnp.zeros((INTERMEDIATE,), jnp.float32),
            "out_w": nrm(lk[5], (HIDDEN, INTERMEDIATE // OUT_GROUPS)),
            "out_b": jnp.zeros((HIDDEN,), jnp.float32),
            "out_ln_g": jnp.ones((HIDDEN,), jnp.float32),
            "out_ln_b": jnp.zeros((HIDDEN,), jnp.float32),
        })
    return p


def pack_params(p):
    """Convert torch-layout grouped-conv weights to dense block-diagonal (Cin,Cout)
    matmul weights (bf16), fold 1/sqrt(head_dim) into the Q projection, and stack
    per-layer params along a leading layer axis."""

    def dense_from_grouped(w, groups):
        cout, cin_g = w.shape
        cout_g = cout // groups
        cin = cin_g * groups
        dense = jnp.zeros((cin, cout), jnp.float32)
        for g in range(groups):
            blk = w[g * cout_g:(g + 1) * cout_g, :]            # (cout_g, cin_g)
            dense = dense.at[g * cin_g:(g + 1) * cin_g,
                             g * cout_g:(g + 1) * cout_g].set(blk.T)
        return dense

    scale = 1.0 / math.sqrt(HEAD_DIM)
    acc = {k: [] for k in ("w_qkv", "b_qkv", "w_post", "b_post", "ln1_g", "ln1_b",
                           "w_int", "b_int", "w_out", "b_out", "ln2_g", "ln2_b")}
    for layer in p["layers"]:
        qd = dense_from_grouped(layer["q_w"], Q_GROUPS) * scale   # fold 1/sqrt(d)
        kd = dense_from_grouped(layer["k_w"], K_GROUPS)
        vd = dense_from_grouped(layer["v_w"], V_GROUPS)
        acc["w_qkv"].append(jnp.concatenate([qd, kd, vd], axis=1))      # (C, 3C)
        acc["b_qkv"].append(jnp.concatenate(
            [layer["q_b"] * scale, layer["k_b"], layer["v_b"]])[None, :])
        acc["w_post"].append(dense_from_grouped(layer["post_w"], POST_GROUPS))
        acc["b_post"].append(layer["post_b"][None, :])
        acc["ln1_g"].append(layer["post_ln_g"][None, :])
        acc["ln1_b"].append(layer["post_ln_b"][None, :])
        acc["w_int"].append(dense_from_grouped(layer["int_w"], INT_GROUPS))
        acc["b_int"].append(layer["int_b"][None, :])
        acc["w_out"].append(dense_from_grouped(layer["out_w"], OUT_GROUPS))
        acc["b_out"].append(layer["out_b"][None, :])
        acc["ln2_g"].append(layer["out_ln_g"][None, :])
        acc["ln2_b"].append(layer["out_ln_b"][None, :])

    cls_w_pad = jnp.zeros((HIDDEN, HEAD_PAD), jnp.float32
                          ).at[:, :NUM_REL].set(p["cls_w"].T)
    cls_b_pad = jnp.zeros((1, HEAD_PAD), jnp.float32).at[0, :NUM_REL].set(p["cls_b"])

    packed = {
        "word_emb": p["word_emb"],
        "pos_emb": p["pos_emb"],
        "type_emb": p["type_emb"],
        "emb_ln_g": p["emb_ln_g"][None, :],
        "emb_ln_b": p["emb_ln_b"][None, :],
        "pre_w": p["pre_w"].T.astype(jnp.bfloat16),
        "pre_b": p["pre_b"][None, :],
        "cls_w": cls_w_pad.astype(jnp.bfloat16),
        "cls_b": cls_b_pad,
    }
    for name in ("w_qkv", "w_post", "w_int", "w_out"):
        packed[name] = jnp.stack(acc[name]).astype(jnp.bfloat16)        # bf16 MXU
    for name in ("b_qkv", "b_post", "ln1_g", "ln1_b", "b_int",
                 "b_out", "ln2_g", "ln2_b"):
        packed[name] = jnp.stack(acc[name])                             # f32
    return packed


# ----------------------------- main -------------------------------------------
if __name__ == "__main__":
    root = jax.random.PRNGKey(0)
    k_param, k_ids = jax.random.split(root)
    params = init_params(k_param)
    packed = pack_params(params)

    input_ids = jax.random.randint(k_ids, (BATCH, SEQ), 0, VOCAB_SIZE, jnp.int32)
    attention_mask = jnp.ones((BATCH, SEQ), jnp.int32).at[1, SEQ - 2:].set(0)
    token_type_ids = jnp.zeros((BATCH, SEQ), jnp.int32)

    fwd = jax.jit(squeezebert_class_forward)
    logits = fwd(packed, input_ids, attention_mask, token_type_ids)
    logits = jax.block_until_ready(logits)
    assert logits.shape == (BATCH, NUM_REL) and logits.dtype == jnp.float32
    assert bool(jnp.all(jnp.isfinite(logits)))
    print("KERNEL_OK")
</pallas_src>

<mosaic_0001>
module attributes {stable_mosaic.version = 11 : i64} {
  func.func @_squeezebert_kernel(%arg0: i32, %arg1: memref<32x128xf32, #tpu.memory_space<vmem>>, %arg2: memref<8x16x16xf32, #tpu.memory_space<vmem>>, %arg3: memref<1x128x384xbf16, #tpu.memory_space<vmem>>, %arg4: memref<1x1x384xf32, #tpu.memory_space<vmem>>, %arg5: memref<1x128x128xbf16, #tpu.memory_space<vmem>>, %arg6: memref<1x1x128xf32, #tpu.memory_space<vmem>>, %arg7: memref<1x1x128xf32, #tpu.memory_space<vmem>>, %arg8: memref<1x1x128xf32, #tpu.memory_space<vmem>>, %arg9: memref<1x128x512xbf16, #tpu.memory_space<vmem>>, %arg10: memref<1x1x512xf32, #tpu.memory_space<vmem>>, %arg11: memref<1x512x128xbf16, #tpu.memory_space<vmem>>, %arg12: memref<1x1x128xf32, #tpu.memory_space<vmem>>, %arg13: memref<1x1x128xf32, #tpu.memory_space<vmem>>, %arg14: memref<1x1x128xf32, #tpu.memory_space<vmem>>, %arg15: memref<1x128xf32, #tpu.memory_space<vmem>>, %arg16: memref<1x128xf32, #tpu.memory_space<vmem>>, %arg17: memref<128x128xbf16, #tpu.memory_space<vmem>>, %arg18: memref<1x128xf32, #tpu.memory_space<vmem>>, %arg19: memref<128x128xbf16, #tpu.memory_space<vmem>>, %arg20: memref<1x128xf32, #tpu.memory_space<vmem>>, %arg21: memref<2x128xf32, #tpu.memory_space<vmem>>, %arg22: memref<32x128xf32, #tpu.memory_space<vmem>>) attributes {dimension_semantics = [#tpu.dimension_semantics<arbitrary>], iteration_bounds = array<i64: 2>, scalar_prefetch = 0 : i64, scratch_operands = 1 : i64, tpu.core_type = #tpu.core_type<tc>, window_params = [{pipeline_mode = #tpu.pipeline_mode<synchronous>, transform_indices = @transform_0, window_bounds = array<i64: 32, 128>}, {pipeline_mode = #tpu.pipeline_mode<synchronous>, transform_indices = @transform_1, window_bounds = array<i64: 8, 16, 16>}, {transform_indices = @transform_2, window_bounds = array<i64: 1, 128, 384>}, {transform_indices = @transform_3, window_bounds = array<i64: 1, 1, 384>}, {transform_indices = @transform_4, window_bounds = array<i64: 1, 128, 128>}, {transform_indices = @transform_5, window_bounds = array<i64: 1, 1, 128>}, {transform_indices = @transform_6, window_bounds = array<i64: 1, 1, 128>}, {transform_indices = @transform_7, window_bounds = array<i64: 1, 1, 128>}, {transform_indices = @transform_8, window_bounds = array<i64: 1, 128, 512>}, {transform_indices = @transform_9, window_bounds = array<i64: 1, 1, 512>}, {transform_indices = @transform_10, window_bounds = array<i64: 1, 512, 128>}, {transform_indices = @transform_11, window_bounds = array<i64: 1, 1, 128>}, {transform_indices = @transform_12, window_bounds = array<i64: 1, 1, 128>}, {transform_indices = @transform_13, window_bounds = array<i64: 1, 1, 128>}, {pipeline_mode = #tpu.pipeline_mode<synchronous>, transform_indices = @transform_14, window_bounds = array<i64: 1, 128>}, {pipeline_mode = #tpu.pipeline_mode<synchronous>, transform_indices = @transform_15, window_bounds = array<i64: 1, 128>}, {pipeline_mode = #tpu.pipeline_mode<synchronous>, transform_indices = @transform_16, window_bounds = array<i64: 128, 128>}, {pipeline_mode = #tpu.pipeline_mode<synchronous>, transform_indices = @transform_17, window_bounds = array<i64: 1, 128>}, {pipeline_mode = #tpu.pipeline_mode<synchronous>, transform_indices = @transform_18, window_bounds = array<i64: 128, 128>}, {pipeline_mode = #tpu.pipeline_mode<synchronous>, transform_indices = @transform_19, window_bounds = array<i64: 1, 128>}, {pipeline_mode = #tpu.pipeline_mode<synchronous>, transform_indices = @transform_20, window_bounds = array<i64: 2, 128>}]} {
    %c0_i32 = arith.constant 0 : i32
    %0 = arith.cmpi eq, %arg0, %c0_i32 : i32
    %1 = arith.extui %0 : i1 to i32
    %c0_i32_0 = arith.constant 0 : i32
    %2 = arith.cmpi ne, %1, %c0_i32_0 : i32
    scf.if %2 {
      %cst_65 = arith.constant 0.000000e+00 : f32
      %155 = vector.broadcast %cst_65 : f32 to vector<2x128xf32>
      %c0_66 = arith.constant 0 : index
      %c0_67 = arith.constant 0 : index
      %156 = vector.load %arg21[%c0_66, %c0_67] : memref<2x128xf32, #tpu.memory_space<vmem>>, vector<2x128xf32>
      tpu.vector_store %arg21[%c0_66, %c0_67], %155 {strides = array<i32>} : memref<2x128xf32, #tpu.memory_space<vmem>>, vector<2x128xf32>,
      %c0_68 = arith.constant 0 : index
      %c0_69 = arith.constant 0 : index
      %157 = vector.load %arg1[%c0_68, %c0_69] : memref<32x128xf32, #tpu.memory_space<vmem>>, vector<32x128xf32>
      %c0_70 = arith.constant 0 : index
      %c0_71 = arith.constant 0 : index
      %158 = vector.load %arg15[%c0_70, %c0_71] : memref<1x128xf32, #tpu.memory_space<vmem>>, vector<1x128xf32>
      %c0_72 = arith.constant 0 : index
      %c0_73 = arith.constant 0 : index
      %159 = vector.load %arg16[%c0_72, %c0_73] : memref<1x128xf32, #tpu.memory_space<vmem>>, vector<1x128xf32>
      %cst_74 = arith.constant dense<0.000000e+00> : vector<32xf32>
      %160 = vector.multi_reduction <add>, %157, %cst_74 [1] : vector<32x128xf32> to vector<32xf32>
      %161 = vector.shape_cast %160 : vector<32xf32> to vector<32x1xf32>
      %cst_75 = arith.constant 1.280000e+02 : f32
      %162 = vector.broadcast %cst_75 : f32 to vector<32x1xf32>
      %163 = arith.divf %161, %162 : vector<32x1xf32>
      %164 = vector.broadcast %163 : vector<32x1xf32> to vector<32x128xf32>
      %165 = arith.subf %157, %164 : vector<32x128xf32>
      %166 = arith.mulf %165, %165 : vector<32x128xf32>
      %cst_76 = arith.constant dense<0.000000e+00> : vector<32xf32>
      %167 = vector.multi_reduction <add>, %166, %cst_76 [1] : vector<32x128xf32> to vector<32xf32>
      %168 = vector.shape_cast %167 : vector<32xf32> to vector<32x1xf32>
      %cst_77 = arith.constant 1.280000e+02 : f32
      %169 = vector.broadcast %cst_77 : f32 to vector<32x1xf32>
      %170 = arith.divf %168, %169 : vector<32x1xf32>
      %cst_78 = arith.constant 9.99999996E-13 : f32
      %171 = vector.broadcast %cst_78 : f32 to vector<32x1xf32>
      %172 = arith.addf %170, %171 : vector<32x1xf32>
      %173 = math.rsqrt %172 : vector<32x1xf32>
      %174 = vector.broadcast %173 : vector<32x1xf32> to vector<32x128xf32>
      %175 = arith.mulf %165, %174 : vector<32x128xf32>
      %176 = vector.broadcast %158 : vector<1x128xf32> to vector<32x128xf32>
      %177 = arith.mulf %175, %176 : vector<32x128xf32>
      %178 = vector.broadcast %159 : vector<1x128xf32> to vector<32x128xf32>
      %179 = arith.addf %177, %178 : vector<32x128xf32>
      %c0_79 = arith.constant 0 : index
      %c0_80 = arith.constant 0 : index
      %180 = vector.load %arg22[%c0_79, %c0_80] : memref<32x128xf32, #tpu.memory_space<vmem>>, vector<32x128xf32>
      tpu.vector_store %arg22[%c0_79, %c0_80], %179 {strides = array<i32>} : memref<32x128xf32, #tpu.memory_space<vmem>>, vector<32x128xf32>,
    } else {
    }
    %c0 = arith.constant 0 : index
    %c0_1 = arith.constant 0 : index
    %3 = vector.load %arg22[%c0, %c0_1] : memref<32x128xf32, #tpu.memory_space<vmem>>, vector<32x128xf32>
    %4 = arith.truncf %3 : vector<32x128xf32> to vector<32x128xbf16>
    %c0_2 = arith.constant 0 : index
    %c0_3 = arith.constant 0 : index
    %c0_4 = arith.constant 0 : index
    %5 = vector.load %arg3[%c0_2, %c0_3, %c0_4] : memref<1x128x384xbf16, #tpu.memory_space<vmem>>, vector<1x128x384xbf16>
    %6 = vector.shape_cast %5 : vector<1x128x384xbf16> to vector<128x384xbf16>
    %cst = arith.constant dense<0.000000e+00> : vector<32x384xf32>
    %7 = tpu.matmul %4, %6, %cst {dimension_numbers = #tpu.dot_dimension_numbers<[1], [0], [0], [1], [0, 0, 1, 1], [], []>} : vector<32x128xbf16>, vector<128x384xbf16>, vector<32x384xf32> -> vector<32x384xf32>
    %c0_5 = arith.constant 0 : index
    %c0_6 = arith.constant 0 : index
    %c0_7 = arith.constant 0 : index
    %8 = vector.load %arg4[%c0_5, %c0_6, %c0_7] : memref<1x1x384xf32, #tpu.memory_space<vmem>>, vector<1x1x384xf32>
    %9 = vector.shape_cast %8 : vector<1x1x384xf32> to vector<1x384xf32>
    %10 = vector.broadcast %9 : vector<1x384xf32> to vector<32x384xf32>
    %11 = arith.addf %7, %10 : vector<32x384xf32>
    %12 = arith.truncf %11 : vector<32x384xf32> to vector<32x384xbf16>
    %13 = vector.extract_strided_slice %12 {offsets = [0, 0], sizes = [32, 32], strides = [1, 1]} : vector<32x384xbf16> to vector<32x32xbf16>
    %14 = vector.shape_cast %13 : vector<32x32xbf16> to vector<2x16x32xbf16>
    %15 = vector.extract_strided_slice %12 {offsets = [0, 32], sizes = [32, 32], strides = [1, 1]} : vector<32x384xbf16> to vector<32x32xbf16>
    %16 = vector.shape_cast %15 : vector<32x32xbf16> to vector<2x16x32xbf16>
    %17 = vector.extract_strided_slice %12 {offsets = [0, 64], sizes = [32, 32], strides = [1, 1]} : vector<32x384xbf16> to vector<32x32xbf16>
    %18 = vector.shape_cast %17 : vector<32x32xbf16> to vector<2x16x32xbf16>
    %19 = vector.extract_strided_slice %12 {offsets = [0, 96], sizes = [32, 32], strides = [1, 1]} : vector<32x384xbf16> to vector<32x32xbf16>
    %20 = vector.shape_cast %19 : vector<32x32xbf16> to vector<2x16x32xbf16>
    %21 = tpu.concatenate %14, %16, %18, %20 in 0 : vector<2x16x32xbf16>, vector<2x16x32xbf16>, vector<2x16x32xbf16>, vector<2x16x32xbf16> -> vector<8x16x32xbf16>
    %22 = vector.extract_strided_slice %12 {offsets = [0, 128], sizes = [32, 32], strides = [1, 1]} : vector<32x384xbf16> to vector<32x32xbf16>
    %23 = vector.shape_cast %22 : vector<32x32xbf16> to vector<2x16x32xbf16>
    %24 = vector.extract_strided_slice %12 {offsets = [0, 160], sizes = [32, 32], strides = [1, 1]} : vector<32x384xbf16> to vector<32x32xbf16>
    %25 = vector.shape_cast %24 : vector<32x32xbf16> to vector<2x16x32xbf16>
    %26 = vector.extract_strided_slice %12 {offsets = [0, 192], sizes = [32, 32], strides = [1, 1]} : vector<32x384xbf16> to vector<32x32xbf16>
    %27 = vector.shape_cast %26 : vector<32x32xbf16> to vector<2x16x32xbf16>
    %28 = vector.extract_strided_slice %12 {offsets = [0, 224], sizes = [32, 32], strides = [1, 1]} : vector<32x384xbf16> to vector<32x32xbf16>
    %29 = vector.shape_cast %28 : vector<32x32xbf16> to vector<2x16x32xbf16>
    %30 = tpu.concatenate %23, %25, %27, %29 in 0 : vector<2x16x32xbf16>, vector<2x16x32xbf16>, vector<2x16x32xbf16>, vector<2x16x32xbf16> -> vector<8x16x32xbf16>
    %31 = vector.extract_strided_slice %12 {offsets = [0, 256], sizes = [32, 32], strides = [1, 1]} : vector<32x384xbf16> to vector<32x32xbf16>
    %32 = vector.shape_cast %31 : vector<32x32xbf16> to vector<2x16x32xbf16>
    %33 = vector.extract_strided_slice %12 {offsets = [0, 288], sizes = [32, 32], strides = [1, 1]} : vector<32x384xbf16> to vector<32x32xbf16>
    %34 = vector.shape_cast %33 : vector<32x32xbf16> to vector<2x16x32xbf16>
    %35 = vector.extract_strided_slice %12 {offsets = [0, 320], sizes = [32, 32], strides = [1, 1]} : vector<32x384xbf16> to vector<32x32xbf16>
    %36 = vector.shape_cast %35 : vector<32x32xbf16> to vector<2x16x32xbf16>
    %37 = vector.extract_strided_slice %12 {offsets = [0, 352], sizes = [32, 32], strides = [1, 1]} : vector<32x384xbf16> to vector<32x32xbf16>
    %38 = vector.shape_cast %37 : vector<32x32xbf16> to vector<2x16x32xbf16>
    %39 = tpu.concatenate %32, %34, %36, %38 in 0 : vector<2x16x32xbf16>, vector<2x16x32xbf16>, vector<2x16x32xbf16>, vector<2x16x32xbf16> -> vector<8x16x32xbf16>
    "tpu.trace_start"() <{level = 10 : i32, message = "bqd,bkd->bqk"}> : () -> ()
    %cst_8 = arith.constant dense<0.000000e+00> : vector<8x16x16xf32>
    %40 = tpu.matmul %21, %30, %cst_8 {dimension_numbers = #tpu.dot_dimension_numbers<[2], [2], [1], [1], [0, 0, 0, 1, 1, 1], [0], [0]>} : vector<8x16x32xbf16>, vector<8x16x32xbf16>, vector<8x16x16xf32> -> vector<8x16x16xf32>
    "tpu.trace_stop"() : () -> ()
    %c0_9 = arith.constant 0 : index
    %c0_10 = arith.constant 0 : index
    %c0_11 = arith.constant 0 : index
    %41 = vector.load %arg2[%c0_9, %c0_10, %c0_11] : memref<8x16x16xf32, #tpu.memory_space<vmem>>, vector<8x16x16xf32>
    %42 = arith.addf %40, %41 : vector<8x16x16xf32>
    %cst_12 = arith.constant dense<0xFF800000> : vector<8x16xf32>
    %43 = vector.multi_reduction <maximumf>, %42, %cst_12 [2] : vector<8x16x16xf32> to vector<8x16xf32>
    %44 = vector.shape_cast %43 : vector<8x16xf32> to vector<8x16x1xf32>
    %45 = vector.broadcast %44 : vector<8x16x1xf32> to vector<8x16x16xf32>
    %46 = arith.subf %42, %45 : vector<8x16x16xf32>
    %47 = math.exp %46 : vector<8x16x16xf32>
    %cst_13 = arith.constant dense<0.000000e+00> : vector<8x16xf32>
    %48 = vector.multi_reduction <add>, %47, %cst_13 [2] : vector<8x16x16xf32> to vector<8x16xf32>
    %49 = vector.shape_cast %48 : vector<8x16xf32> to vector<8x16x1xf32>
    %50 = tpu.reciprocal %49 {approx = true} : vector<8x16x1xf32> -> vector<8x16x1xf32>
    %51 = vector.broadcast %50 : vector<8x16x1xf32> to vector<8x16x16xf32>
    %52 = arith.mulf %47, %51 : vector<8x16x16xf32>
    %53 = arith.truncf %52 : vector<8x16x16xf32> to vector<8x16x16xbf16>
    "tpu.trace_start"() <{level = 10 : i32, message = "bqk,bkd->bqd"}> : () -> ()
    %cst_14 = arith.constant dense<0.000000e+00> : vector<8x16x32xf32>
    %54 = tpu.matmul %53, %39, %cst_14 {dimension_numbers = #tpu.dot_dimension_numbers<[2], [1], [1], [2], [0, 0, 0, 1, 1, 2], [0], [0]>} : vector<8x16x16xbf16>, vector<8x16x32xbf16>, vector<8x16x32xf32> -> vector<8x16x32xf32>
    "tpu.trace_stop"() : () -> ()
    %55 = vector.extract_strided_slice %54 {offsets = [0, 0, 0], sizes = [2, 16, 32], strides = [1, 1, 1]} : vector<8x16x32xf32> to vector<2x16x32xf32>
    %56 = vector.shape_cast %55 : vector<2x16x32xf32> to vector<32x32xf32>
    %57 = vector.extract_strided_slice %54 {offsets = [2, 0, 0], sizes = [2, 16, 32], strides = [1, 1, 1]} : vector<8x16x32xf32> to vector<2x16x32xf32>
    %58 = vector.shape_cast %57 : vector<2x16x32xf32> to vector<32x32xf32>
    %59 = vector.extract_strided_slice %54 {offsets = [4, 0, 0], sizes = [2, 16, 32], strides = [1, 1, 1]} : vector<8x16x32xf32> to vector<2x16x32xf32>
    %60 = vector.shape_cast %59 : vector<2x16x32xf32> to vector<32x32xf32>
    %61 = vector.extract_strided_slice %54 {offsets = [6, 0, 0], sizes = [2, 16, 32], strides = [1, 1, 1]} : vector<8x16x32xf32> to vector<2x16x32xf32>
    %62 = vector.shape_cast %61 : vector<2x16x32xf32> to vector<32x32xf32>
    %63 = tpu.concatenate %56, %58, %60, %62 in 1 : vector<32x32xf32>, vector<32x32xf32>, vector<32x32xf32>, vector<32x32xf32> -> vector<32x128xf32>
    %64 = arith.truncf %63 : vector<32x128xf32> to vector<32x128xbf16>
    %c0_15 = arith.constant 0 : index
    %c0_16 = arith.constant 0 : index
    %c0_17 = arith.constant 0 : index
    %65 = vector.load %arg5[%c0_15, %c0_16, %c0_17] : memref<1x128x128xbf16, #tpu.memory_space<vmem>>, vector<1x128x128xbf16>
    %66 = vector.shape_cast %65 : vector<1x128x128xbf16> to vector<128x128xbf16>
    %cst_18 = arith.constant dense<0.000000e+00> : vector<32x128xf32>
    %67 = tpu.matmul %64, %66, %cst_18 {dimension_numbers = #tpu.dot_dimension_numbers<[1], [0], [0], [1], [0, 0, 1, 1], [], []>} : vector<32x128xbf16>, vector<128x128xbf16>, vector<32x128xf32> -> vector<32x128xf32>
    %c0_19 = arith.constant 0 : index
    %c0_20 = arith.constant 0 : index
    %c0_21 = arith.constant 0 : index
    %68 = vector.load %arg6[%c0_19, %c0_20, %c0_21] : memref<1x1x128xf32, #tpu.memory_space<vmem>>, vector<1x1x128xf32>
    %69 = vector.shape_cast %68 : vector<1x1x128xf32> to vector<1x128xf32>
    %70 = vector.broadcast %69 : vector<1x128xf32> to vector<32x128xf32>
    %71 = arith.addf %67, %70 : vector<32x128xf32>
    %72 = arith.addf %71, %3 : vector<32x128xf32>
    %c0_22 = arith.constant 0 : index
    %c0_23 = arith.constant 0 : index
    %c0_24 = arith.constant 0 : index
    %73 = vector.load %arg7[%c0_22, %c0_23, %c0_24] : memref<1x1x128xf32, #tpu.memory_space<vmem>>, vector<1x1x128xf32>
    %74 = vector.shape_cast %73 : vector<1x1x128xf32> to vector<1x128xf32>
    %c0_25 = arith.constant 0 : index
    %c0_26 = arith.constant 0 : index
    %c0_27 = arith.constant 0 : index
    %75 = vector.load %arg8[%c0_25, %c0_26, %c0_27] : memref<1x1x128xf32, #tpu.memory_space<vmem>>, vector<1x1x128xf32>
    %76 = vector.shape_cast %75 : vector<1x1x128xf32> to vector<1x128xf32>
    %cst_28 = arith.constant dense<0.000000e+00> : vector<32xf32>
    %77 = vector.multi_reduction <add>, %72, %cst_28 [1] : vector<32x128xf32> to vector<32xf32>
    %78 = vector.shape_cast %77 : vector<32xf32> to vector<32x1xf32>
    %cst_29 = arith.constant 1.280000e+02 : f32
    %79 = vector.broadcast %cst_29 : f32 to vector<32x1xf32>
    %80 = arith.divf %78, %79 : vector<32x1xf32>
    %81 = vector.broadcast %80 : vector<32x1xf32> to vector<32x128xf32>
    %82 = arith.subf %72, %81 : vector<32x128xf32>
    %83 = arith.mulf %82, %82 : vector<32x128xf32>
    %cst_30 = arith.constant dense<0.000000e+00> : vector<32xf32>
    %84 = vector.multi_reduction <add>, %83, %cst_30 [1] : vector<32x128xf32> to vector<32xf32>
    %85 = vector.shape_cast %84 : vector<32xf32> to vector<32x1xf32>
    %cst_31 = arith.constant 1.280000e+02 : f32
    %86 = vector.broadcast %cst_31 : f32 to vector<32x1xf32>
    %87 = arith.divf %85, %86 : vector<32x1xf32>
    %cst_32 = arith.constant 9.99999996E-13 : f32
    %88 = vector.broadcast %cst_32 : f32 to vector<32x1xf32>
    %89 = arith.addf %87, %88 : vector<32x1xf32>
    %90 = math.rsqrt %89 : vector<32x1xf32>
    %91 = vector.broadcast %90 : vector<32x1xf32> to vector<32x128xf32>
    %92 = arith.mulf %82, %91 : vector<32x128xf32>
    %93 = vector.broadcast %74 : vector<1x128xf32> to vector<32x128xf32>
    %94 = arith.mulf %92, %93 : vector<32x128xf32>
    %95 = vector.broadcast %76 : vector<1x128xf32> to vector<32x128xf32>
    %96 = arith.addf %94, %95 : vector<32x128xf32>
    %97 = arith.truncf %96 : vector<32x128xf32> to vector<32x128xbf16>
    %c0_33 = arith.constant 0 : index
    %c0_34 = arith.constant 0 : index
    %c0_35 = arith.constant 0 : index
    %98 = vector.load %arg9[%c0_33, %c0_34, %c0_35] : memref<1x128x512xbf16, #tpu.memory_space<vmem>>, vector<1x128x512xbf16>
    %99 = vector.shape_cast %98 : vector<1x128x512xbf16> to vector<128x512xbf16>
    %cst_36 = arith.constant dense<0.000000e+00> : vector<32x512xf32>
    %100 = tpu.matmul %97, %99, %cst_36 {dimension_numbers = #tpu.dot_dimension_numbers<[1], [0], [0], [1], [0, 0, 1, 1], [], []>} : vector<32x128xbf16>, vector<128x512xbf16>, vector<32x512xf32> -> vector<32x512xf32>
    %c0_37 = arith.constant 0 : index
    %c0_38 = arith.constant 0 : index
    %c0_39 = arith.constant 0 : index
    %101 = vector.load %arg10[%c0_37, %c0_38, %c0_39] : memref<1x1x512xf32, #tpu.memory_space<vmem>>, vector<1x1x512xf32>
    %102 = vector.shape_cast %101 : vector<1x1x512xf32> to vector<1x512xf32>
    %103 = vector.broadcast %102 : vector<1x512xf32> to vector<32x512xf32>
    %104 = arith.addf %100, %103 : vector<32x512xf32>
    %cst_40 = arith.constant 5.000000e-01 : f32
    %105 = vector.broadcast %cst_40 : f32 to vector<32x512xf32>
    %106 = arith.mulf %105, %104 : vector<32x512xf32>
    %cst_41 = arith.constant 4.471500e-02 : f32
    %107 = vector.broadcast %cst_41 : f32 to vector<32x512xf32>
    %108 = arith.mulf %107, %104 : vector<32x512xf32>
    %109 = arith.mulf %108, %104 : vector<32x512xf32>
    %110 = arith.mulf %109, %104 : vector<32x512xf32>
    %111 = arith.addf %104, %110 : vector<32x512xf32>
    %cst_42 = arith.constant 0.797884583 : f32
    %112 = vector.broadcast %cst_42 : f32 to vector<32x512xf32>
    %113 = arith.mulf %112, %111 : vector<32x512xf32>
    %114 = math.tanh %113 : vector<32x512xf32>
    %cst_43 = arith.constant 1.000000e+00 : f32
    %115 = vector.broadcast %cst_43 : f32 to vector<32x512xf32>
    %116 = arith.addf %115, %114 : vector<32x512xf32>
    %117 = arith.mulf %106, %116 : vector<32x512xf32>
    %118 = arith.truncf %117 : vector<32x512xf32> to vector<32x512xbf16>
    %c0_44 = arith.constant 0 : index
    %c0_45 = arith.constant 0 : index
    %c0_46 = arith.constant 0 : index
    %119 = vector.load %arg11[%c0_44, %c0_45, %c0_46] : memref<1x512x128xbf16, #tpu.memory_space<vmem>>, vector<1x512x128xbf16>
    %120 = vector.shape_cast %119 : vector<1x512x128xbf16> to vector<512x128xbf16>
    %cst_47 = arith.constant dense<0.000000e+00> : vector<32x128xf32>
    %121 = tpu.matmul %118, %120, %cst_47 {dimension_numbers = #tpu.dot_dimension_numbers<[1], [0], [0], [1], [0, 0, 1, 1], [], []>} : vector<32x512xbf16>, vector<512x128xbf16>, vector<32x128xf32> -> vector<32x128xf32>
    %c0_48 = arith.constant 0 : index
    %c0_49 = arith.constant 0 : index
    %c0_50 = arith.constant 0 : index
    %122 = vector.load %arg12[%c0_48, %c0_49, %c0_50] : memref<1x1x128xf32, #tpu.memory_space<vmem>>, vector<1x1x128xf32>
    %123 = vector.shape_cast %122 : vector<1x1x128xf32> to vector<1x128xf32>
    %124 = vector.broadcast %123 : vector<1x128xf32> to vector<32x128xf32>
    %125 = arith.addf %121, %124 : vector<32x128xf32>
    %126 = arith.addf %125, %96 : vector<32x128xf32>
    %c0_51 = arith.constant 0 : index
    %c0_52 = arith.constant 0 : index
    %c0_53 = arith.constant 0 : index
    %127 = vector.load %arg13[%c0_51, %c0_52, %c0_53] : memref<1x1x128xf32, #tpu.memory_space<vmem>>, vector<1x1x128xf32>
    %128 = vector.shape_cast %127 : vector<1x1x128xf32> to vector<1x128xf32>
    %c0_54 = arith.constant 0 : index
    %c0_55 = arith.constant 0 : index
    %c0_56 = arith.constant 0 : index
    %129 = vector.load %arg14[%c0_54, %c0_55, %c0_56] : memref<1x1x128xf32, #tpu.memory_space<vmem>>, vector<1x1x128xf32>
    %130 = vector.shape_cast %129 : vector<1x1x128xf32> to vector<1x128xf32>
    %cst_57 = arith.constant dense<0.000000e+00> : vector<32xf32>
    %131 = vector.multi_reduction <add>, %126, %cst_57 [1] : vector<32x128xf32> to vector<32xf32>
    %132 = vector.shape_cast %131 : vector<32xf32> to vector<32x1xf32>
    %cst_58 = arith.constant 1.280000e+02 : f32
    %133 = vector.broadcast %cst_58 : f32 to vector<32x1xf32>
    %134 = arith.divf %132, %133 : vector<32x1xf32>
    %135 = vector.broadcast %134 : vector<32x1xf32> to vector<32x128xf32>
    %136 = arith.subf %126, %135 : vector<32x128xf32>
    %137 = arith.mulf %136, %136 : vector<32x128xf32>
    %cst_59 = arith.constant dense<0.000000e+00> : vector<32xf32>
    %138 = vector.multi_reduction <add>, %137, %cst_59 [1] : vector<32x128xf32> to vector<32xf32>
    %139 = vector.shape_cast %138 : vector<32xf32> to vector<32x1xf32>
    %cst_60 = arith.constant 1.280000e+02 : f32
    %140 = vector.broadcast %cst_60 : f32 to vector<32x1xf32>
    %141 = arith.divf %139, %140 : vector<32x1xf32>
    %cst_61 = arith.constant 9.99999996E-13 : f32
    %142 = vector.broadcast %cst_61 : f32 to vector<32x1xf32>
    %143 = arith.addf %141, %142 : vector<32x1xf32>
    %144 = math.rsqrt %143 : vector<32x1xf32>
    %145 = vector.broadcast %144 : vector<32x1xf32> to vector<32x128xf32>
    %146 = arith.mulf %136, %145 : vector<32x128xf32>
    %147 = vector.broadcast %128 : vector<1x128xf32> to vector<32x128xf32>
    %148 = arith.mulf %146, %147 : vector<32x128xf32>
    %149 = vector.broadcast %130 : vector<1x128xf32> to vector<32x128xf32>
    %150 = arith.addf %148, %149 : vector<32x128xf32>
    %c0_62 = arith.constant 0 : index
    %c0_63 = arith.constant 0 : index
    %151 = vector.load %arg22[%c0_62, %c0_63] : memref<32x128xf32, #tpu.memory_space<vmem>>, vector<32x128xf32>
    tpu.vector_store %arg22[%c0_62, %c0_63], %150 {strides = array<i32>} : memref<32x128xf32, #tpu.memory_space<vmem>>, vector<32x128xf32>,
    %c1_i32 = arith.constant 1 : i32
    %152 = arith.cmpi eq, %arg0, %c1_i32 : i32
    %153 = arith.extui %152 : i1 to i32
    %c0_i32_64 = arith.constant 0 : i32
    %154 = arith.cmpi ne, %153, %c0_i32_64 : i32
    scf.if %154 {
      %c0_65 = arith.constant 0 : index
      %c0_66 = arith.constant 0 : index
      %155 = tpu.strided_load %arg22[%c0_65, %c0_66] {strides = array<i32: 16, 1>} : memref<32x128xf32, #tpu.memory_space<vmem>>, vector<2x128xf32>
      %156 = arith.truncf %155 : vector<2x128xf32> to vector<2x128xbf16>
      %c0_67 = arith.constant 0 : index
      %c0_68 = arith.constant 0 : index
      %157 = vector.load %arg17[%c0_67, %c0_68] : memref<128x128xbf16, #tpu.memory_space<vmem>>, vector<128x128xbf16>
      %cst_69 = arith.constant dense<0.000000e+00> : vector<2x128xf32>
      %158 = tpu.matmul %156, %157, %cst_69 {dimension_numbers = #tpu.dot_dimension_numbers<[1], [0], [0], [1], [0, 0, 1, 1], [], []>} : vector<2x128xbf16>, vector<128x128xbf16>, vector<2x128xf32> -> vector<2x128xf32>
      %c0_70 = arith.constant 0 : index
      %c0_71 = arith.constant 0 : index
      %159 = vector.load %arg18[%c0_70, %c0_71] : memref<1x128xf32, #tpu.memory_space<vmem>>, vector<1x128xf32>
      %160 = vector.broadcast %159 : vector<1x128xf32> to vector<2x128xf32>
      %161 = arith.addf %158, %160 : vector<2x128xf32>
      %cst_72 = arith.constant 5.000000e-01 : f32
      %162 = vector.broadcast %cst_72 : f32 to vector<2x128xf32>
      %163 = arith.mulf %162, %161 : vector<2x128xf32>
      %cst_73 = arith.constant 4.471500e-02 : f32
      %164 = vector.broadcast %cst_73 : f32 to vector<2x128xf32>
      %165 = arith.mulf %164, %161 : vector<2x128xf32>
      %166 = arith.mulf %165, %161 : vector<2x128xf32>
      %167 = arith.mulf %166, %161 : vector<2x128xf32>
      %168 = arith.addf %161, %167 : vector<2x128xf32>
      %cst_74 = arith.constant 0.797884583 : f32
      %169 = vector.broadcast %cst_74 : f32 to vector<2x128xf32>
      %170 = arith.mulf %169, %168 : vector<2x128xf32>
      %171 = math.tanh %170 : vector<2x128xf32>
      %cst_75 = arith.constant 1.000000e+00 : f32
      %172 = vector.broadcast %cst_75 : f32 to vector<2x128xf32>
      %173 = arith.addf %172, %171 : vector<2x128xf32>
      %174 = arith.mulf %163, %173 : vector<2x128xf32>
      %175 = arith.truncf %174 : vector<2x128xf32> to vector<2x128xbf16>
      %c0_76 = arith.constant 0 : index
      %c0_77 = arith.constant 0 : index
      %176 = vector.load %arg19[%c0_76, %c0_77] : memref<128x128xbf16, #tpu.memory_space<vmem>>, vector<128x128xbf16>
      %cst_78 = arith.constant dense<0.000000e+00> : vector<2x128xf32>
      %177 = tpu.matmul %175, %176, %cst_78 {dimension_numbers = #tpu.dot_dimension_numbers<[1], [0], [0], [1], [0, 0, 1, 1], [], []>} : vector<2x128xbf16>, vector<128x128xbf16>, vector<2x128xf32> -> vector<2x128xf32>
      %c0_79 = arith.constant 0 : index
      %c0_80 = arith.constant 0 : index
      %178 = vector.load %arg20[%c0_79, %c0_80] : memref<1x128xf32, #tpu.memory_space<vmem>>, vector<1x128xf32>
      %179 = vector.broadcast %178 : vector<1x128xf32> to vector<2x128xf32>
      %180 = arith.addf %177, %179 : vector<2x128xf32>
      %c0_81 = arith.constant 0 : index
      %c0_82 = arith.constant 0 : index
      %181 = vector.load %arg21[%c0_81, %c0_82] : memref<2x128xf32, #tpu.memory_space<vmem>>, vector<2x128xf32>
      tpu.vector_store %arg21[%c0_81, %c0_82], %180 {strides = array<i32>} : memref<2x128xf32, #tpu.memory_space<vmem>>, vector<2x128xf32>,
    } else {
    }
    return
  }
  func.func @transform_0(%arg0: i32) -> (i32, i32) {
    %c0_i32 = arith.constant 0 : i32
    %c0_i32_0 = arith.constant 0 : i32
    %c0_i32_1 = arith.constant 0 : i32
    return %c0_i32, %c0_i32_0 : i32, i32
  }
  func.func @transform_1(%arg0: i32) -> (i32, i32, i32) {
    %c0_i32 = arith.constant 0 : i32
    %c0_i32_0 = arith.constant 0 : i32
    %c0_i32_1 = arith.constant 0 : i32
    %c0_i32_2 = arith.constant 0 : i32
    return %c0_i32, %c0_i32_0, %c0_i32_1 : i32, i32, i32
  }
  func.func @transform_2(%arg0: i32) -> (i32, i32, i32) {
    %c0_i32 = arith.constant 0 : i32
    %c0_i32_0 = arith.constant 0 : i32
    %c0_i32_1 = arith.constant 0 : i32
    return %arg0, %c0_i32, %c0_i32_0 : i32, i32, i32
  }
  func.func @transform_3(%arg0: i32) -> (i32, i32, i32) {
    %c0_i32 = arith.constant 0 : i32
    %c0_i32_0 = arith.constant 0 : i32
    %c0_i32_1 = arith.constant 0 : i32
    return %arg0, %c0_i32, %c0_i32_0 : i32, i32, i32
  }
  func.func @transform_4(%arg0: i32) -> (i32, i32, i32) {
    %c0_i32 = arith.constant 0 : i32
    %c0_i32_0 = arith.constant 0 : i32
    %c0_i32_1 = arith.constant 0 : i32
    return %arg0, %c0_i32, %c0_i32_0 : i32, i32, i32
  }
  func.func @transform_5(%arg0: i32) -> (i32, i32, i32) {
    %c0_i32 = arith.constant 0 : i32
    %c0_i32_0 = arith.constant 0 : i32
    %c0_i32_1 = arith.constant 0 : i32
    return %arg0, %c0_i32, %c0_i32_0 : i32, i32, i32
  }
  func.func @transform_6(%arg0: i32) -> (i32, i32, i32) {
    %c0_i32 = arith.constant 0 : i32
    %c0_i32_0 = arith.constant 0 : i32
    %c0_i32_1 = arith.constant 0 : i32
    return %arg0, %c0_i32, %c0_i32_0 : i32, i32, i32
  }
  func.func @transform_7(%arg0: i32) -> (i32, i32, i32) {
    %c0_i32 = arith.constant 0 : i32
    %c0_i32_0 = arith.constant 0 : i32
    %c0_i32_1 = arith.constant 0 : i32
    return %arg0, %c0_i32, %c0_i32_0 : i32, i32, i32
  }
  func.func @transform_8(%arg0: i32) -> (i32, i32, i32) {
    %c0_i32 = arith.constant 0 : i32
    %c0_i32_0 = arith.constant 0 : i32
    %c0_i32_1 = arith.constant 0 : i32
    return %arg0, %c0_i32, %c0_i32_0 : i32, i32, i32
  }
  func.func @transform_9(%arg0: i32) -> (i32, i32, i32) {
    %c0_i32 = arith.constant 0 : i32
    %c0_i32_0 = arith.constant 0 : i32
    %c0_i32_1 = arith.constant 0 : i32
    return %arg0, %c0_i32, %c0_i32_0 : i32, i32, i32
  }
  func.func @transform_10(%arg0: i32) -> (i32, i32, i32) {
    %c0_i32 = arith.constant 0 : i32
    %c0_i32_0 = arith.constant 0 : i32
    %c0_i32_1 = arith.constant 0 : i32
    return %arg0, %c0_i32, %c0_i32_0 : i32, i32, i32
  }
  func.func @transform_11(%arg0: i32) -> (i32, i32, i32) {
    %c0_i32 = arith.constant 0 : i32
    %c0_i32_0 = arith.constant 0 : i32
    %c0_i32_1 = arith.constant 0 : i32
    return %arg0, %c0_i32, %c0_i32_0 : i32, i32, i32
  }
  func.func @transform_12(%arg0: i32) -> (i32, i32, i32) {
    %c0_i32 = arith.constant 0 : i32
    %c0_i32_0 = arith.constant 0 : i32
    %c0_i32_1 = arith.constant 0 : i32
    return %arg0, %c0_i32, %c0_i32_0 : i32, i32, i32
  }
  func.func @transform_13(%arg0: i32) -> (i32, i32, i32) {
    %c0_i32 = arith.constant 0 : i32
    %c0_i32_0 = arith.constant 0 : i32
    %c0_i32_1 = arith.constant 0 : i32
    return %arg0, %c0_i32, %c0_i32_0 : i32, i32, i32
  }
  func.func @transform_14(%arg0: i32) -> (i32, i32) {
    %c0_i32 = arith.constant 0 : i32
    %c0_i32_0 = arith.constant 0 : i32
    %c0_i32_1 = arith.constant 0 : i32
    return %c0_i32, %c0_i32_0 : i32, i32
  }
  func.func @transform_15(%arg0: i32) -> (i32, i32) {
    %c0_i32 = arith.constant 0 : i32
    %c0_i32_0 = arith.constant 0 : i32
    %c0_i32_1 = arith.constant 0 : i32
    return %c0_i32, %c0_i32_0 : i32, i32
  }
  func.func @transform_16(%arg0: i32) -> (i32, i32) {
    %c0_i32 = arith.constant 0 : i32
    %c0_i32_0 = arith.constant 0 : i32
    %c0_i32_1 = arith.constant 0 : i32
    return %c0_i32, %c0_i32_0 : i32, i32
  }
  func.func @transform_17(%arg0: i32) -> (i32, i32) {
    %c0_i32 = arith.constant 0 : i32
    %c0_i32_0 = arith.constant 0 : i32
    %c0_i32_1 = arith.constant 0 : i32
    return %c0_i32, %c0_i32_0 : i32, i32
  }
  func.func @transform_18(%arg0: i32) -> (i32, i32) {
    %c0_i32 = arith.constant 0 : i32
    %c0_i32_0 = arith.constant 0 : i32
    %c0_i32_1 = arith.constant 0 : i32
    return %c0_i32, %c0_i32_0 : i32, i32
  }
  func.func @transform_19(%arg0: i32) -> (i32, i32) {
    %c0_i32 = arith.constant 0 : i32
    %c0_i32_0 = arith.constant 0 : i32
    %c0_i32_1 = arith.constant 0 : i32
    return %c0_i32, %c0_i32_0 : i32, i32
  }
  func.func @transform_20(%arg0: i32) -> (i32, i32) {
    %c0_i32 = arith.constant 0 : i32
    %c0_i32_0 = arith.constant 0 : i32
    %c0_i32_1 = arith.constant 0 : i32
    return %c0_i32, %c0_i32_0 : i32, i32
  }
}

</mosaic_0001>

<llo_original>
// kernel: squeezebert_class_forward.1
$region0: #{squeezebert_class_forward.1}
  #allocation0 [shape = 'u32[]', space=smem, size = 0x4, offset = 0x4, fixed_abs, tag = 'smem constant byte address 0x4 - core index']
  #allocation1 [shape = 'u32[72,128]{1,0:T(1,128)}', space=vmem, size = 0x9000, scoped, tag = 'internal scratch']
  #allocation2 [shape = 'f32[32,128]{1,0:T(8,128)}', space=vmem, size = 0x4000, scoped, tag = 'scratch operand']
  %s0 = inlined_call_operand.vmem [shape: f32[32,128], index: 0, kind: input, shape index: {}]
  %s1 = inlined_call_operand.vmem [shape: f32[8,16,16], index: 1, kind: input, shape index: {}]
  %s2 = inlined_call_operand.vmem [shape: bf16[2,128,384], index: 2, kind: input, shape index: {}]
  %s3 = inlined_call_operand.vmem [shape: f32[2,1,384], index: 3, kind: input, shape index: {}]
  %s4 = inlined_call_operand.hbm [shape: bf16[2,128,128], index: 4, kind: input, shape index: {}]
  %s5 = inlined_call_operand.hbm [shape: f32[2,1,128], index: 5, kind: input, shape index: {}]
  %s6 = inlined_call_operand.hbm [shape: f32[2,1,128], index: 6, kind: input, shape index: {}]
  %s7 = inlined_call_operand.hbm [shape: f32[2,1,128], index: 7, kind: input, shape index: {}]
  %s8 = inlined_call_operand.vmem [shape: bf16[2,128,512], index: 8, kind: input, shape index: {}]
  %s9 = inlined_call_operand.vmem [shape: f32[2,1,512], index: 9, kind: input, shape index: {}]
  %s10 = inlined_call_operand.hbm [shape: bf16[2,512,128], index: 10, kind: input, shape index: {}]
  %s11 = inlined_call_operand.hbm [shape: f32[2,1,128], index: 11, kind: input, shape index: {}]
  %s12 = inlined_call_operand.hbm [shape: f32[2,1,128], index: 12, kind: input, shape index: {}]
  %s13 = inlined_call_operand.hbm [shape: f32[2,1,128], index: 13, kind: input, shape index: {}]
  %s14 = inlined_call_operand.hbm [shape: f32[1,128], index: 14, kind: input, shape index: {}]
  %s15 = inlined_call_operand.hbm [shape: f32[1,128], index: 15, kind: input, shape index: {}]
  %s16 = inlined_call_operand.vmem [shape: bf16[128,128], index: 16, kind: input, shape index: {}]
  %s17 = inlined_call_operand.hbm [shape: f32[1,128], index: 17, kind: input, shape index: {}]
  %s18 = inlined_call_operand.hbm [shape: bf16[128,128], index: 18, kind: input, shape index: {}]
  %s19 = inlined_call_operand.hbm [shape: f32[1,128], index: 19, kind: input, shape index: {}]
  %s20 = inlined_call_operand.hbm [shape: f32[2,128], index: 20, kind: output, shape index: {}]
  %s21 = sld [smem:[#allocation0]]
  $region173: #{squeezebert_class_forward.1} parent=0
    _
  %s23 = ssub.s32 1, %s21
  %s24 = scalar_select 0, %s23, %s21
  $region1: #{squeezebert_class_forward.1} parent=0
    #allocation3 [shape = 'u8[65536]{0}', space=vmem, size = 0x10000, scoped, tag = 'input window, operand 4']
    #allocation4 [shape = 's32[2]{0}', space=sflag, size = 0x8, scoped, tag = 'scoped memory for squeezebert_class_forward.1']
    #allocation5 [shape = 's32[2]{0}', space=sflag, size = 0x8, scoped, tag = 'scoped memory for squeezebert_class_forward.1']
    #allocation6 [shape = 'u8[1024]{0}', space=vmem, size = 0x400, scoped, tag = 'input window, operand 5']
    #allocation7 [shape = 's32[2]{0}', space=sflag, size = 0x8, scoped, tag = 'scoped memory for squeezebert_class_forward.1']
    #allocation8 [shape = 'u8[1024]{0}', space=vmem, size = 0x400, scoped, tag = 'input window, operand 6']
    #allocation9 [shape = 'u8[1024]{0}', space=vmem, size = 0x400, scoped, tag = 'input window, operand 7']
    #allocation10 [shape = 's32[2]{0}', space=sflag, size = 0x8, scoped, tag = 'scoped memory for squeezebert_class_forward.1']
    #allocation11 [shape = 'u8[262144]{0}', space=vmem, size = 0x40000, scoped, tag = 'input window, operand 10']
    #allocation12 [shape = 'u8[1024]{0}', space=vmem, size = 0x400, scoped, tag = 'input window, operand 11']
    #allocation13 [shape = 's32[2]{0}', space=sflag, size = 0x8, scoped, tag = 'scoped memory for squeezebert_class_forward.1']
    #allocation14 [shape = 'u8[1024]{0}', space=vmem, size = 0x400, scoped, tag = 'input window, operand 12']
    #allocation15 [shape = 'u8[1024]{0}', space=vmem, size = 0x400, scoped, tag = 'input window, operand 13']
    #allocation16 [shape = 's32[2]{0}', space=sflag, size = 0x8, scoped, tag = 'scoped memory for squeezebert_class_forward.1']
    #allocation17 [shape = 'u8[512]{0}', space=vmem, size = 0x400, scoped, tag = 'input window, operand 14, single buffered']
    #allocation18 [shape = 'u8[512]{0}', space=vmem, size = 0x400, scoped, tag = 'input window, operand 15, single buffered']
    #allocation19 [shape = 's32[1]{0}', space=sflag, size = 0x4, scoped, tag = 'scoped memory for squeezebert_class_forward.1']
    #allocation20 [shape = 'u8[512]{0}', space=vmem, size = 0x400, scoped, tag = 'input window, operand 17, single buffered']
    #allocation21 [shape = 'u8[32768]{0}', space=vmem, size = 0x8000, scoped, tag = 'input window, operand 18, single buffered']
    #allocation22 [shape = 's32[1]{0}', space=sflag, size = 0x4, scoped, tag = 'scoped memory for squeezebert_class_forward.1']
    #allocation23 [shape = 'u8[512]{0}', space=vmem, size = 0x400, scoped, tag = 'input window, operand 19, single buffered']
    #allocation24 [shape = 'u8[1024]{0}', space=vmem, size = 0x400, scoped, tag = 'output window, operand 0, single buffered']
    %25 = vsyncpa [#allocation4], 0
    %s26 = scalar_lea.sflag [#allocation4], 1
    %27 = vsyncpa %s26, 0
    %28 = vsyncpa [#allocation7], 0
    %s29 = scalar_lea.sflag [#allocation7], 1
    %30 = vsyncpa %s29, 0
    %31 = vsyncpa [#allocation10], 0
    %s32 = scalar_lea.sflag [#allocation10], 1
    %33 = vsyncpa %s32, 0
    %34 = vsyncpa [#allocation13], 0
    %s35 = scalar_lea.sflag [#allocation13], 1
    %36 = vsyncpa %s35, 0
    %37 = vsyncpa [#allocation16], 0
    %s38 = scalar_lea.sflag [#allocation16], 1
    %39 = vsyncpa %s38, 0
    %40 = vsyncpa [#allocation19], 0
    %41 = vsyncpa [#allocation22], 0
    %42 = vsyncpa [#allocation5], 0
    loop: start=0, step=1, limit=4
    $region2: #{squeezebert_class_forward.1} parent=1 // loop_pre_header
      _
    $region3: #{squeezebert_class_forward.1} parent=1 // loop_header
      %s44 = sphi 0, %s48
      %p45 = scmp.ge.s32.totalorder %s44, 4
      %s52 = sphi 0, %s52
      %s54 = sphi 0, %s52
      %s55 = sphi 0, %s54
      %s69 = sphi 0, %s55
      %s73 = sphi 0, %s73
      %s75 = sphi 0, %s73
      %s76 = sphi 0, %s75
      %s90 = sphi 0, %s76
      %s96 = sphi 0, %s98
      %s99 = sphi 0, %s96
      %s100 = sphi 0, %s99
      %s116 = sphi 0, %s100
      %s122 = sphi 0, %s124
      %s125 = sphi 0, %s122
      %s126 = sphi 0, %s125
      %s142 = sphi 0, %s126
      %s148 = sphi 0, %s150
      %s151 = sphi 0, %s148
      %s152 = sphi 0, %s151
      %s168 = sphi 0, %s152
      %s174 = sphi 0, %s176
      %s177 = sphi 0, %s174
      %s178 = sphi 0, %s177
      %s194 = sphi 0, %s178
      %s200 = sphi 0, %s202
      %s203 = sphi 0, %s200
      %s204 = sphi 0, %s203
      %s220 = sphi 0, %s204
      %s226 = sphi 0, %s228
      %s229 = sphi 0, %s226
      %s230 = sphi 0, %s229
      %s246 = sphi 0, %s230
      %s252 = sphi 0, %s254
      %s255 = sphi 0, %s252
      %s256 = sphi 0, %s255
      %s272 = sphi 0, %s256
      %s278 = sphi 0, %s280
      %s281 = sphi 0, %s278
      %s282 = sphi 0, %s281
      %s298 = sphi 0, %s282
      %s304 = sphi 0, %s306
      %s307 = sphi 0, %s304
      %s308 = sphi 0, %s307
      %s324 = sphi 0, %s308
      %s330 = sphi 0, %s332
      %s333 = sphi 0, %s330
      %s334 = sphi 0, %s333
      %s350 = sphi 0, %s334
      %s356 = sphi 0, %s358
      %s359 = sphi 0, %s356
      %s360 = sphi 0, %s359
      %s376 = sphi 0, %s360
      %s382 = sphi 0, %s384
      %s385 = sphi 0, %s382
      %s386 = sphi 0, %s385
      %s402 = sphi 0, %s386
      %s406 = sphi 0, %s406
      %s408 = sphi 0, %s406
      %s409 = sphi 0, %s408
      %s423 = sphi 0, %s409
      %s427 = sphi 0, %s427
      %s429 = sphi 0, %s427
      %s430 = sphi 0, %s429
      %s444 = sphi 0, %s430
      %s448 = sphi 0, %s448
      %s450 = sphi 0, %s448
      %s451 = sphi 0, %s450
      %s465 = sphi 0, %s451
      %s469 = sphi 0, %s469
      %s471 = sphi 0, %s469
      %s472 = sphi 0, %s471
      %s486 = sphi 0, %s472
      %s490 = sphi 0, %s490
      %s492 = sphi 0, %s490
      %s493 = sphi 0, %s492
      %s507 = sphi 0, %s493
      %s511 = sphi 0, %s511
      %s513 = sphi 0, %s511
      %s514 = sphi 0, %s513
      %s528 = sphi 0, %s514
      %s532 = sphi 0, %s532
      %s534 = sphi 0, %s532
      %s535 = sphi 0, %s534
      %s549 = sphi 0, %s535
    $region4: #{squeezebert_class_forward.1} parent=1 // loop_header_branch
      %47 = sbr.rel (%p45) target = $region8
    $region5: #{squeezebert_class_forward.1} parent=1 // loop_body
      %s49 = ssub.s32 %s44, 1
      %s50 = ssub.s32 %s44, 2
      %s51 = sadd.s32 %s44, 1
      %s53 = sadd.s32 %s52, 1
      %p56 = scmp.eq.s32.totalorder %s44, 1
      %p57 = scmp.ne.s32.totalorder %s52, %s54
      %p58 = scmp.eq.s32.totalorder %s44, 0
      %p59 = por %p57, %p58
      %p60 = scmp.ne.s32.totalorder %s52, %s54
      %p61 = scmp.eq.s32.totalorder %s49, 1
      %p62 = por %p60, %p61
      %p63 = scmp.ne.s32.totalorder %s54, %s55
      %p64 = scmp.eq.s32.totalorder %s49, 0
      %p65 = por %p63, %p64
      %p66 = scmp.ne.s32.totalorder %s54, %s55
      %p67 = scmp.eq.s32.totalorder %s50, 1
      %p68 = por %p66, %p67
      %p70 = scmp.ne.s32.totalorder %s55, %s69
      %p71 = scmp.eq.s32.totalorder %s50, 0
      %p72 = por %p70, %p71
      %s74 = sadd.s32 %s73, 1
      %p77 = scmp.eq.s32.totalorder %s44, 1
      %p78 = scmp.ne.s32.totalorder %s73, %s75
      %p79 = scmp.eq.s32.totalorder %s44, 0
      %p80 = por %p78, %p79
      %p81 = scmp.ne.s32.totalorder %s73, %s75
      %p82 = scmp.eq.s32.totalorder %s49, 1
      %p83 = por %p81, %p82
      %p84 = scmp.ne.s32.totalorder %s75, %s76
      %p85 = scmp.eq.s32.totalorder %s49, 0
      %p86 = por %p84, %p85
      %p87 = scmp.ne.s32.totalorder %s75, %s76
      %p88 = scmp.eq.s32.totalorder %s50, 1
      %p89 = por %p87, %p88
      %p91 = scmp.ne.s32.totalorder %s76, %s90
      %p92 = scmp.eq.s32.totalorder %s50, 0
      %p93 = por %p91, %p92
      %s94 = ssub.s32 %s44, %s51
      %p95 = scmp.eq.s32.totalorder %s94, 0
      %s97 = sadd.s32 %s96, 1
      %s98 = scalar_select %p95, %s96, %s97
      %p101 = pneg %p95
      %p102 = scmp.eq.s32.totalorder %s44, 1
      %p103 = por %p101, %p102
      %p104 = scmp.ne.s32.totalorder %s96, %s99
      %p105 = scmp.eq.s32.totalorder %s44, 0
      %p106 = por %p104, %p105
      %p107 = scmp.ne.s32.totalorder %s96, %s99
      %p108 = scmp.eq.s32.totalorder %s49, 1
      %p109 = por %p107, %p108
      %p110 = scmp.ne.s32.totalorder %s99, %s100
      %p111 = scmp.eq.s32.totalorder %s49, 0
      %p112 = por %p110, %p111
      %p113 = scmp.ne.s32.totalorder %s99, %s100
      %p114 = scmp.eq.s32.totalorder %s50, 1
      %p115 = por %p113, %p114
      %p117 = scmp.ne.s32.totalorder %s100, %s116
      %p118 = scmp.eq.s32.totalorder %s50, 0
      %p119 = por %p117, %p118
      %s120 = ssub.s32 %s44, %s51
      %p121 = scmp.eq.s32.totalorder %s120, 0
      %s123 = sadd.s32 %s122, 1
      %s124 = scalar_select %p121, %s122, %s123
      %p127 = pneg %p121
      %p128 = scmp.eq.s32.totalorder %s44, 1
      %p129 = por %p127, %p128
      %p130 = scmp.ne.s32.totalorder %s122, %s125
      %p131 = scmp.eq.s32.totalorder %s44, 0
      %p132 = por %p130, %p131
      %p133 = scmp.ne.s32.totalorder %s122, %s125
      %p134 = scmp.eq.s32.totalorder %s49, 1
      %p135 = por %p133, %p134
      %p136 = scmp.ne.s32.totalorder %s125, %s126
      %p137 = scmp.eq.s32.totalorder %s49, 0
      %p138 = por %p136, %p137
      %p139 = scmp.ne.s32.totalorder %s125, %s126
      %p140 = scmp.eq.s32.totalorder %s50, 1
      %p141 = por %p139, %p140
      %p143 = scmp.ne.s32.totalorder %s126, %s142
      %p144 = scmp.eq.s32.totalorder %s50, 0
      %p145 = por %p143, %p144
      %s146 = ssub.s32 %s44, %s51
      %p147 = scmp.eq.s32.totalorder %s146, 0
      %s149 = sadd.s32 %s148, 1
      %s150 = scalar_select %p147, %s148, %s149
      %p153 = pneg %p147
      %p154 = scmp.eq.s32.totalorder %s44, 1
      %p155 = por %p153, %p154
      %p156 = scmp.ne.s32.totalorder %s148, %s151
      %p157 = scmp.eq.s32.totalorder %s44, 0
      %p158 = por %p156, %p157
      %p159 = scmp.ne.s32.totalorder %s148, %s151
      %p160 = scmp.eq.s32.totalorder %s49, 1
      %p161 = por %p159, %p160
      %p162 = scmp.ne.s32.totalorder %s151, %s152
      %p163 = scmp.eq.s32.totalorder %s49, 0
      %p164 = por %p162, %p163
      %p165 = scmp.ne.s32.totalorder %s151, %s152
      %p166 = scmp.eq.s32.totalorder %s50, 1
      %p167 = por %p165, %p166
      %p169 = scmp.ne.s32.totalorder %s152, %s168
      %p170 = scmp.eq.s32.totalorder %s50, 0
      %p171 = por %p169, %p170
      %s172 = ssub.s32 %s44, %s51
      %p173 = scmp.eq.s32.totalorder %s172, 0
      %s175 = sadd.s32 %s174, 1
      %s176 = scalar_select %p173, %s174, %s175
      %p179 = pneg %p173
      %p180 = scmp.eq.s32.totalorder %s44, 1
      %p181 = por %p179, %p180
      %p182 = scmp.ne.s32.totalorder %s174, %s177
      %p183 = scmp.eq.s32.totalorder %s44, 0
      %p184 = por %p182, %p183
      %p185 = scmp.ne.s32.totalorder %s174, %s177
      %p186 = scmp.eq.s32.totalorder %s49, 1
      %p187 = por %p185, %p186
      %p188 = scmp.ne.s32.totalorder %s177, %s178
      %p189 = scmp.eq.s32.totalorder %s49, 0
      %p190 = por %p188, %p189
      %p191 = scmp.ne.s32.totalorder %s177, %s178
      %p192 = scmp.eq.s32.totalorder %s50, 1
      %p193 = por %p191, %p192
      %p195 = scmp.ne.s32.totalorder %s178, %s194
      %p196 = scmp.eq.s32.totalorder %s50, 0
      %p197 = por %p195, %p196
      %s198 = ssub.s32 %s44, %s51
      %p199 = scmp.eq.s32.totalorder %s198, 0
      %s201 = sadd.s32 %s200, 1
      %s202 = scalar_select %p199, %s200, %s201
      %p205 = pneg %p199
      %p206 = scmp.eq.s32.totalorder %s44, 1
      %p207 = por %p205, %p206
      %p208 = scmp.ne.s32.totalorder %s200, %s203
      %p209 = scmp.eq.s32.totalorder %s44, 0
      %p210 = por %p208, %p209
      %p211 = scmp.ne.s32.totalorder %s200, %s203
      %p212 = scmp.eq.s32.totalorder %s49, 1
      %p213 = por %p211, %p212
      %p214 = scmp.ne.s32.totalorder %s203, %s204
      %p215 = scmp.eq.s32.totalorder %s49, 0
      %p216 = por %p214, %p215
      %p217 = scmp.ne.s32.totalorder %s203, %s204
      %p218 = scmp.eq.s32.totalorder %s50, 1
      %p219 = por %p217, %p218
      %p221 = scmp.ne.s32.totalorder %s204, %s220
      %p222 = scmp.eq.s32.totalorder %s50, 0
      %p223 = por %p221, %p222
      %s224 = ssub.s32 %s44, %s51
      %p225 = scmp.eq.s32.totalorder %s224, 0
      %s227 = sadd.s32 %s226, 1
      %s228 = scalar_select %p225, %s226, %s227
      %p231 = pneg %p225
      %p232 = scmp.eq.s32.totalorder %s44, 1
      %p233 = por %p231, %p232
      %p234 = scmp.ne.s32.totalorder %s226, %s229
      %p235 = scmp.eq.s32.totalorder %s44, 0
      %p236 = por %p234, %p235
      %p237 = scmp.ne.s32.totalorder %s226, %s229
      %p238 = scmp.eq.s32.totalorder %s49, 1
      %p239 = por %p237, %p238
      %p240 = scmp.ne.s32.totalorder %s229, %s230
      %p241 = scmp.eq.s32.totalorder %s49, 0
      %p242 = por %p240, %p241
      %p243 = scmp.ne.s32.totalorder %s229, %s230
      %p244 = scmp.eq.s32.totalorder %s50, 1
      %p245 = por %p243, %p244
      %p247 = scmp.ne.s32.totalorder %s230, %s246
      %p248 = scmp.eq.s32.totalorder %s50, 0
      %p249 = por %p247, %p248
      %s250 = ssub.s32 %s44, %s51
      %p251 = scmp.eq.s32.totalorder %s250, 0
      %s253 = sadd.s32 %s252, 1
      %s254 = scalar_select %p251, %s252, %s253
      %p257 = pneg %p251
      %p258 = scmp.eq.s32.totalorder %s44, 1
      %p259 = por %p257, %p258
      %p260 = scmp.ne.s32.totalorder %s252, %s255
      %p261 = scmp.eq.s32.totalorder %s44, 0
      %p262 = por %p260, %p261
      %p263 = scmp.ne.s32.totalorder %s252, %s255
      %p264 = scmp.eq.s32.totalorder %s49, 1
      %p265 = por %p263, %p264
      %p266 = scmp.ne.s32.totalorder %s255, %s256
      %p267 = scmp.eq.s32.totalorder %s49, 0
      %p268 = por %p266, %p267
      %p269 = scmp.ne.s32.totalorder %s255, %s256
      %p270 = scmp.eq.s32.totalorder %s50, 1
      %p271 = por %p269, %p270
      %p273 = scmp.ne.s32.totalorder %s256, %s272
      %p274 = scmp.eq.s32.totalorder %s50, 0
      %p275 = por %p273, %p274
      %s276 = ssub.s32 %s44, %s51
      %p277 = scmp.eq.s32.totalorder %s276, 0
      %s279 = sadd.s32 %s278, 1
      %s280 = scalar_select %p277, %s278, %s279
      %p283 = pneg %p277
      %p284 = scmp.eq.s32.totalorder %s44, 1
      %p285 = por %p283, %p284
      %p286 = scmp.ne.s32.totalorder %s278, %s281
      %p287 = scmp.eq.s32.totalorder %s44, 0
      %p288 = por %p286, %p287
      %p289 = scmp.ne.s32.totalorder %s278, %s281
      %p290 = scmp.eq.s32.totalorder %s49, 1
      %p291 = por %p289, %p290
      %p292 = scmp.ne.s32.totalorder %s281, %s282
      %p293 = scmp.eq.s32.totalorder %s49, 0
      %p294 = por %p292, %p293
      %p295 = scmp.ne.s32.totalorder %s281, %s282
      %p296 = scmp.eq.s32.totalorder %s50, 1
      %p297 = por %p295, %p296
      %p299 = scmp.ne.s32.totalorder %s282, %s298
      %p300 = scmp.eq.s32.totalorder %s50, 0
      %p301 = por %p299, %p300
      %s302 = ssub.s32 %s44, %s51
      %p303 = scmp.eq.s32.totalorder %s302, 0
      %s305 = sadd.s32 %s304, 1
      %s306 = scalar_select %p303, %s304, %s305
      %p309 = pneg %p303
      %p310 = scmp.eq.s32.totalorder %s44, 1
      %p311 = por %p309, %p310
      %p312 = scmp.ne.s32.totalorder %s304, %s307
      %p313 = scmp.eq.s32.totalorder %s44, 0
      %p314 = por %p312, %p313
      %p315 = scmp.ne.s32.totalorder %s304, %s307
      %p316 = scmp.eq.s32.totalorder %s49, 1
      %p317 = por %p315, %p316
      %p318 = scmp.ne.s32.totalorder %s307, %s308
      %p319 = scmp.eq.s32.totalorder %s49, 0
      %p320 = por %p318, %p319
      %p321 = scmp.ne.s32.totalorder %s307, %s308
      %p322 = scmp.eq.s32.totalorder %s50, 1
      %p323 = por %p321, %p322
      %p325 = scmp.ne.s32.totalorder %s308, %s324
      %p326 = scmp.eq.s32.totalorder %s50, 0
      %p327 = por %p325, %p326
      %s328 = ssub.s32 %s44, %s51
      %p329 = scmp.eq.s32.totalorder %s328, 0
      %s331 = sadd.s32 %s330, 1
      %s332 = scalar_select %p329, %s330, %s331
      %p335 = pneg %p329
      %p336 = scmp.eq.s32.totalorder %s44, 1
      %p337 = por %p335, %p336
      %p338 = scmp.ne.s32.totalorder %s330, %s333
      %p339 = scmp.eq.s32.totalorder %s44, 0
      %p340 = por %p338, %p339
      %p341 = scmp.ne.s32.totalorder %s330, %s333
      %p342 = scmp.eq.s32.totalorder %s49, 1
      %p343 = por %p341, %p342
      %p344 = scmp.ne.s32.totalorder %s333, %s334
      %p345 = scmp.eq.s32.totalorder %s49, 0
      %p346 = por %p344, %p345
      %p347 = scmp.ne.s32.totalorder %s333, %s334
      %p348 = scmp.eq.s32.totalorder %s50, 1
      %p349 = por %p347, %p348
      %p351 = scmp.ne.s32.totalorder %s334, %s350
      %p352 = scmp.eq.s32.totalorder %s50, 0
      %p353 = por %p351, %p352
      %s354 = ssub.s32 %s44, %s51
      %p355 = scmp.eq.s32.totalorder %s354, 0
      %s357 = sadd.s32 %s356, 1
      %s358 = scalar_select %p355, %s356, %s357
      %p361 = pneg %p355
      %p362 = scmp.eq.s32.totalorder %s44, 1
      %p363 = por %p361, %p362
      %p364 = scmp.ne.s32.totalorder %s356, %s359
      %p365 = scmp.eq.s32.totalorder %s44, 0
      %p366 = por %p364, %p365
      %p367 = scmp.ne.s32.totalorder %s356, %s359
      %p368 = scmp.eq.s32.totalorder %s49, 1
      %p369 = por %p367, %p368
      %p370 = scmp.ne.s32.totalorder %s359, %s360
      %p371 = scmp.eq.s32.totalorder %s49, 0
      %p372 = por %p370, %p371
      %p373 = scmp.ne.s32.totalorder %s359, %s360
      %p374 = scmp.eq.s32.totalorder %s50, 1
      %p375 = por %p373, %p374
      %p377 = scmp.ne.s32.totalorder %s360, %s376
      %p378 = scmp.eq.s32.totalorder %s50, 0
      %p379 = por %p377, %p378
      %s380 = ssub.s32 %s44, %s51
      %p381 = scmp.eq.s32.totalorder %s380, 0
      %s383 = sadd.s32 %s382, 1
      %s384 = scalar_select %p381, %s382, %s383
      %p387 = pneg %p381
      %p388 = scmp.eq.s32.totalorder %s44, 1
      %p389 = por %p387, %p388
      %p390 = scmp.ne.s32.totalorder %s382, %s385
      %p391 = scmp.eq.s32.totalorder %s44, 0
      %p392 = por %p390, %p391
      %p393 = scmp.ne.s32.totalorder %s382, %s385
      %p394 = scmp.eq.s32.totalorder %s49, 1
      %p395 = por %p393, %p394
      %p396 = scmp.ne.s32.totalorder %s385, %s386
      %p397 = scmp.eq.s32.totalorder %s49, 0
      %p398 = por %p396, %p397
      %p399 = scmp.ne.s32.totalorder %s385, %s386
      %p400 = scmp.eq.s32.totalorder %s50, 1
      %p401 = por %p399, %p400
      %p403 = scmp.ne.s32.totalorder %s386, %s402
      %p404 = scmp.eq.s32.totalorder %s50, 0
      %p405 = por %p403, %p404
      %s407 = sadd.s32 %s406, 1
      %p410 = scmp.eq.s32.totalorder %s44, 1
      %p411 = scmp.ne.s32.totalorder %s406, %s408
      %p412 = scmp.eq.s32.totalorder %s44, 0
      %p413 = por %p411, %p412
      %p414 = scmp.ne.s32.totalorder %s406, %s408
      %p415 = scmp.eq.s32.totalorder %s49, 1
      %p416 = por %p414, %p415
      %p417 = scmp.ne.s32.totalorder %s408, %s409
      %p418 = scmp.eq.s32.totalorder %s49, 0
      %p419 = por %p417, %p418
      %p420 = scmp.ne.s32.totalorder %s408, %s409
      %p421 = scmp.eq.s32.totalorder %s50, 1
      %p422 = por %p420, %p421
      %p424 = scmp.ne.s32.totalorder %s409, %s423
      %p425 = scmp.eq.s32.totalorder %s50, 0
      %p426 = por %p424, %p425
      %s428 = sadd.s32 %s427, 1
      %p431 = scmp.eq.s32.totalorder %s44, 1
      %p432 = scmp.ne.s32.totalorder %s427, %s429
      %p433 = scmp.eq.s32.totalorder %s44, 0
      %p434 = por %p432, %p433
      %p435 = scmp.ne.s32.totalorder %s427, %s429
      %p436 = scmp.eq.s32.totalorder %s49, 1
      %p437 = por %p435, %p436
      %p438 = scmp.ne.s32.totalorder %s429, %s430
      %p439 = scmp.eq.s32.totalorder %s49, 0
      %p440 = por %p438, %p439
      %p441 = scmp.ne.s32.totalorder %s429, %s430
      %p442 = scmp.eq.s32.totalorder %s50, 1
      %p443 = por %p441, %p442
      %p445 = scmp.ne.s32.totalorder %s430, %s444
      %p446 = scmp.eq.s32.totalorder %s50, 0
      %p447 = por %p445, %p446
      %s449 = sadd.s32 %s448, 1
      %p452 = scmp.eq.s32.totalorder %s44, 1
      %p453 = scmp.ne.s32.totalorder %s448, %s450
      %p454 = scmp.eq.s32.totalorder %s44, 0
      %p455 = por %p453, %p454
      %p456 = scmp.ne.s32.totalorder %s448, %s450
      %p457 = scmp.eq.s32.totalorder %s49, 1
      %p458 = por %p456, %p457
      %p459 = scmp.ne.s32.totalorder %s450, %s451
      %p460 = scmp.eq.s32.totalorder %s49, 0
      %p461 = por %p459, %p460
      %p462 = scmp.ne.s32.totalorder %s450, %s451
      %p463 = scmp.eq.s32.totalorder %s50, 1
      %p464 = por %p462, %p463
      %p466 = scmp.ne.s32.totalorder %s451, %s465
      %p467 = scmp.eq.s32.totalorder %s50, 0
      %p468 = por %p466, %p467
      %s470 = sadd.s32 %s469, 1
      %p473 = scmp.eq.s32.totalorder %s44, 1
      %p474 = scmp.ne.s32.totalorder %s469, %s471
      %p475 = scmp.eq.s32.totalorder %s44, 0
      %p476 = por %p474, %p475
      %p477 = scmp.ne.s32.totalorder %s469, %s471
      %p478 = scmp.eq.s32.totalorder %s49, 1
      %p479 = por %p477, %p478
      %p480 = scmp.ne.s32.totalorder %s471, %s472
      %p481 = scmp.eq.s32.totalorder %s49, 0
      %p482 = por %p480, %p481
      %p483 = scmp.ne.s32.totalorder %s471, %s472
      %p484 = scmp.eq.s32.totalorder %s50, 1
      %p485 = por %p483, %p484
      %p487 = scmp.ne.s32.totalorder %s472, %s486
      %p488 = scmp.eq.s32.totalorder %s50, 0
      %p489 = por %p487, %p488
      %s491 = sadd.s32 %s490, 1
      %p494 = scmp.eq.s32.totalorder %s44, 1
      %p495 = scmp.ne.s32.totalorder %s490, %s492
      %p496 = scmp.eq.s32.totalorder %s44, 0
      %p497 = por %p495, %p496
      %p498 = scmp.ne.s32.totalorder %s490, %s492
      %p499 = scmp.eq.s32.totalorder %s49, 1
      %p500 = por %p498, %p499
      %p501 = scmp.ne.s32.totalorder %s492, %s493
      %p502 = scmp.eq.s32.totalorder %s49, 0
      %p503 = por %p501, %p502
      %p504 = scmp.ne.s32.totalorder %s492, %s493
      %p505 = scmp.eq.s32.totalorder %s50, 1
      %p506 = por %p504, %p505
      %p508 = scmp.ne.s32.totalorder %s493, %s507
      %p509 = scmp.eq.s32.totalorder %s50, 0
      %p510 = por %p508, %p509
      %s512 = sadd.s32 %s511, 1
      %p515 = scmp.eq.s32.totalorder %s44, 1
      %p516 = scmp.ne.s32.totalorder %s511, %s513
      %p517 = scmp.eq.s32.totalorder %s44, 0
      %p518 = por %p516, %p517
      %p519 = scmp.ne.s32.totalorder %s511, %s513
      %p520 = scmp.eq.s32.totalorder %s49, 1
      %p521 = por %p519, %p520
      %p522 = scmp.ne.s32.totalorder %s513, %s514
      %p523 = scmp.eq.s32.totalorder %s49, 0
      %p524 = por %p522, %p523
      %p525 = scmp.ne.s32.totalorder %s513, %s514
      %p526 = scmp.eq.s32.totalorder %s50, 1
      %p527 = por %p525, %p526
      %p529 = scmp.ne.s32.totalorder %s514, %s528
      %p530 = scmp.eq.s32.totalorder %s50, 0
      %p531 = por %p529, %p530
      %s533 = sadd.s32 %s532, 1
      %p536 = scmp.eq.s32.totalorder %s44, 1
      %p537 = scmp.ne.s32.totalorder %s532, %s534
      %p538 = scmp.eq.s32.totalorder %s44, 0
      %p539 = por %p537, %p538
      %p540 = scmp.ne.s32.totalorder %s532, %s534
      %p541 = scmp.eq.s32.totalorder %s49, 1
      %p542 = por %p540, %p541
      %p543 = scmp.ne.s32.totalorder %s534, %s535
      %p544 = scmp.eq.s32.totalorder %s49, 0
      %p545 = por %p543, %p544
      %p546 = scmp.ne.s32.totalorder %s534, %s535
      %p547 = scmp.eq.s32.totalorder %s50, 1
      %p548 = por %p546, %p547
      %p550 = scmp.ne.s32.totalorder %s535, %s549
      %p551 = scmp.eq.s32.totalorder %s50, 0
      %p552 = por %p550, %p551
      %p553 = scmp.le.s32.totalorder 1, %s44
      %p554 = scmp.lt.s32.totalorder %s44, 3
      %p555 = pnand %p553, %p554
      %p556 = pneg %p555
      // Predicated region
      $region9: #{squeezebert_class_forward.1} parent=5 // pred_check
        _
      $region10: #{squeezebert_class_forward.1} parent=5 // pred_check_branch
        %558 = sbr.rel (%p555) target = $region12
      $region11: #{squeezebert_class_forward.1} parent=5 // pred_region
        %s559 = ssub.s32 %s44, 1
        // Predicated region
        $region13: #{squeezebert_class_forward.1} parent=11 // pred_check
          %p560 = pneg %p65
        $region14: #{squeezebert_class_forward.1} parent=11 // pred_check_branch
          %562 = sbr.rel (%p560) target = $region16
        $region15: #{squeezebert_class_forward.1} parent=11 // pred_region
          _
        $region16: #{squeezebert_class_forward.1} parent=11 // pred_fallthru
          _
        // Predicated region
        $region17: #{squeezebert_class_forward.1} parent=11 // pred_check
          %p563 = pneg %p86
        $region18: #{squeezebert_class_forward.1} parent=11 // pred_check_branch
          %565 = sbr.rel (%p563) target = $region20
        $region19: #{squeezebert_class_forward.1} parent=11 // pred_region
          _
        $region20: #{squeezebert_class_forward.1} parent=11 // pred_fallthru
          _
        // Predicated region
        $region21: #{squeezebert_class_forward.1} parent=11 // pred_check
          %p566 = pneg %p419
        $region22: #{squeezebert_class_forward.1} parent=11 // pred_check_branch
          %568 = sbr.rel (%p566) target = $region24
        $region23: #{squeezebert_class_forward.1} parent=11 // pred_region
          %570 = vsyncadd [#allocation16], 0
          %s572 = sshll.u32 %s14, 4
          %s573 = int_to_ptr.hbm [resolvable:$true] %s572
          %s574 = sshll.u32 [#allocation17], 4
          %s575 = int_to_ptr.vmem [resolvable:$true] %s574
          %577 = dma.hbm_to_vmem [thread:$0]  %s573, 16, %s575, [#allocation16]
        $region24: #{squeezebert_class_forward.1} parent=11 // pred_fallthru
          _
        // Predicated region
        $region25: #{squeezebert_class_forward.1} parent=11 // pred_check
          %p578 = pneg %p440
        $region26: #{squeezebert_class_forward.1} parent=11 // pred_check_branch
          %580 = sbr.rel (%p578) target = $region28
        $region27: #{squeezebert_class_forward.1} parent=11 // pred_region
          %582 = vsyncadd [#allocation19], 0
          %s584 = sshll.u32 %s15, 4
          %s585 = int_to_ptr.hbm [resolvable:$true] %s584
          %s586 = sshll.u32 [#allocation18], 4
          %s587 = int_to_ptr.vmem [resolvable:$true] %s586
          %589 = dma.hbm_to_vmem [thread:$0]  %s585, 16, %s587, [#allocation19]
        $region28: #{squeezebert_class_forward.1} parent=11 // pred_fallthru
          _
        // Predicated region
        $region29: #{squeezebert_class_forward.1} parent=11 // pred_check
          %p590 = pneg %p461
        $region30: #{squeezebert_class_forward.1} parent=11 // pred_check_branch
          %592 = sbr.rel (%p590) target = $region32
        $region31: #{squeezebert_class_forward.1} parent=11 // pred_region
          _
        $region32: #{squeezebert_class_forward.1} parent=11 // pred_fallthru
          _
        // Predicated region
        $region33: #{squeezebert_class_forward.1} parent=11 // pred_check
          %p593 = pneg %p482
        $region34: #{squeezebert_class_forward.1} parent=11 // pred_check_branch
          %595 = sbr.rel (%p593) target = $region36
        $region35: #{squeezebert_class_forward.1} parent=11 // pred_region
          %597 = vsyncadd [#allocation19], 0
          %s599 = sshll.u32 %s17, 4
          %s600 = int_to_ptr.hbm [resolvable:$true] %s599
          %s601 = sshll.u32 [#allocation20], 4
          %s602 = int_to_ptr.vmem [resolvable:$true] %s601
          %604 = dma.hbm_to_vmem [thread:$0]  %s600, 16, %s602, [#allocation19]
        $region36: #{squeezebert_class_forward.1} parent=11 // pred_fallthru
          _
        // Predicated region
        $region37: #{squeezebert_class_forward.1} parent=11 // pred_check
          %p605 = pneg %p503
        $region38: #{squeezebert_class_forward.1} parent=11 // pred_check_branch
          %607 = sbr.rel (%p605) target = $region40
        $region39: #{squeezebert_class_forward.1} parent=11 // pred_region
          %609 = vsyncadd [#allocation22], 0
          %s610 = sshll.u32 %s18, 4
          %s611 = int_to_ptr.hbm [resolvable:$true] %s610
          %s612 = sshll.u32 [#allocation21], 4
          %s613 = int_to_ptr.vmem [resolvable:$true] %s612
          %618 = dma.hbm_to_vmem [thread:$0]  %s611, 1024, %s613, [#allocation22], 64, 64, 4
        $region40: #{squeezebert_class_forward.1} parent=11 // pred_fallthru
          _
        // Predicated region
        $region41: #{squeezebert_class_forward.1} parent=11 // pred_check
          %p619 = pneg %p524
        $region42: #{squeezebert_class_forward.1} parent=11 // pred_check_branch
          %621 = sbr.rel (%p619) target = $region44
        $region43: #{squeezebert_class_forward.1} parent=11 // pred_region
          %623 = vsyncadd [#allocation22], 0
          %s625 = sshll.u32 %s19, 4
          %s626 = int_to_ptr.hbm [resolvable:$true] %s625
          %s627 = sshll.u32 [#allocation23], 4
          %s628 = int_to_ptr.vmem [resolvable:$true] %s627
          %630 = dma.hbm_to_vmem [thread:$0]  %s626, 16, %s628, [#allocation22]
        $region44: #{squeezebert_class_forward.1} parent=11 // pred_fallthru
          _
      $region12: #{squeezebert_class_forward.1} parent=5 // pred_fallthru
        _
      %p631 = scmp.lt.s32.totalorder %s44, 2
      // Predicated region
      $region45: #{squeezebert_class_forward.1} parent=5 // pred_check
        %p632 = pneg %p631
      $region46: #{squeezebert_class_forward.1} parent=5 // pred_check_branch
        %634 = sbr.rel (%p632) target = $region48
      $region47: #{squeezebert_class_forward.1} parent=5 // pred_region
        // Predicated region
        $region49: #{squeezebert_class_forward.1} parent=47 // pred_check
          %p635 = pneg %p106
        $region50: #{squeezebert_class_forward.1} parent=47 // pred_check_branch
          %637 = sbr.rel (%p635) target = $region52
        $region51: #{squeezebert_class_forward.1} parent=47 // pred_region
          %p638 = scmp.lt.s32.totalorder %s44, 1
          %s639 = scalar_select %p638, %s44, 1
          %s640 = smul.addr %s639, 48
          %s641 = smul.addr %s640, 4
          %s642 = scalar_lea.vmem %s2, %s641
        $region52: #{squeezebert_class_forward.1} parent=47 // pred_fallthru
          _
        // Predicated region
        $region53: #{squeezebert_class_forward.1} parent=47 // pred_check
          %p643 = pneg %p132
        $region54: #{squeezebert_class_forward.1} parent=47 // pred_check_branch
          %645 = sbr.rel (%p643) target = $region56
        $region55: #{squeezebert_class_forward.1} parent=47 // pred_region
          %p646 = scmp.lt.s32.totalorder %s44, 1
          %s647 = scalar_select %p646, %s44, 1
          %s648 = smul.addr %s647, 3
          %s649 = scalar_lea.vmem %s3, %s648
        $region56: #{squeezebert_class_forward.1} parent=47 // pred_fallthru
          _
        // Predicated region
        $region57: #{squeezebert_class_forward.1} parent=47 // pred_check
          %p650 = pneg %p158
        $region58: #{squeezebert_class_forward.1} parent=47 // pred_check_branch
          %652 = sbr.rel (%p650) target = $region60
        $region59: #{squeezebert_class_forward.1} parent=47 // pred_region
          %s653 = sand.u32 %s148, 1
          %s654 = scalar_lea.sflag [#allocation4], %s653
          %s655 = sand.u32 %s148, 1
          %s656 = smul.addr %s655, 64
          %s657 = scalar_lea.vmem [#allocation3], %s656
          %659 = vsyncadd %s654, 0
          %s660 = smul.addr %s44, 16
          %s661 = smul.addr %s660, 4
          %s662 = scalar_lea.hbm %s4, %s661
          %s663 = sshll.u32 %s662, 4
          %s664 = int_to_ptr.hbm [resolvable:$true] %s663
          %s665 = sshll.u32 %s657, 4
          %s666 = int_to_ptr.vmem [resolvable:$true] %s665
          %671 = dma.hbm_to_vmem [thread:$0]  %s664, 1024, %s666, %s654, 64, 64, 4
        $region60: #{squeezebert_class_forward.1} parent=47 // pred_fallthru
          _
        // Predicated region
        $region61: #{squeezebert_class_forward.1} parent=47 // pred_check
          %p672 = pneg %p184
        $region62: #{squeezebert_class_forward.1} parent=47 // pred_check_branch
          %674 = sbr.rel (%p672) target = $region64
        $region63: #{squeezebert_class_forward.1} parent=47 // pred_region
          %s675 = sand.u32 %s44, 1
          %s676 = scalar_lea.sflag [#allocation7], %s675
          %s677 = sand.u32 %s174, 1
          %s678 = scalar_lea.vmem [#allocation6], %s677
          %680 = vsyncadd %s676, 0
          %s681 = scalar_lea.hbm %s5, %s44
          %s683 = sshll.u32 %s681, 4
          %s684 = int_to_ptr.hbm [resolvable:$true] %s683
          %s685 = sshll.u32 %s678, 4
          %s686 = int_to_ptr.vmem [resolvable:$true] %s685
          %688 = dma.hbm_to_vmem [thread:$0]  %s684, 16, %s686, %s676
        $region64: #{squeezebert_class_forward.1} parent=47 // pred_fallthru
          _
        // Predicated region
        $region65: #{squeezebert_class_forward.1} parent=47 // pred_check
          %p689 = pneg %p210
        $region66: #{squeezebert_class_forward.1} parent=47 // pred_check_branch
          %691 = sbr.rel (%p689) target = $region68
        $region67: #{squeezebert_class_forward.1} parent=47 // pred_region
          %s692 = sand.u32 %s44, 1
          %s693 = scalar_lea.sflag [#allocation7], %s692
          %s694 = sand.u32 %s200, 1
          %s695 = scalar_lea.vmem [#allocation8], %s694
          %697 = vsyncadd %s693, 0
          %s698 = scalar_lea.hbm %s6, %s44
          %s700 = sshll.u32 %s698, 4
          %s701 = int_to_ptr.hbm [resolvable:$true] %s700
          %s702 = sshll.u32 %s695, 4
          %s703 = int_to_ptr.vmem [resolvable:$true] %s702
          %705 = dma.hbm_to_vmem [thread:$0]  %s701, 16, %s703, %s693
        $region68: #{squeezebert_class_forward.1} parent=47 // pred_fallthru
          _
        // Predicated region
        $region69: #{squeezebert_class_forward.1} parent=47 // pred_check
          %p706 = pneg %p236
        $region70: #{squeezebert_class_forward.1} parent=47 // pred_check_branch
          %708 = sbr.rel (%p706) target = $region72
        $region71: #{squeezebert_class_forward.1} parent=47 // pred_region
          %s709 = sand.u32 %s44, 1
          %s710 = scalar_lea.sflag [#allocation10], %s709
          %s711 = sand.u32 %s226, 1
          %s712 = scalar_lea.vmem [#allocation9], %s711
          %714 = vsyncadd %s710, 0
          %s715 = scalar_lea.hbm %s7, %s44
          %s717 = sshll.u32 %s715, 4
          %s718 = int_to_ptr.hbm [resolvable:$true] %s717
          %s719 = sshll.u32 %s712, 4
          %s720 = int_to_ptr.vmem [resolvable:$true] %s719
          %722 = dma.hbm_to_vmem [thread:$0]  %s718, 16, %s720, %s710
        $region72: #{squeezebert_class_forward.1} parent=47 // pred_fallthru
          _
        // Predicated region
        $region73: #{squeezebert_class_forward.1} parent=47 // pred_check
          %p723 = pneg %p262
        $region74: #{squeezebert_class_forward.1} parent=47 // pred_check_branch
          %725 = sbr.rel (%p723) target = $region76
        $region75: #{squeezebert_class_forward.1} parent=47 // pred_region
          %p726 = scmp.lt.s32.totalorder %s44, 1
          %s727 = scalar_select %p726, %s44, 1
          %s728 = smul.addr %s727, 64
          %s729 = smul.addr %s728, 4
          %s730 = scalar_lea.vmem %s8, %s729
        $region76: #{squeezebert_class_forward.1} parent=47 // pred_fallthru
          _
        // Predicated region
        $region77: #{squeezebert_class_forward.1} parent=47 // pred_check
          %p731 = pneg %p288
        $region78: #{squeezebert_class_forward.1} parent=47 // pred_check_branch
          %733 = sbr.rel (%p731) target = $region80
        $region79: #{squeezebert_class_forward.1} parent=47 // pred_region
          %p734 = scmp.lt.s32.totalorder %s44, 1
          %s735 = scalar_select %p734, %s44, 1
          %s736 = smul.addr %s735, 4
          %s737 = scalar_lea.vmem %s9, %s736
        $region80: #{squeezebert_class_forward.1} parent=47 // pred_fallthru
          _
        // Predicated region
        $region81: #{squeezebert_class_forward.1} parent=47 // pred_check
          %p738 = pneg %p314
        $region82: #{squeezebert_class_forward.1} parent=47 // pred_check_branch
          %740 = sbr.rel (%p738) target = $region84
        $region83: #{squeezebert_class_forward.1} parent=47 // pred_region
          %s741 = sand.u32 %s44, 1
          %s742 = scalar_lea.sflag [#allocation10], %s741
          %s743 = sand.u32 %s304, 1
          %s744 = smul.addr %s743, 256
          %s745 = scalar_lea.vmem [#allocation11], %s744
          %747 = vsyncadd %s742, 0
          %s748 = smul.addr %s44, 64
          %s749 = smul.addr %s748, 4
          %s750 = scalar_lea.hbm %s10, %s749
          %s751 = sshll.u32 %s750, 4
          %s752 = int_to_ptr.hbm [resolvable:$true] %s751
          %s753 = sshll.u32 %s745, 4
          %s754 = int_to_ptr.vmem [resolvable:$true] %s753
          %759 = dma.hbm_to_vmem [thread:$0]  %s752, 4096, %s754, %s742, 64, 64, 4
        $region84: #{squeezebert_class_forward.1} parent=47 // pred_fallthru
          _
        // Predicated region
        $region85: #{squeezebert_class_forward.1} parent=47 // pred_check
          %p760 = pneg %p340
        $region86: #{squeezebert_class_forward.1} parent=47 // pred_check_branch
          %762 = sbr.rel (%p760) target = $region88
        $region87: #{squeezebert_class_forward.1} parent=47 // pred_region
          %s763 = sand.u32 %s44, 1
          %s764 = scalar_lea.sflag [#allocation13], %s763
          %s765 = sand.u32 %s330, 1
          %s766 = scalar_lea.vmem [#allocation12], %s765
          %768 = vsyncadd %s764, 0
          %s769 = scalar_lea.hbm %s11, %s44
          %s771 = sshll.u32 %s769, 4
          %s772 = int_to_ptr.hbm [resolvable:$true] %s771
          %s773 = sshll.u32 %s766, 4
          %s774 = int_to_ptr.vmem [resolvable:$true] %s773
          %776 = dma.hbm_to_vmem [thread:$0]  %s772, 16, %s774, %s764
        $region88: #{squeezebert_class_forward.1} parent=47 // pred_fallthru
          _
        // Predicated region
        $region89: #{squeezebert_class_forward.1} parent=47 // pred_check
          %p777 = pneg %p366
        $region90: #{squeezebert_class_forward.1} parent=47 // pred_check_branch
          %779 = sbr.rel (%p777) target = $region92
        $region91: #{squeezebert_class_forward.1} parent=47 // pred_region
          %s780 = sand.u32 %s44, 1
          %s781 = scalar_lea.sflag [#allocation13], %s780
          %s782 = sand.u32 %s356, 1
          %s783 = scalar_lea.vmem [#allocation14], %s782
          %785 = vsyncadd %s781, 0
          %s786 = scalar_lea.hbm %s12, %s44
          %s788 = sshll.u32 %s786, 4
          %s789 = int_to_ptr.hbm [resolvable:$true] %s788
          %s790 = sshll.u32 %s783, 4
          %s791 = int_to_ptr.vmem [resolvable:$true] %s790
          %793 = dma.hbm_to_vmem [thread:$0]  %s789, 16, %s791, %s781
        $region92: #{squeezebert_class_forward.1} parent=47 // pred_fallthru
          _
        // Predicated region
        $region93: #{squeezebert_class_forward.1} parent=47 // pred_check
          %p794 = pneg %p392
        $region94: #{squeezebert_class_forward.1} parent=47 // pred_check_branch
          %796 = sbr.rel (%p794) target = $region96
        $region95: #{squeezebert_class_forward.1} parent=47 // pred_region
          %s797 = sand.u32 %s44, 1
          %s798 = scalar_lea.sflag [#allocation16], %s797
          %s799 = sand.u32 %s382, 1
          %s800 = scalar_lea.vmem [#allocation15], %s799
          %802 = vsyncadd %s798, 0
          %s803 = scalar_lea.hbm %s13, %s44
          %s805 = sshll.u32 %s803, 4
          %s806 = int_to_ptr.hbm [resolvable:$true] %s805
          %s807 = sshll.u32 %s800, 4
          %s808 = int_to_ptr.vmem [resolvable:$true] %s807
          %810 = dma.hbm_to_vmem [thread:$0]  %s806, 16, %s808, %s798
        $region96: #{squeezebert_class_forward.1} parent=47 // pred_fallthru
          _
      $region48: #{squeezebert_class_forward.1} parent=5 // pred_fallthru
        _
      %p811 = scmp.le.s32.totalorder 1, %s44
      %p812 = scmp.lt.s32.totalorder %s44, 3
      %p813 = pnand %p811, %p812
      %p814 = pneg %p813
      // Predicated region
      $region97: #{squeezebert_class_forward.1} parent=5 // pred_check
        _
      $region98: #{squeezebert_class_forward.1} parent=5 // pred_check_branch
        %816 = sbr.rel (%p813) target = $region100
      $region99: #{squeezebert_class_forward.1} parent=5 // pred_region
        %s817 = ssub.s32 %s44, 1
        %s818 = sand.u32 %s151, 1
        %s819 = scalar_lea.sflag [#allocation4], %s818
        %s820 = sand.u32 %s151, 1
        %s821 = smul.addr %s820, 64
        %s822 = scalar_lea.vmem [#allocation3], %s821
        // Predicated region
        $region101: #{squeezebert_class_forward.1} parent=99 // pred_check
          %p823 = pneg %p164
        $region102: #{squeezebert_class_forward.1} parent=99 // pred_check_branch
          %825 = sbr.rel (%p823) target = $region104
        $region103: #{squeezebert_class_forward.1} parent=99 // pred_region
          %827 = dma.done %s819, 1024
        $region104: #{squeezebert_class_forward.1} parent=99 // pred_fallthru
          _
        %s828 = sand.u32 %s49, 1
        %s829 = scalar_lea.sflag [#allocation7], %s828
        %s830 = sand.u32 %s177, 1
        %s831 = scalar_lea.vmem [#allocation6], %s830
        // Predicated region
        $region105: #{squeezebert_class_forward.1} parent=99 // pred_check
          %p832 = pneg %p190
        $region106: #{squeezebert_class_forward.1} parent=99 // pred_check_branch
          %834 = sbr.rel (%p832) target = $region108
        $region107: #{squeezebert_class_forward.1} parent=99 // pred_region
          %836 = dma.done %s829, 16
        $region108: #{squeezebert_class_forward.1} parent=99 // pred_fallthru
          _
        %s837 = sand.u32 %s49, 1
        %s838 = scalar_lea.sflag [#allocation7], %s837
        %s839 = sand.u32 %s203, 1
        %s840 = scalar_lea.vmem [#allocation8], %s839
        // Predicated region
        $region109: #{squeezebert_class_forward.1} parent=99 // pred_check
          %p841 = pneg %p216
        $region110: #{squeezebert_class_forward.1} parent=99 // pred_check_branch
          %843 = sbr.rel (%p841) target = $region112
        $region111: #{squeezebert_class_forward.1} parent=99 // pred_region
          %845 = dma.done %s838, 16
        $region112: #{squeezebert_class_forward.1} parent=99 // pred_fallthru
          _
        %s846 = sand.u32 %s49, 1
        %s847 = scalar_lea.sflag [#allocation10], %s846
        %s848 = sand.u32 %s229, 1
        %s849 = scalar_lea.vmem [#allocation9], %s848
        // Predicated region
        $region113: #{squeezebert_class_forward.1} parent=99 // pred_check
          %p850 = pneg %p242
        $region114: #{squeezebert_class_forward.1} parent=99 // pred_check_branch
          %852 = sbr.rel (%p850) target = $region116
        $region115: #{squeezebert_class_forward.1} parent=99 // pred_region
          %854 = dma.done %s847, 16
        $region116: #{squeezebert_class_forward.1} parent=99 // pred_fallthru
          _
        %s855 = sand.u32 %s49, 1
        %s856 = scalar_lea.sflag [#allocation10], %s855
        %s857 = sand.u32 %s307, 1
        %s858 = smul.addr %s857, 256
        %s859 = scalar_lea.vmem [#allocation11], %s858
        // Predicated region
        $region117: #{squeezebert_class_forward.1} parent=99 // pred_check
          %p860 = pneg %p320
        $region118: #{squeezebert_class_forward.1} parent=99 // pred_check_branch
          %862 = sbr.rel (%p860) target = $region120
        $region119: #{squeezebert_class_forward.1} parent=99 // pred_region
          %864 = dma.done %s856, 4096
        $region120: #{squeezebert_class_forward.1} parent=99 // pred_fallthru
          _
        %s865 = sand.u32 %s49, 1
        %s866 = scalar_lea.sflag [#allocation13], %s865
        %s867 = sand.u32 %s333, 1
        %s868 = scalar_lea.vmem [#allocation12], %s867
        // Predicated region
        $region121: #{squeezebert_class_forward.1} parent=99 // pred_check
          %p869 = pneg %p346
        $region122: #{squeezebert_class_forward.1} parent=99 // pred_check_branch
          %871 = sbr.rel (%p869) target = $region124
        $region123: #{squeezebert_class_forward.1} parent=99 // pred_region
          %873 = dma.done %s866, 16
        $region124: #{squeezebert_class_forward.1} parent=99 // pred_fallthru
          _
        %s874 = sand.u32 %s49, 1
        %s875 = scalar_lea.sflag [#allocation13], %s874
        %s876 = sand.u32 %s359, 1
        %s877 = scalar_lea.vmem [#allocation14], %s876
        // Predicated region
        $region125: #{squeezebert_class_forward.1} parent=99 // pred_check
          %p878 = pneg %p372
        $region126: #{squeezebert_class_forward.1} parent=99 // pred_check_branch
          %880 = sbr.rel (%p878) target = $region128
        $region127: #{squeezebert_class_forward.1} parent=99 // pred_region
          %882 = dma.done %s875, 16
        $region128: #{squeezebert_class_forward.1} parent=99 // pred_fallthru
          _
        %s883 = sand.u32 %s49, 1
        %s884 = scalar_lea.sflag [#allocation16], %s883
        %s885 = sand.u32 %s385, 1
        %s886 = scalar_lea.vmem [#allocation15], %s885
        // Predicated region
        $region129: #{squeezebert_class_forward.1} parent=99 // pred_check
          %p887 = pneg %p398
        $region130: #{squeezebert_class_forward.1} parent=99 // pred_check_branch
          %889 = sbr.rel (%p887) target = $region132
        $region131: #{squeezebert_class_forward.1} parent=99 // pred_region
          %891 = dma.done %s884, 16
        $region132: #{squeezebert_class_forward.1} parent=99 // pred_fallthru
          _
        // Predicated region
        $region133: #{squeezebert_class_forward.1} parent=99 // pred_check
          %p892 = pneg %p419
        $region134: #{squeezebert_class_forward.1} parent=99 // pred_check_branch
          %894 = sbr.rel (%p892) target = $region136
        $region135: #{squeezebert_class_forward.1} parent=99 // pred_region
          %896 = dma.done [#allocation16], 16
        $region136: #{squeezebert_class_forward.1} parent=99 // pred_fallthru
          _
        // Predicated region
        $region137: #{squeezebert_class_forward.1} parent=99 // pred_check
          %p897 = pneg %p440
        $region138: #{squeezebert_class_forward.1} parent=99 // pred_check_branch
          %899 = sbr.rel (%p897) target = $region140
        $region139: #{squeezebert_class_forward.1} parent=99 // pred_region
          %901 = dma.done [#allocation19], 16
        $region140: #{squeezebert_class_forward.1} parent=99 // pred_fallthru
          _
        // Predicated region
        $region141: #{squeezebert_class_forward.1} parent=99 // pred_check
          %p902 = pneg %p482
        $region142: #{squeezebert_class_forward.1} parent=99 // pred_check_branch
          %904 = sbr.rel (%p902) target = $region144
        $region143: #{squeezebert_class_forward.1} parent=99 // pred_region
          %906 = dma.done [#allocation19], 16
        $region144: #{squeezebert_class_forward.1} parent=99 // pred_fallthru
          _
        // Predicated region
        $region145: #{squeezebert_class_forward.1} parent=99 // pred_check
          %p907 = pneg %p503
        $region146: #{squeezebert_class_forward.1} parent=99 // pred_check_branch
          %909 = sbr.rel (%p907) target = $region148
        $region147: #{squeezebert_class_forward.1} parent=99 // pred_region
          %911 = dma.done [#allocation22], 1024
        $region148: #{squeezebert_class_forward.1} parent=99 // pred_fallthru
          _
        // Predicated region
        $region149: #{squeezebert_class_forward.1} parent=99 // pred_check
          %p912 = pneg %p524
        $region150: #{squeezebert_class_forward.1} parent=99 // pred_check_branch
          %914 = sbr.rel (%p912) target = $region152
        $region151: #{squeezebert_class_forward.1} parent=99 // pred_region
          %916 = dma.done [#allocation22], 16
        $region152: #{squeezebert_class_forward.1} parent=99 // pred_fallthru
          _
        %p917 = pneg %p65
        %p918 = pneg %p62
        %p919 = pneg %p86
        %p920 = pneg %p83
        %p921 = scmp.lt.s32.totalorder %s49, 1
        %s922 = scalar_select %p921, %s49, 1
        %s923 = smul.addr %s922, 48
        %s924 = smul.addr %s923, 4
        %s925 = scalar_lea.vmem %s2, %s924
        %p926 = pneg %p112
        %p927 = pneg %p109
        %p928 = scmp.lt.s32.totalorder %s49, 1
        %s929 = scalar_select %p928, %s49, 1
        %s930 = smul.addr %s929, 3
        %s931 = scalar_lea.vmem %s3, %s930
        %p932 = pneg %p138
        %p933 = pneg %p135
        %s934 = sand.u32 %s151, 1
        %s935 = scalar_lea.sflag [#allocation4], %s934
        %s936 = sand.u32 %s151, 1
        %s937 = smul.addr %s936, 64
        %s938 = scalar_lea.vmem [#allocation3], %s937
        %p939 = pneg %p164
        %p940 = pneg %p161
        %s941 = sand.u32 %s49, 1
        %s942 = scalar_lea.sflag [#allocation7], %s941
        %s943 = sand.u32 %s177, 1
        %s944 = scalar_lea.vmem [#allocation6], %s943
        %p945 = pneg %p190
        %p946 = pneg %p187
        %s947 = sand.u32 %s49, 1
        %s948 = scalar_lea.sflag [#allocation7], %s947
        %s949 = sand.u32 %s203, 1
        %s950 = scalar_lea.vmem [#allocation8], %s949
        %p951 = pneg %p216
        %p952 = pneg %p213
        %s953 = sand.u32 %s49, 1
        %s954 = scalar_lea.sflag [#allocation10], %s953
        %s955 = sand.u32 %s229, 1
        %s956 = scalar_lea.vmem [#allocation9], %s955
        %p957 = pneg %p242
        %p958 = pneg %p239
        %p959 = scmp.lt.s32.totalorder %s49, 1
        %s960 = scalar_select %p959, %s49, 1
        %s961 = smul.addr %s960, 64
        %s962 = smul.addr %s961, 4
        %s963 = scalar_lea.vmem %s8, %s962
        %p964 = pneg %p268
        %p965 = pneg %p265
        %p966 = scmp.lt.s32.totalorder %s49, 1
        %s967 = scalar_select %p966, %s49, 1
        %s968 = smul.addr %s967, 4
        %s969 = scalar_lea.vmem %s9, %s968
        %p970 = pneg %p294
        %p971 = pneg %p291
        %s972 = sand.u32 %s49, 1
        %s973 = scalar_lea.sflag [#allocation10], %s972
        %s974 = sand.u32 %s307, 1
        %s975 = smul.addr %s974, 256
        %s976 = scalar_lea.vmem [#allocation11], %s975
        %p977 = pneg %p320
        %p978 = pneg %p317
        %s979 = sand.u32 %s49, 1
        %s980 = scalar_lea.sflag [#allocation13], %s979
        %s981 = sand.u32 %s333, 1
        %s982 = scalar_lea.vmem [#allocation12], %s981
        %p983 = pneg %p346
        %p984 = pneg %p343
        %s985 = sand.u32 %s49, 1
        %s986 = scalar_lea.sflag [#allocation13], %s985
        %s987 = sand.u32 %s359, 1
        %s988 = scalar_lea.vmem [#allocation14], %s987
        %p989 = pneg %p372
        %p990 = pneg %p369
        %s991 = sand.u32 %s49, 1
        %s992 = scalar_lea.sflag [#allocation16], %s991
        %s993 = sand.u32 %s385, 1
        %s994 = scalar_lea.vmem [#allocation15], %s993
        %p995 = pneg %p398
        %p996 = pneg %p395
        %p997 = pneg %p419
        %p998 = pneg %p416
        %p999 = pneg %p440
        %p1000 = pneg %p437
        %p1001 = pneg %p461
        %p1002 = pneg %p458
        %p1003 = pneg %p482
        %p1004 = pneg %p479
        %p1005 = pneg %p503
        %p1006 = pneg %p500
        %p1007 = pneg %p524
        %p1008 = pneg %p521
        %p1009 = pneg %p545
        %p1010 = pneg %p542
        %p1011 = scmp.lt.s32.totalorder %s49, 1
        %s1012 = scalar_select %p1011, %s49, 1
        %s1013 = smul.addr %s1012, 48
        %s1014 = smul.addr %s1013, 4
        %s1015 = scalar_lea.vmem %s2, %s1014
        %p1016 = scmp.lt.s32.totalorder %s49, 1
        %s1017 = scalar_select %p1016, %s49, 1
        %s1018 = smul.addr %s1017, 3
        %s1019 = scalar_lea.vmem %s3, %s1018
        %p1020 = scmp.lt.s32.totalorder %s49, 1
        %s1021 = scalar_select %p1020, %s49, 1
        %s1022 = smul.addr %s1021, 64
        %s1023 = smul.addr %s1022, 4
        %s1024 = scalar_lea.vmem %s8, %s1023
        %p1025 = scmp.lt.s32.totalorder %s49, 1
        %s1026 = scalar_select %p1025, %s49, 1
        %s1027 = smul.addr %s1026, 4
        %s1028 = scalar_lea.vmem %s9, %s1027
        %p1030 = scmp.eq.s32.totalorder %s49, 0
        // Predicated region
        $region153: #{squeezebert_class_forward.1} parent=99 // pred_check
          %p1031 = pneg %p1030
        $region154: #{squeezebert_class_forward.1} parent=99 // pred_check_branch
          %1033 = sbr.rel (%p1031) target = $region156
        $region155: #{squeezebert_class_forward.1} parent=99 // pred_region
          %1034 = vst [vmem:[#allocation24] sm:$0x3] 0.0
          %v1035 = vld [vmem:[%s0] sm:$0xff]
          %v1036 = vld [vmem:[%s0 + $0x8] sm:$0xff]
          %v1037 = vld [vmem:[%s0 + $0x10] sm:$0xff]
          %v1038 = vld [vmem:[%s0 + $0x18] sm:$0xff]
          %v1039 = vld [vmem:[#allocation17] sm:$0x1]
          %v1040 = vld [vmem:[#allocation18] sm:$0x1]
          %1041 = vadd.xlane.f32.xlu0 %v1035
          %v1042 = vpop.xlane.xlu0 %1041
          %1043 = vadd.xlane.f32.xlu0 %v1036
          %v1044 = vpop.xlane.xlu0 %1043
          %1045 = vadd.xlane.f32.xlu0 %v1037
          %v1046 = vpop.xlane.xlu0 %1045
          %1047 = vadd.xlane.f32.xlu0 %v1038
          %v1048 = vpop.xlane.xlu0 %1047
          %v1049 = vrcp.pop 128.0
          %v1050 = vmul.f32 128.0, %v1049
          %v1051 = vsub.f32 1.0, %v1050
          %v1052 = vmul.f32 %v1049, %v1051
          %v1053 = vadd.f32 %v1049, %v1052
          %vm1054 = vweird.f32 %v1049
          %v1055 = vsel %vm1054, %v1049, %v1053
          %v1056 = vmul.f32 %v1042, %v1055
          %v1057 = vmul.f32 %v1044, %v1055
          %v1058 = vmul.f32 %v1046, %v1055
          %v1059 = vmul.f32 %v1048, %v1055
          %v1060 = vsub.f32 %v1035, %v1056
          %v1061 = vsub.f32 %v1036, %v1057
          %v1062 = vsub.f32 %v1037, %v1058
          %v1063 = vsub.f32 %v1038, %v1059
          %v1064 = vmul.f32 %v1060, %v1060
          %v1065 = vmul.f32 %v1061, %v1061
          %v1066 = vmul.f32 %v1062, %v1062
          %v1067 = vmul.f32 %v1063, %v1063
          %1068 = vadd.xlane.f32.xlu0 %v1064
          %v1069 = vpop.xlane.xlu0 %1068
          %1070 = vadd.xlane.f32.xlu0 %v1065
          %v1071 = vpop.xlane.xlu0 %1070
          %1072 = vadd.xlane.f32.xlu0 %v1066
          %v1073 = vpop.xlane.xlu0 %1072
          %1074 = vadd.xlane.f32.xlu0 %v1067
          %v1075 = vpop.xlane.xlu0 %1074
          %v1076 = vmul.f32 %v1069, %v1055
          %v1077 = vmul.f32 %v1071, %v1055
          %v1078 = vmul.f32 %v1073, %v1055
          %v1079 = vmul.f32 %v1075, %v1055
          %v1080 = vadd.f32 %v1076, 1e-12
          %v1081 = vadd.f32 %v1077, 1e-12
          %v1082 = vadd.f32 %v1078, 1e-12
          %v1083 = vadd.f32 %v1079, 1e-12
          %v1084 = vrsqrt.pop %v1080
          %v1085 = vmul.f32 %v1084, %v1080
          %v1086 = vmul.f32 %v1085, %v1084
          %v1087 = vmul.f32 0.5, %v1086
          %v1088 = vsub.f32 1.5, %v1087
          %v1089 = vmul.f32 %v1084, %v1088
          %vm1090 = vweird.f32 %v1080
          %vm1091 = vweird.f32 %v1084
          %vm1092 = vmor %vm1090, %vm1091
          %v1093 = vsel %vm1092, %v1084, %v1089
          %v1094 = vrsqrt.pop %v1081
          %v1095 = vmul.f32 %v1094, %v1081
          %v1096 = vmul.f32 %v1095, %v1094
          %v1097 = vmul.f32 0.5, %v1096
          %v1098 = vsub.f32 1.5, %v1097
          %v1099 = vmul.f32 %v1094, %v1098
          %vm1100 = vweird.f32 %v1081
          %vm1101 = vweird.f32 %v1094
          %vm1102 = vmor %vm1100, %vm1101
          %v1103 = vsel %vm1102, %v1094, %v1099
          %v1104 = vrsqrt.pop %v1082
          %v1105 = vmul.f32 %v1104, %v1082
          %v1106 = vmul.f32 %v1105, %v1104
          %v1107 = vmul.f32 0.5, %v1106
          %v1108 = vsub.f32 1.5, %v1107
          %v1109 = vmul.f32 %v1104, %v1108
          %vm1110 = vweird.f32 %v1082
          %vm1111 = vweird.f32 %v1104
          %vm1112 = vmor %vm1110, %vm1111
          %v1113 = vsel %vm1112, %v1104, %v1109
          %v1114 = vrsqrt.pop %v1083
          %v1115 = vmul.f32 %v1114, %v1083
          %v1116 = vmul.f32 %v1115, %v1114
          %v1117 = vmul.f32 0.5, %v1116
          %v1118 = vsub.f32 1.5, %v1117
          %v1119 = vmul.f32 %v1114, %v1118
          %vm1120 = vweird.f32 %v1083
          %vm1121 = vweird.f32 %v1114
          %vm1122 = vmor %vm1120, %vm1121
          %v1123 = vsel %vm1122, %v1114, %v1119
          %v1124 = vmul.f32 %v1060, %v1093
          %v1125 = vmul.f32 %v1061, %v1103
          %v1126 = vmul.f32 %v1062, %v1113
          %v1127 = vmul.f32 %v1063, %v1123
          %v1129 = vperm.slane %v1039, 0
          %v1131 = vmul.f32 %v1124, %v1129
          %v1132 = vmul.f32 %v1125, %v1129
          %v1133 = vmul.f32 %v1126, %v1129
          %v1134 = vmul.f32 %v1127, %v1129
          %v1136 = vperm.slane %v1040, 0
          %v1138 = vadd.f32 %v1131, %v1136
          %v1139 = vadd.f32 %v1132, %v1136
          %v1140 = vadd.f32 %v1133, %v1136
          %v1141 = vadd.f32 %v1134, %v1136
          %1142 = vst [vmem:[#allocation2] sm:$0xff] %v1138
          %1143 = vst [vmem:[#allocation2 + $0x8] sm:$0xff] %v1139
          %1144 = vst [vmem:[#allocation2 + $0x10] sm:$0xff] %v1140
          %1145 = vst [vmem:[#allocation2 + $0x18] sm:$0xff] %v1141
        $region156: #{squeezebert_class_forward.1} parent=99 // pred_fallthru
          _
        %v1146 = vld [vmem:[#allocation2] sm:$0xff]
        %v1147 = vld [vmem:[#allocation2 + $0x8] sm:$0xff]
        %v1148 = vld [vmem:[#allocation2 + $0x10] sm:$0xff]
        %v1149 = vld [vmem:[#allocation2 + $0x18] sm:$0xff]
        %v1150 = vpack.c.bf16 %v1147, %v1146
        %v1151 = vpack.c.bf16 %v1149, %v1148
        %v1152 = vld [vmem:[%s1015] sm:$0xff]
        %v1153 = vld [vmem:[%s1015 + $0x8] sm:$0xf]
        %v1154 = vld [vmem:[%s1015 + $0xc] sm:$0xff]
        %v1155 = vld [vmem:[%s1015 + $0x14] sm:$0xf]
        %v1156 = vld [vmem:[%s1015 + $0x18] sm:$0xff]
        %v1157 = vld [vmem:[%s1015 + $0x20] sm:$0xf]
        %v1158 = vld [vmem:[%s1015 + $0x24] sm:$0xff]
        %v1159 = vld [vmem:[%s1015 + $0x2c] sm:$0xf]
        %v1160 = vld [vmem:[%s1015 + $0x30] sm:$0xff]
        %v1161 = vld [vmem:[%s1015 + $0x38] sm:$0xf]
        %v1162 = vld [vmem:[%s1015 + $0x3c] sm:$0xff]
        %v1163 = vld [vmem:[%s1015 + $0x44] sm:$0xf]
        %v1164 = vld [vmem:[%s1015 + $0x48] sm:$0xff]
        %v1165 = vld [vmem:[%s1015 + $0x50] sm:$0xf]
        %v1166 = vld [vmem:[%s1015 + $0x54] sm:$0xff]
        %v1167 = vld [vmem:[%s1015 + $0x5c] sm:$0xf]
        %v1168 = vld [vmem:[%s1015 + $0x60] sm:$0xff]
        %v1169 = vld [vmem:[%s1015 + $0x68] sm:$0xf]
        %v1170 = vld [vmem:[%s1015 + $0x6c] sm:$0xff]
        %v1171 = vld [vmem:[%s1015 + $0x74] sm:$0xf]
        %v1172 = vld [vmem:[%s1015 + $0x78] sm:$0xff]
        %v1173 = vld [vmem:[%s1015 + $0x80] sm:$0xf]
        %v1174 = vld [vmem:[%s1015 + $0x84] sm:$0xff]
        %v1175 = vld [vmem:[%s1015 + $0x8c] sm:$0xf]
        %v1176 = vld [vmem:[%s1015 + $0x90] sm:$0xff]
        %v1177 = vld [vmem:[%s1015 + $0x98] sm:$0xf]
        %v1178 = vld [vmem:[%s1015 + $0x9c] sm:$0xff]
        %v1179 = vld [vmem:[%s1015 + $0xa4] sm:$0xf]
        %v1180 = vld [vmem:[%s1015 + $0xa8] sm:$0xff]
        %v1181 = vld [vmem:[%s1015 + $0xb0] sm:$0xf]
        %v1182 = vld [vmem:[%s1015 + $0xb4] sm:$0xff]
        %v1183 = vld [vmem:[%s1015 + $0xbc] sm:$0xf]
        %v1184 = vld [vmem:[%s1019] sm:$0x7]
        %v1186 = vperm.slane %v1184, 0
        %v1187 = vperm.slane %v1184, 1
        %v1188 = vperm.slane %v1184, 2
        %v1224 = vunpack.c.l.b16 %v1152
        %v1225 = vunpack.c.h.b16 %v1152
        %v1226 = vunpack.c.l.b16 %v1153
        %v1227 = vunpack.c.l.b16 %v1154
        %v1228 = vunpack.c.h.b16 %v1154
        %v1229 = vunpack.c.l.b16 %v1155
        %v1230 = vunpack.c.l.b16 %v1156
        %v1231 = vunpack.c.h.b16 %v1156
        %v1232 = vunpack.c.l.b16 %v1157
        %v1233 = vunpack.c.l.b16 %v1158
        %v1234 = vunpack.c.h.b16 %v1158
        %v1235 = vunpack.c.l.b16 %v1159
        %v1236 = vunpack.c.l.b16 %v1160
        %v1237 = vunpack.c.h.b16 %v1160
        %v1238 = vunpack.c.l.b16 %v1161
        %v1239 = vunpack.c.l.b16 %v1162
        %v1240 = vunpack.c.h.b16 %v1162
        %v1241 = vunpack.c.l.b16 %v1163
        %v1242 = vunpack.c.l.b16 %v1164
        %v1243 = vunpack.c.h.b16 %v1164
        %v1244 = vunpack.c.l.b16 %v1165
        %v1245 = vunpack.c.l.b16 %v1166
        %v1246 = vunpack.c.h.b16 %v1166
        %v1247 = vunpack.c.l.b16 %v1167
        %v1248 = vunpack.c.l.b16 %v1168
        %v1249 = vunpack.c.h.b16 %v1168
        %v1250 = vunpack.c.l.b16 %v1169
        %v1251 = vunpack.c.l.b16 %v1170
        %v1252 = vunpack.c.h.b16 %v1170
        %v1253 = vunpack.c.l.b16 %v1171
        %v1254 = vunpack.c.l.b16 %v1172
        %v1255 = vunpack.c.h.b16 %v1172
        %v1256 = vunpack.c.l.b16 %v1173
        %v1257 = vunpack.c.l.b16 %v1174
        %v1258 = vunpack.c.h.b16 %v1174
        %v1259 = vunpack.c.l.b16 %v1175
        %v1260 = vunpack.c.l.b16 %v1176
        %v1261 = vunpack.c.h.b16 %v1176
        %v1262 = vunpack.c.l.b16 %v1177
        %v1263 = vunpack.c.l.b16 %v1178
        %v1264 = vunpack.c.h.b16 %v1178
        %v1265 = vunpack.c.l.b16 %v1179
        %v1266 = vunpack.c.l.b16 %v1180
        %v1267 = vunpack.c.h.b16 %v1180
        %v1268 = vunpack.c.l.b16 %v1181
        %v1269 = vunpack.c.l.b16 %v1182
        %v1270 = vunpack.c.h.b16 %v1182
        %v1271 = vunpack.c.l.b16 %v1183
        %v1272 = vpack.c.b16 %v1227, %v1224
        %v1273 = vpack.c.b16 %v1228, %v1225
        %v1274 = vpack.c.b16 %v1229, %v1226
        %v1275 = vpack.c.b16 %v1233, %v1230
        %v1276 = vpack.c.b16 %v1234, %v1231
        %v1277 = vpack.c.b16 %v1235, %v1232
        %v1278 = vpack.c.b16 %v1239, %v1236
        %v1279 = vpack.c.b16 %v1240, %v1237
        %v1280 = vpack.c.b16 %v1241, %v1238
        %v1281 = vpack.c.b16 %v1245, %v1242
        %v1282 = vpack.c.b16 %v1246, %v1243
        %v1283 = vpack.c.b16 %v1247, %v1244
        %v1284 = vpack.c.b16 %v1251, %v1248
        %v1285 = vpack.c.b16 %v1252, %v1249
        %v1286 = vpack.c.b16 %v1253, %v1250
        %v1287 = vpack.c.b16 %v1257, %v1254
        %v1288 = vpack.c.b16 %v1258, %v1255
        %v1289 = vpack.c.b16 %v1259, %v1256
        %v1290 = vpack.c.b16 %v1263, %v1260
        %v1291 = vpack.c.b16 %v1264, %v1261
        %v1292 = vpack.c.b16 %v1265, %v1262
        %v1293 = vpack.c.b16 %v1269, %v1266
        %v1294 = vpack.c.b16 %v1270, %v1267
        %v1295 = vpack.c.b16 %v1271, %v1268
        %1320 = vmatpush.bf16.msra.mxu0 %v1293
        %1321 = vmatpush.bf16.msra.mxu0 %v1290
        %1322 = vmatpush.bf16.msra.mxu0 %v1287
        %1323 = vmatpush.bf16.msra.mxu0 %v1284
        %1324 = vmatpush.bf16.msra.mxu0 %v1281
        %1325 = vmatpush.bf16.msra.mxu0 %v1278
        %1326 = vmatpush.bf16.msra.mxu0 %v1275
        %1327 = vmatpush.bf16.msra.mxu0 %v1272
        %1328 = vmatmul.bf16.gmra.mxu0 %v1150
        %v1329 = vpop.f32.mrf.mxu0
        %v1330 = vadd.f32 %v1186, %v1329
        %v1331 = vpop.f32.mrf.mxu0
        %v1332 = vadd.f32 %v1186, %v1331
        %1333 = vmatmul.bf16.gmra.mxu0 %v1151
        %v1334 = vpop.f32.mrf.mxu0
        %v1335 = vadd.f32 %v1186, %v1334
        %v1336 = vpop.f32.mrf.mxu0
        %v1337 = vadd.f32 %v1186, %v1336
        %1338 = vdwg.mxu0
        %1339 = vmatpush.bf16.msra.mxu0 %v1294
        %1340 = vmatpush.bf16.msra.mxu0 %v1291
        %1341 = vmatpush.bf16.msra.mxu0 %v1288
        %1342 = vmatpush.bf16.msra.mxu0 %v1285
        %1343 = vmatpush.bf16.msra.mxu0 %v1282
        %1344 = vmatpush.bf16.msra.mxu0 %v1279
        %1345 = vmatpush.bf16.msra.mxu0 %v1276
        %1346 = vmatpush.bf16.msra.mxu0 %v1273
        %1347 = vmatmul.bf16.gmra.mxu0 %v1150
        %v1348 = vpop.f32.mrf.mxu0
        %v1349 = vadd.f32 %v1187, %v1348
        %v1350 = vpop.f32.mrf.mxu0
        %v1351 = vadd.f32 %v1187, %v1350
        %1352 = vmatmul.bf16.gmra.mxu0 %v1151
        %v1353 = vpop.f32.mrf.mxu0
        %v1354 = vadd.f32 %v1187, %v1353
        %v1355 = vpop.f32.mrf.mxu0
        %v1356 = vadd.f32 %v1187, %v1355
        %1357 = vdwg.mxu0
        %1358 = vmatpush.bf16.msra.mxu0 %v1295
        %1359 = vmatpush.bf16.msra.mxu0 %v1292
        %1360 = vmatpush.bf16.msra.mxu0 %v1289
        %1361 = vmatpush.bf16.msra.mxu0 %v1286
        %1362 = vmatpush.bf16.msra.mxu0 %v1283
        %1363 = vmatpush.bf16.msra.mxu0 %v1280
        %1364 = vmatpush.bf16.msra.mxu0 %v1277
        %1365 = vmatpush.bf16.msra.mxu0 %v1274
        %1366 = vmatmul.bf16.gmra.mxu0 %v1150
        %v1367 = vpop.f32.mrf.mxu0
        %v1368 = vadd.f32 %v1188, %v1367
        %v1369 = vpop.f32.mrf.mxu0
        %v1370 = vadd.f32 %v1188, %v1369
        %1371 = vmatmul.bf16.gmra.mxu0 %v1151
        %v1372 = vpop.f32.mrf.mxu0
        %v1373 = vadd.f32 %v1188, %v1372
        %v1374 = vpop.f32.mrf.mxu0
        %v1375 = vadd.f32 %v1188, %v1374
        %1376 = vdwg.mxu0
        %v1377 = vpack.c.bf16 %v1349, %v1330
        %v1378 = vpack.c.bf16 %v1368, %v1368
        %v1379 = vpack.c.bf16 %v1351, %v1332
        %v1380 = vpack.c.bf16 %v1370, %v1370
        %v1381 = vpack.c.bf16 %v1354, %v1335
        %v1382 = vpack.c.bf16 %v1373, %v1373
        %v1383 = vpack.c.bf16 %v1356, %v1337
        %v1384 = vpack.c.bf16 %v1375, %v1375
        %1389 = vrot.lane.b32.xlu0 %v1377, 96
        %v1390 = vpop.permute.xlu0 %1389
        %1391 = vrot.lane.b32.xlu0 %v1379, 96
        %v1392 = vpop.permute.xlu0 %1391
        %1393 = vrot.lane.b32.xlu0 %v1381, 96
        %v1394 = vpop.permute.xlu0 %1393
        %1395 = vrot.lane.b32.xlu0 %v1383, 96
        %v1396 = vpop.permute.xlu0 %1395
        %1397 = vrot.lane.b32.xlu0 %v1377, 64
        %v1398 = vpop.permute.xlu0 %1397
        %1399 = vrot.lane.b32.xlu0 %v1379, 64
        %v1400 = vpop.permute.xlu0 %1399
        %1401 = vrot.lane.b32.xlu0 %v1381, 64
        %v1402 = vpop.permute.xlu0 %1401
        %1403 = vrot.lane.b32.xlu0 %v1383, 64
        %v1404 = vpop.permute.xlu0 %1403
        %1405 = vrot.lane.b32.xlu0 %v1377, 32
        %v1406 = vpop.permute.xlu0 %1405
        %1407 = vrot.lane.b32.xlu0 %v1379, 32
        %v1408 = vpop.permute.xlu0 %1407
        %1409 = vrot.lane.b32.xlu0 %v1381, 32
        %v1410 = vpop.permute.xlu0 %1409
        %1411 = vrot.lane.b32.xlu0 %v1383, 32
        %v1412 = vpop.permute.xlu0 %1411
        %v1413 = vrot.slane %v1377, 4
        %v1414 = vrot.slane %v1379, 4
        %v1415 = vrot.slane %v1381, 4
        %v1416 = vrot.slane %v1383, 4
        %v1417 = vrot.slane %v1390, 4
        %v1418 = vrot.slane %v1392, 4
        %v1419 = vrot.slane %v1394, 4
        %v1420 = vrot.slane %v1396, 4
        %v1421 = vrot.slane %v1398, 4
        %v1422 = vrot.slane %v1400, 4
        %v1423 = vrot.slane %v1402, 4
        %v1424 = vrot.slane %v1404, 4
        %v1425 = vrot.slane %v1406, 4
        %v1426 = vrot.slane %v1408, 4
        %v1427 = vrot.slane %v1410, 4
        %v1428 = vrot.slane %v1412, 4
        %1433 = vrot.lane.b32.xlu0 %v1378, 96
        %v1434 = vpop.permute.xlu0 %1433
        %1435 = vrot.lane.b32.xlu0 %v1380, 96
        %v1436 = vpop.permute.xlu0 %1435
        %1437 = vrot.lane.b32.xlu0 %v1382, 96
        %v1438 = vpop.permute.xlu0 %1437
        %1439 = vrot.lane.b32.xlu0 %v1384, 96
        %v1440 = vpop.permute.xlu0 %1439
        %1441 = vrot.lane.b32.xlu0 %v1378, 64
        %v1442 = vpop.permute.xlu0 %1441
        %1443 = vrot.lane.b32.xlu0 %v1380, 64
        %v1444 = vpop.permute.xlu0 %1443
        %1445 = vrot.lane.b32.xlu0 %v1382, 64
        %v1446 = vpop.permute.xlu0 %1445
        %1447 = vrot.lane.b32.xlu0 %v1384, 64
        %v1448 = vpop.permute.xlu0 %1447
        %1449 = vrot.lane.b32.xlu0 %v1378, 32
        %v1450 = vpop.permute.xlu0 %1449
        %1451 = vrot.lane.b32.xlu0 %v1380, 32
        %v1452 = vpop.permute.xlu0 %1451
        %1453 = vrot.lane.b32.xlu0 %v1382, 32
        %v1454 = vpop.permute.xlu0 %1453
        %1455 = vrot.lane.b32.xlu0 %v1384, 32
        %v1456 = vpop.permute.xlu0 %1455
        %v1457 = vld [vmem:[%s1] sm:$0xff]
        %v1458 = vld [vmem:[%s1 + $0x8] sm:$0xff]
        %v1459 = vld [vmem:[%s1 + $0x10] sm:$0xff]
        %v1460 = vld [vmem:[%s1 + $0x18] sm:$0xff]
        %v1461 = vld [vmem:[%s1 + $0x20] sm:$0xff]
        %v1462 = vld [vmem:[%s1 + $0x28] sm:$0xff]
        %v1463 = vld [vmem:[%s1 + $0x30] sm:$0xff]
        %v1464 = vld [vmem:[%s1 + $0x38] sm:$0xff]
        %v1465 = vld [vmem:[%s1 + $0x40] sm:$0xff]
        %v1466 = vld [vmem:[%s1 + $0x48] sm:$0xff]
        %v1467 = vld [vmem:[%s1 + $0x50] sm:$0xff]
        %v1468 = vld [vmem:[%s1 + $0x58] sm:$0xff]
        %v1469 = vld [vmem:[%s1 + $0x60] sm:$0xff]
        %v1470 = vld [vmem:[%s1 + $0x68] sm:$0xff]
        %v1471 = vld [vmem:[%s1 + $0x70] sm:$0xff]
        %v1472 = vld [vmem:[%s1 + $0x78] sm:$0xff]
        %v1473 = vunpack.c.l.b16 %v1377
        %v1474 = vunpack.c.l.b16 %v1379
        %v1475 = vpack.c.b16 %v1474, %v1473
        %v1476 = vunpack.c.l.b16 %v1413
        %v1477 = vunpack.c.l.b16 %v1414
        %v1478 = vpack.c.b16 %v1477, %v1476
        %vm1479 = vcmask 261120
        %v1481 = vsel %vm1479, %v1475, 0
        %v1484 = vsel %vm1479, %v1478, 0
        %1486 = vmatpush.bf16.xpose.msra.mxu0 0
        %1487 = vmatpush.bf16.xpose.msra.mxu0 0
        %1488 = vmatpush.bf16.xpose.msra.mxu0 0
        %1489 = vmatpush.bf16.xpose.msra.mxu0 0
        %1490 = vmatpush.bf16.xpose.msra.mxu0 0
        %1491 = vmatpush.bf16.xpose.msra.mxu0 0
        %1492 = vmatpush.bf16.xpose.msra.mxu0 0
        %1493 = vmatpush.bf16.xpose.msra.mxu0 %v1484
        %1494 = vmatmul.bf16.gmra.mxu0 %v1481
        %v1495 = vpop.f32.mrf.mxu0
        %v1496 = vadd.f32 %v1457, %v1495
        %v1497 = vpop.f32.mrf.mxu0
        %v1498 = vadd.f32 %v1458, %v1497
        %1499 = vdwg.mxu0
        %v1500 = vunpack.c.l.b16 %v1381
        %v1501 = vunpack.c.l.b16 %v1383
        %v1502 = vpack.c.b16 %v1501, %v1500
        %v1503 = vunpack.c.l.b16 %v1415
        %v1504 = vunpack.c.l.b16 %v1416
        %v1505 = vpack.c.b16 %v1504, %v1503
        %v1507 = vsel %vm1479, %v1502, 0
        %v1510 = vsel %vm1479, %v1505, 0
        %1512 = vmatpush.bf16.xpose.msra.mxu0 0
        %1513 = vmatpush.bf16.xpose.msra.mxu0 0
        %1514 = vmatpush.bf16.xpose.msra.mxu0 0
        %1515 = vmatpush.bf16.xpose.msra.mxu0 0
        %1516 = vmatpush.bf16.xpose.msra.mxu0 0
        %1517 = vmatpush.bf16.xpose.msra.mxu0 0
        %1518 = vmatpush.bf16.xpose.msra.mxu0 0
        %1519 = vmatpush.bf16.xpose.msra.mxu0 %v1510
        %1520 = vmatmul.bf16.gmra.mxu0 %v1507
        %v1521 = vpop.f32.mrf.mxu0
        %v1522 = vadd.f32 %v1459, %v1521
        %v1523 = vpop.f32.mrf.mxu0
        %v1524 = vadd.f32 %v1460, %v1523
        %1525 = vdwg.mxu0
        %v1526 = vunpack.c.l.b16 %v1390
        %v1527 = vunpack.c.l.b16 %v1392
        %v1528 = vpack.c.b16 %v1527, %v1526
        %v1529 = vunpack.c.l.b16 %v1417
        %v1530 = vunpack.c.l.b16 %v1418
        %v1531 = vpack.c.b16 %v1530, %v1529
        %v1533 = vsel %vm1479, %v1528, 0
        %v1536 = vsel %vm1479, %v1531, 0
        %1538 = vmatpush.bf16.xpose.msra.mxu0 0
        %1539 = vmatpush.bf16.xpose.msra.mxu0 0
        %1540 = vmatpush.bf16.xpose.msra.mxu0 0
        %1541 = vmatpush.bf16.xpose.msra.mxu0 0
        %1542 = vmatpush.bf16.xpose.msra.mxu0 0
        %1543 = vmatpush.bf16.xpose.msra.mxu0 0
        %1544 = vmatpush.bf16.xpose.msra.mxu0 0
        %1545 = vmatpush.bf16.xpose.msra.mxu0 %v1536
        %1546 = vmatmul.bf16.gmra.mxu0 %v1533
        %v1547 = vpop.f32.mrf.mxu0
        %v1548 = vadd.f32 %v1461, %v1547
        %v1549 = vpop.f32.mrf.mxu0
        %v1550 = vadd.f32 %v1462, %v1549
        %1551 = vdwg.mxu0
        %v1552 = vunpack.c.l.b16 %v1394
        %v1553 = vunpack.c.l.b16 %v1396
        %v1554 = vpack.c.b16 %v1553, %v1552
        %v1555 = vunpack.c.l.b16 %v1419
        %v1556 = vunpack.c.l.b16 %v1420
        %v1557 = vpack.c.b16 %v1556, %v1555
        %v1559 = vsel %vm1479, %v1554, 0
        %v1562 = vsel %vm1479, %v1557, 0
        %1564 = vmatpush.bf16.xpose.msra.mxu0 0
        %1565 = vmatpush.bf16.xpose.msra.mxu0 0
        %1566 = vmatpush.bf16.xpose.msra.mxu0 0
        %1567 = vmatpush.bf16.xpose.msra.mxu0 0
        %1568 = vmatpush.bf16.xpose.msra.mxu0 0
        %1569 = vmatpush.bf16.xpose.msra.mxu0 0
        %1570 = vmatpush.bf16.xpose.msra.mxu0 0
        %1571 = vmatpush.bf16.xpose.msra.mxu0 %v1562
        %1572 = vmatmul.bf16.gmra.mxu0 %v1559
        %v1573 = vpop.f32.mrf.mxu0
        %v1574 = vadd.f32 %v1463, %v1573
        %v1575 = vpop.f32.mrf.mxu0
        %v1576 = vadd.f32 %v1464, %v1575
        %1577 = vdwg.mxu0
        %v1578 = vunpack.c.l.b16 %v1398
        %v1579 = vunpack.c.l.b16 %v1400
        %v1580 = vpack.c.b16 %v1579, %v1578
        %v1581 = vunpack.c.l.b16 %v1421
        %v1582 = vunpack.c.l.b16 %v1422
        %v1583 = vpack.c.b16 %v1582, %v1581
        %v1585 = vsel %vm1479, %v1580, 0
        %v1588 = vsel %vm1479, %v1583, 0
        %1590 = vmatpush.bf16.xpose.msra.mxu0 0
        %1591 = vmatpush.bf16.xpose.msra.mxu0 0
        %1592 = vmatpush.bf16.xpose.msra.mxu0 0
        %1593 = vmatpush.bf16.xpose.msra.mxu0 0
        %1594 = vmatpush.bf16.xpose.msra.mxu0 0
        %1595 = vmatpush.bf16.xpose.msra.mxu0 0
        %1596 = vmatpush.bf16.xpose.msra.mxu0 0
        %1597 = vmatpush.bf16.xpose.msra.mxu0 %v1588
        %1598 = vmatmul.bf16.gmra.mxu0 %v1585
        %v1599 = vpop.f32.mrf.mxu0
        %v1600 = vadd.f32 %v1465, %v1599
        %v1601 = vpop.f32.mrf.mxu0
        %v1602 = vadd.f32 %v1466, %v1601
        %1603 = vdwg.mxu0
        %v1604 = vunpack.c.l.b16 %v1402
        %v1605 = vunpack.c.l.b16 %v1404
        %v1606 = vpack.c.b16 %v1605, %v1604
        %v1607 = vunpack.c.l.b16 %v1423
        %v1608 = vunpack.c.l.b16 %v1424
        %v1609 = vpack.c.b16 %v1608, %v1607
        %v1611 = vsel %vm1479, %v1606, 0
        %v1614 = vsel %vm1479, %v1609, 0
        %1616 = vmatpush.bf16.xpose.msra.mxu0 0
        %1617 = vmatpush.bf16.xpose.msra.mxu0 0
        %1618 = vmatpush.bf16.xpose.msra.mxu0 0
        %1619 = vmatpush.bf16.xpose.msra.mxu0 0
        %1620 = vmatpush.bf16.xpose.msra.mxu0 0
        %1621 = vmatpush.bf16.xpose.msra.mxu0 0
        %1622 = vmatpush.bf16.xpose.msra.mxu0 0
        %1623 = vmatpush.bf16.xpose.msra.mxu0 %v1614
        %1624 = vmatmul.bf16.gmra.mxu0 %v1611
        %v1625 = vpop.f32.mrf.mxu0
        %v1626 = vadd.f32 %v1467, %v1625
        %v1627 = vpop.f32.mrf.mxu0
        %v1628 = vadd.f32 %v1468, %v1627
        %1629 = vdwg.mxu0
        %v1630 = vunpack.c.l.b16 %v1406
        %v1631 = vunpack.c.l.b16 %v1408
        %v1632 = vpack.c.b16 %v1631, %v1630
        %v1633 = vunpack.c.l.b16 %v1425
        %v1634 = vunpack.c.l.b16 %v1426
        %v1635 = vpack.c.b16 %v1634, %v1633
        %v1637 = vsel %vm1479, %v1632, 0
        %v1640 = vsel %vm1479, %v1635, 0
        %1642 = vmatpush.bf16.xpose.msra.mxu0 0
        %1643 = vmatpush.bf16.xpose.msra.mxu0 0
        %1644 = vmatpush.bf16.xpose.msra.mxu0 0
        %1645 = vmatpush.bf16.xpose.msra.mxu0 0
        %1646 = vmatpush.bf16.xpose.msra.mxu0 0
        %1647 = vmatpush.bf16.xpose.msra.mxu0 0
        %1648 = vmatpush.bf16.xpose.msra.mxu0 0
        %1649 = vmatpush.bf16.xpose.msra.mxu0 %v1640
        %1650 = vmatmul.bf16.gmra.mxu0 %v1637
        %v1651 = vpop.f32.mrf.mxu0
        %v1652 = vadd.f32 %v1469, %v1651
        %v1653 = vpop.f32.mrf.mxu0
        %v1654 = vadd.f32 %v1470, %v1653
        %1655 = vdwg.mxu0
        %v1656 = vunpack.c.l.b16 %v1410
        %v1657 = vunpack.c.l.b16 %v1412
        %v1658 = vpack.c.b16 %v1657, %v1656
        %v1659 = vunpack.c.l.b16 %v1427
        %v1660 = vunpack.c.l.b16 %v1428
        %v1661 = vpack.c.b16 %v1660, %v1659
        %v1663 = vsel %vm1479, %v1658, 0
        %v1666 = vsel %vm1479, %v1661, 0
        %1668 = vmatpush.bf16.xpose.msra.mxu0 0
        %1669 = vmatpush.bf16.xpose.msra.mxu0 0
        %1670 = vmatpush.bf16.xpose.msra.mxu0 0
        %1671 = vmatpush.bf16.xpose.msra.mxu0 0
        %1672 = vmatpush.bf16.xpose.msra.mxu0 0
        %1673 = vmatpush.bf16.xpose.msra.mxu0 0
        %1674 = vmatpush.bf16.xpose.msra.mxu0 0
        %1675 = vmatpush.bf16.xpose.msra.mxu0 %v1666
        %1676 = vmatmul.bf16.gmra.mxu0 %v1663
        %v1677 = vpop.f32.mrf.mxu0
        %v1678 = vadd.f32 %v1471, %v1677
        %v1679 = vpop.f32.mrf.mxu0
        %v1680 = vadd.f32 %v1472, %v1679
        %1681 = vdwg.mxu0
        %vm1682 = vcmask 130048
        %v1683 = vsel %vm1682, %v1496, -inf
        %1684 = vmax.xlane.f32.xlu0 %v1683
        %v1685 = vpop.xlane.xlu0 %1684
        %v1686 = vsel %vm1682, %v1498, -inf
        %1687 = vmax.xlane.f32.xlu0 %v1686
        %v1688 = vpop.xlane.xlu0 %1687
        %v1689 = vsel %vm1682, %v1522, -inf
        %1690 = vmax.xlane.f32.xlu0 %v1689
        %v1691 = vpop.xlane.xlu0 %1690
        %v1692 = vsel %vm1682, %v1524, -inf
        %1693 = vmax.xlane.f32.xlu0 %v1692
        %v1694 = vpop.xlane.xlu0 %1693
        %v1695 = vsel %vm1682, %v1548, -inf
        %1696 = vmax.xlane.f32.xlu0 %v1695
        %v1697 = vpop.xlane.xlu0 %1696
        %v1698 = vsel %vm1682, %v1550, -inf
        %1699 = vmax.xlane.f32.xlu0 %v1698
        %v1700 = vpop.xlane.xlu0 %1699
        %v1701 = vsel %vm1682, %v1574, -inf
        %1702 = vmax.xlane.f32.xlu0 %v1701
        %v1703 = vpop.xlane.xlu0 %1702
        %v1704 = vsel %vm1682, %v1576, -inf
        %1705 = vmax.xlane.f32.xlu0 %v1704
        %v1706 = vpop.xlane.xlu0 %1705
        %v1707 = vsel %vm1682, %v1600, -inf
        %1708 = vmax.xlane.f32.xlu0 %v1707
        %v1709 = vpop.xlane.xlu0 %1708
        %v1710 = vsel %vm1682, %v1602, -inf
        %1711 = vmax.xlane.f32.xlu0 %v1710
        %v1712 = vpop.xlane.xlu0 %1711
        %v1713 = vsel %vm1682, %v1626, -inf
        %1714 = vmax.xlane.f32.xlu0 %v1713
        %v1715 = vpop.xlane.xlu0 %1714
        %v1716 = vsel %vm1682, %v1628, -inf
        %1717 = vmax.xlane.f32.xlu0 %v1716
        %v1718 = vpop.xlane.xlu0 %1717
        %v1719 = vsel %vm1682, %v1652, -inf
        %1720 = vmax.xlane.f32.xlu0 %v1719
        %v1721 = vpop.xlane.xlu0 %1720
        %v1722 = vsel %vm1682, %v1654, -inf
        %1723 = vmax.xlane.f32.xlu0 %v1722
        %v1724 = vpop.xlane.xlu0 %1723
        %v1725 = vsel %vm1682, %v1678, -inf
        %1726 = vmax.xlane.f32.xlu0 %v1725
        %v1727 = vpop.xlane.xlu0 %1726
        %v1728 = vsel %vm1682, %v1680, -inf
        %1729 = vmax.xlane.f32.xlu0 %v1728
        %v1730 = vpop.xlane.xlu0 %1729
        %v1731 = vsub.f32 %v1496, %v1685
        %v1732 = vsub.f32 %v1498, %v1688
        %v1733 = vsub.f32 %v1522, %v1691
        %v1734 = vsub.f32 %v1524, %v1694
        %v1735 = vsub.f32 %v1548, %v1697
        %v1736 = vsub.f32 %v1550, %v1700
        %v1737 = vsub.f32 %v1574, %v1703
        %v1738 = vsub.f32 %v1576, %v1706
        %v1739 = vsub.f32 %v1600, %v1709
        %v1740 = vsub.f32 %v1602, %v1712
        %v1741 = vsub.f32 %v1626, %v1715
        %v1742 = vsub.f32 %v1628, %v1718
        %v1743 = vsub.f32 %v1652, %v1721
        %v1744 = vsub.f32 %v1654, %v1724
        %v1745 = vsub.f32 %v1678, %v1727
        %v1746 = vsub.f32 %v1680, %v1730
        %v1747 = vmul.f32 %v1731, 1.442695
        %v1748 = vpow.pop %v1747
        %v1749 = vmul.f32 %v1732, 1.442695
        %v1750 = vpow.pop %v1749
        %v1751 = vmul.f32 %v1733, 1.442695
        %v1752 = vpow.pop %v1751
        %v1753 = vmul.f32 %v1734, 1.442695
        %v1754 = vpow.pop %v1753
        %v1755 = vmul.f32 %v1735, 1.442695
        %v1756 = vpow.pop %v1755
        %v1757 = vmul.f32 %v1736, 1.442695
        %v1758 = vpow.pop %v1757
        %v1759 = vmul.f32 %v1737, 1.442695
        %v1760 = vpow.pop %v1759
        %v1761 = vmul.f32 %v1738, 1.442695
        %v1762 = vpow.pop %v1761
        %v1763 = vmul.f32 %v1739, 1.442695
        %v1764 = vpow.pop %v1763
        %v1765 = vmul.f32 %v1740, 1.442695
        %v1766 = vpow.pop %v1765
        %v1767 = vmul.f32 %v1741, 1.442695
        %v1768 = vpow.pop %v1767
        %v1769 = vmul.f32 %v1742, 1.442695
        %v1770 = vpow.pop %v1769
        %v1771 = vmul.f32 %v1743, 1.442695
        %v1772 = vpow.pop %v1771
        %v1773 = vmul.f32 %v1744, 1.442695
        %v1774 = vpow.pop %v1773
        %v1775 = vmul.f32 %v1745, 1.442695
        %v1776 = vpow.pop %v1775
        %v1777 = vmul.f32 %v1746, 1.442695
        %v1778 = vpow.pop %v1777
        %v1779 = vsel %vm1682, %v1748, 0.0
        %1780 = vadd.xlane.f32.xlu0 %v1779
        %v1781 = vpop.xlane.xlu0 %1780
        %v1782 = vsel %vm1682, %v1750, 0.0
        %1783 = vadd.xlane.f32.xlu0 %v1782
        %v1784 = vpop.xlane.xlu0 %1783
        %v1785 = vsel %vm1682, %v1752, 0.0
        %1786 = vadd.xlane.f32.xlu0 %v1785
        %v1787 = vpop.xlane.xlu0 %1786
        %v1788 = vsel %vm1682, %v1754, 0.0
        %1789 = vadd.xlane.f32.xlu0 %v1788
        %v1790 = vpop.xlane.xlu0 %1789
        %v1791 = vsel %vm1682, %v1756, 0.0
        %1792 = vadd.xlane.f32.xlu0 %v1791
        %v1793 = vpop.xlane.xlu0 %1792
        %v1794 = vsel %vm1682, %v1758, 0.0
        %1795 = vadd.xlane.f32.xlu0 %v1794
        %v1796 = vpop.xlane.xlu0 %1795
        %v1797 = vsel %vm1682, %v1760, 0.0
        %1798 = vadd.xlane.f32.xlu0 %v1797
        %v1799 = vpop.xlane.xlu0 %1798
        %v1800 = vsel %vm1682, %v1762, 0.0
        %1801 = vadd.xlane.f32.xlu0 %v1800
        %v1802 = vpop.xlane.xlu0 %1801
        %v1803 = vsel %vm1682, %v1764, 0.0
        %1804 = vadd.xlane.f32.xlu0 %v1803
        %v1805 = vpop.xlane.xlu0 %1804
        %v1806 = vsel %vm1682, %v1766, 0.0
        %1807 = vadd.xlane.f32.xlu0 %v1806
        %v1808 = vpop.xlane.xlu0 %1807
        %v1809 = vsel %vm1682, %v1768, 0.0
        %1810 = vadd.xlane.f32.xlu0 %v1809
        %v1811 = vpop.xlane.xlu0 %1810
        %v1812 = vsel %vm1682, %v1770, 0.0
        %1813 = vadd.xlane.f32.xlu0 %v1812
        %v1814 = vpop.xlane.xlu0 %1813
        %v1815 = vsel %vm1682, %v1772, 0.0
        %1816 = vadd.xlane.f32.xlu0 %v1815
        %v1817 = vpop.xlane.xlu0 %1816
        %v1818 = vsel %vm1682, %v1774, 0.0
        %1819 = vadd.xlane.f32.xlu0 %v1818
        %v1820 = vpop.xlane.xlu0 %1819
        %v1821 = vsel %vm1682, %v1776, 0.0
        %1822 = vadd.xlane.f32.xlu0 %v1821
        %v1823 = vpop.xlane.xlu0 %1822
        %v1824 = vsel %vm1682, %v1778, 0.0
        %1825 = vadd.xlane.f32.xlu0 %v1824
        %v1826 = vpop.xlane.xlu0 %1825
        %v1827 = vrcp.pop %v1781
        %v1828 = vrcp.pop %v1784
        %v1829 = vrcp.pop %v1787
        %v1830 = vrcp.pop %v1790
        %v1831 = vrcp.pop %v1793
        %v1832 = vrcp.pop %v1796
        %v1833 = vrcp.pop %v1799
        %v1834 = vrcp.pop %v1802
        %v1835 = vrcp.pop %v1805
        %v1836 = vrcp.pop %v1808
        %v1837 = vrcp.pop %v1811
        %v1838 = vrcp.pop %v1814
        %v1839 = vrcp.pop %v1817
        %v1840 = vrcp.pop %v1820
        %v1841 = vrcp.pop %v1823
        %v1842 = vrcp.pop %v1826
        %v1843 = vmul.f32 %v1748, %v1827
        %v1844 = vmul.f32 %v1750, %v1828
        %v1845 = vmul.f32 %v1752, %v1829
        %v1846 = vmul.f32 %v1754, %v1830
        %v1847 = vmul.f32 %v1756, %v1831
        %v1848 = vmul.f32 %v1758, %v1832
        %v1849 = vmul.f32 %v1760, %v1833
        %v1850 = vmul.f32 %v1762, %v1834
        %v1851 = vmul.f32 %v1764, %v1835
        %v1852 = vmul.f32 %v1766, %v1836
        %v1853 = vmul.f32 %v1768, %v1837
        %v1854 = vmul.f32 %v1770, %v1838
        %v1855 = vmul.f32 %v1772, %v1839
        %v1856 = vmul.f32 %v1774, %v1840
        %v1857 = vmul.f32 %v1776, %v1841
        %v1858 = vmul.f32 %v1778, %v1842
        %v1859 = vpack.c.bf16 %v1843, %v1843
        %v1860 = vpack.c.bf16 %v1844, %v1844
        %v1861 = vpack.c.bf16 %v1845, %v1845
        %v1862 = vpack.c.bf16 %v1846, %v1846
        %v1863 = vpack.c.bf16 %v1847, %v1847
        %v1864 = vpack.c.bf16 %v1848, %v1848
        %v1865 = vpack.c.bf16 %v1849, %v1849
        %v1866 = vpack.c.bf16 %v1850, %v1850
        %v1867 = vpack.c.bf16 %v1851, %v1851
        %v1868 = vpack.c.bf16 %v1852, %v1852
        %v1869 = vpack.c.bf16 %v1853, %v1853
        %v1870 = vpack.c.bf16 %v1854, %v1854
        %v1871 = vpack.c.bf16 %v1855, %v1855
        %v1872 = vpack.c.bf16 %v1856, %v1856
        %v1873 = vpack.c.bf16 %v1857, %v1857
        %v1874 = vpack.c.bf16 %v1858, %v1858
        %v1877 = vunpack.c.l.b16 %v1859
        %v1878 = vunpack.c.l.b16 %v1860
        %v1879 = vpack.c.b16 %v1878, %v1877
        %v1880 = vunpack.c.l.b16 %v1378
        %v1881 = vunpack.c.l.b16 %v1380
        %v1882 = vpack.c.b16 %v1881, %v1880
        %v1885 = vsel %vm1682, %v1879, 0
        %1887 = vmatpush.bf16.msra.mxu0 0
        %1888 = vmatpush.bf16.msra.mxu0 0
        %1889 = vmatpush.bf16.msra.mxu0 0
        %1890 = vmatpush.bf16.msra.mxu0 0
        %1891 = vmatpush.bf16.msra.mxu0 0
        %1892 = vmatpush.bf16.msra.mxu0 0
        %1893 = vmatpush.bf16.msra.mxu0 0
        %1894 = vmatpush.bf16.msra.mxu0 %v1882
        %1895 = vmatmul.bf16.gmra.mxu0 %v1885
        %v1896 = vpop.f32.mrf.mxu0
        %v1897 = vadd.f32 0.0, %v1896
        %v1898 = vpop.f32.mrf.mxu0
        %v1899 = vadd.f32 0.0, %v1898
        %1900 = vdwg.mxu0
        %v1903 = vunpack.c.l.b16 %v1861
        %v1904 = vunpack.c.l.b16 %v1862
        %v1905 = vpack.c.b16 %v1904, %v1903
        %v1906 = vunpack.c.l.b16 %v1382
        %v1907 = vunpack.c.l.b16 %v1384
        %v1908 = vpack.c.b16 %v1907, %v1906
        %v1911 = vsel %vm1682, %v1905, 0
        %1913 = vmatpush.bf16.msra.mxu0 0
        %1914 = vmatpush.bf16.msra.mxu0 0
        %1915 = vmatpush.bf16.msra.mxu0 0
        %1916 = vmatpush.bf16.msra.mxu0 0
        %1917 = vmatpush.bf16.msra.mxu0 0
        %1918 = vmatpush.bf16.msra.mxu0 0
        %1919 = vmatpush.bf16.msra.mxu0 0
        %1920 = vmatpush.bf16.msra.mxu0 %v1908
        %1921 = vmatmul.bf16.gmra.mxu0 %v1911
        %v1922 = vpop.f32.mrf.mxu0
        %v1923 = vadd.f32 0.0, %v1922
        %v1924 = vpop.f32.mrf.mxu0
        %v1925 = vadd.f32 0.0, %v1924
        %1926 = vdwg.mxu0
        %v1929 = vunpack.c.l.b16 %v1863
        %v1930 = vunpack.c.l.b16 %v1864
        %v1931 = vpack.c.b16 %v1930, %v1929
        %v1932 = vunpack.c.l.b16 %v1434
        %v1933 = vunpack.c.l.b16 %v1436
        %v1934 = vpack.c.b16 %v1933, %v1932
        %v1937 = vsel %vm1682, %v1931, 0
        %1939 = vmatpush.bf16.msra.mxu0 0
        %1940 = vmatpush.bf16.msra.mxu0 0
        %1941 = vmatpush.bf16.msra.mxu0 0
        %1942 = vmatpush.bf16.msra.mxu0 0
        %1943 = vmatpush.bf16.msra.mxu0 0
        %1944 = vmatpush.bf16.msra.mxu0 0
        %1945 = vmatpush.bf16.msra.mxu0 0
        %1946 = vmatpush.bf16.msra.mxu0 %v1934
        %1947 = vmatmul.bf16.gmra.mxu0 %v1937
        %v1948 = vpop.f32.mrf.mxu0
        %v1949 = vadd.f32 0.0, %v1948
        %v1950 = vpop.f32.mrf.mxu0
        %v1951 = vadd.f32 0.0, %v1950
        %1952 = vdwg.mxu0
        %v1955 = vunpack.c.l.b16 %v1865
        %v1956 = vunpack.c.l.b16 %v1866
        %v1957 = vpack.c.b16 %v1956, %v1955
        %v1958 = vunpack.c.l.b16 %v1438
        %v1959 = vunpack.c.l.b16 %v1440
        %v1960 = vpack.c.b16 %v1959, %v1958
        %v1963 = vsel %vm1682, %v1957, 0
        %1965 = vmatpush.bf16.msra.mxu0 0
        %1966 = vmatpush.bf16.msra.mxu0 0
        %1967 = vmatpush.bf16.msra.mxu0 0
        %1968 = vmatpush.bf16.msra.mxu0 0
        %1969 = vmatpush.bf16.msra.mxu0 0
        %1970 = vmatpush.bf16.msra.mxu0 0
        %1971 = vmatpush.bf16.msra.mxu0 0
        %1972 = vmatpush.bf16.msra.mxu0 %v1960
        %1973 = vmatmul.bf16.gmra.mxu0 %v1963
        %v1974 = vpop.f32.mrf.mxu0
        %v1975 = vadd.f32 0.0, %v1974
        %v1976 = vpop.f32.mrf.mxu0
        %v1977 = vadd.f32 0.0, %v1976
        %1978 = vdwg.mxu0
        %v1981 = vunpack.c.l.b16 %v1867
        %v1982 = vunpack.c.l.b16 %v1868
        %v1983 = vpack.c.b16 %v1982, %v1981
        %v1984 = vunpack.c.l.b16 %v1442
        %v1985 = vunpack.c.l.b16 %v1444
        %v1986 = vpack.c.b16 %v1985, %v1984
        %v1989 = vsel %vm1682, %v1983, 0
        %1991 = vmatpush.bf16.msra.mxu0 0
        %1992 = vmatpush.bf16.msra.mxu0 0
        %1993 = vmatpush.bf16.msra.mxu0 0
        %1994 = vmatpush.bf16.msra.mxu0 0
        %1995 = vmatpush.bf16.msra.mxu0 0
        %1996 = vmatpush.bf16.msra.mxu0 0
        %1997 = vmatpush.bf16.msra.mxu0 0
        %1998 = vmatpush.bf16.msra.mxu0 %v1986
        %1999 = vmatmul.bf16.gmra.mxu0 %v1989
        %v2000 = vpop.f32.mrf.mxu0
        %v2001 = vadd.f32 0.0, %v2000
        %v2002 = vpop.f32.mrf.mxu0
        %v2003 = vadd.f32 0.0, %v2002
        %2004 = vdwg.mxu0
        %v2007 = vunpack.c.l.b16 %v1869
        %v2008 = vunpack.c.l.b16 %v1870
        %v2009 = vpack.c.b16 %v2008, %v2007
        %v2010 = vunpack.c.l.b16 %v1446
        %v2011 = vunpack.c.l.b16 %v1448
        %v2012 = vpack.c.b16 %v2011, %v2010
        %v2015 = vsel %vm1682, %v2009, 0
        %2017 = vmatpush.bf16.msra.mxu0 0
        %2018 = vmatpush.bf16.msra.mxu0 0
        %2019 = vmatpush.bf16.msra.mxu0 0
        %2020 = vmatpush.bf16.msra.mxu0 0
        %2021 = vmatpush.bf16.msra.mxu0 0
        %2022 = vmatpush.bf16.msra.mxu0 0
        %2023 = vmatpush.bf16.msra.mxu0 0
        %2024 = vmatpush.bf16.msra.mxu0 %v2012
        %2025 = vmatmul.bf16.gmra.mxu0 %v2015
        %v2026 = vpop.f32.mrf.mxu0
        %v2027 = vadd.f32 0.0, %v2026
        %v2028 = vpop.f32.mrf.mxu0
        %v2029 = vadd.f32 0.0, %v2028
        %2030 = vdwg.mxu0
        %v2033 = vunpack.c.l.b16 %v1871
        %v2034 = vunpack.c.l.b16 %v1872
        %v2035 = vpack.c.b16 %v2034, %v2033
        %v2036 = vunpack.c.l.b16 %v1450
        %v2037 = vunpack.c.l.b16 %v1452
        %v2038 = vpack.c.b16 %v2037, %v2036
        %v2041 = vsel %vm1682, %v2035, 0
        %2043 = vmatpush.bf16.msra.mxu0 0
        %2044 = vmatpush.bf16.msra.mxu0 0
        %2045 = vmatpush.bf16.msra.mxu0 0
        %2046 = vmatpush.bf16.msra.mxu0 0
        %2047 = vmatpush.bf16.msra.mxu0 0
        %2048 = vmatpush.bf16.msra.mxu0 0
        %2049 = vmatpush.bf16.msra.mxu0 0
        %2050 = vmatpush.bf16.msra.mxu0 %v2038
        %2051 = vmatmul.bf16.gmra.mxu0 %v2041
        %v2052 = vpop.f32.mrf.mxu0
        %v2053 = vadd.f32 0.0, %v2052
        %v2054 = vpop.f32.mrf.mxu0
        %v2055 = vadd.f32 0.0, %v2054
        %2056 = vdwg.mxu0
        %v2059 = vunpack.c.l.b16 %v1873
        %v2060 = vunpack.c.l.b16 %v1874
        %v2061 = vpack.c.b16 %v2060, %v2059
        %v2062 = vunpack.c.l.b16 %v1454
        %v2063 = vunpack.c.l.b16 %v1456
        %v2064 = vpack.c.b16 %v2063, %v2062
        %v2067 = vsel %vm1682, %v2061, 0
        %2069 = vmatpush.bf16.msra.mxu0 0
        %2070 = vmatpush.bf16.msra.mxu0 0
        %2071 = vmatpush.bf16.msra.mxu0 0
        %2072 = vmatpush.bf16.msra.mxu0 0
        %2073 = vmatpush.bf16.msra.mxu0 0
        %2074 = vmatpush.bf16.msra.mxu0 0
        %2075 = vmatpush.bf16.msra.mxu0 0
        %2076 = vmatpush.bf16.msra.mxu0 %v2064
        %2077 = vmatmul.bf16.gmra.mxu0 %v2067
        %v2078 = vpop.f32.mrf.mxu0
        %v2079 = vadd.f32 0.0, %v2078
        %v2080 = vpop.f32.mrf.mxu0
        %v2081 = vadd.f32 0.0, %v2080
        %2082 = vdwg.mxu0
        %2087 = vrot.lane.b32.xlu0 %v1949, 32
        %v2088 = vpop.permute.xlu0 %2087
        %2089 = vrot.lane.b32.xlu0 %v1951, 32
        %v2090 = vpop.permute.xlu0 %2089
        %2091 = vrot.lane.b32.xlu0 %v1975, 32
        %v2092 = vpop.permute.xlu0 %2091
        %2093 = vrot.lane.b32.xlu0 %v1977, 32
        %v2094 = vpop.permute.xlu0 %2093
        %2103 = vrot.lane.b32.xlu0 %v2001, 64
        %v2104 = vpop.permute.xlu0 %2103
        %2105 = vrot.lane.b32.xlu0 %v2003, 64
        %v2106 = vpop.permute.xlu0 %2105
        %2107 = vrot.lane.b32.xlu0 %v2027, 64
        %v2108 = vpop.permute.xlu0 %2107
        %2109 = vrot.lane.b32.xlu0 %v2029, 64
        %v2110 = vpop.permute.xlu0 %2109
        %2119 = vrot.lane.b32.xlu0 %v2053, 96
        %v2120 = vpop.permute.xlu0 %2119
        %2121 = vrot.lane.b32.xlu0 %v2055, 96
        %v2122 = vpop.permute.xlu0 %2121
        %2123 = vrot.lane.b32.xlu0 %v2079, 96
        %v2124 = vpop.permute.xlu0 %2123
        %2125 = vrot.lane.b32.xlu0 %v2081, 96
        %v2126 = vpop.permute.xlu0 %2125
        %v2131 = vsel %vm1479, %v1897, %v2088
        %v2132 = vsel %vm1479, %v1899, %v2090
        %v2133 = vsel %vm1479, %v1923, %v2092
        %v2134 = vsel %vm1479, %v1925, %v2094
        %vm2135 = vcmask 523264
        %v2136 = vsel %vm2135, %v2131, %v2104
        %v2137 = vsel %vm2135, %v2132, %v2106
        %v2138 = vsel %vm2135, %v2133, %v2108
        %v2139 = vsel %vm2135, %v2134, %v2110
        %vm2140 = vcmask 785408
        %v2141 = vsel %vm2140, %v2136, %v2120
        %v2142 = vsel %vm2140, %v2137, %v2122
        %v2143 = vsel %vm2140, %v2138, %v2124
        %v2144 = vsel %vm2140, %v2139, %v2126
        %v2145 = vpack.c.bf16 %v2142, %v2141
        %v2146 = vpack.c.bf16 %v2144, %v2143
        %v2147 = vld [vmem:[%s822] sm:$0xf]
        %v2148 = vld [vmem:[%s822 + $0x4] sm:$0xf]
        %v2149 = vld [vmem:[%s822 + $0x8] sm:$0xf]
        %v2150 = vld [vmem:[%s822 + $0xc] sm:$0xf]
        %v2151 = vld [vmem:[%s822 + $0x10] sm:$0xf]
        %v2152 = vld [vmem:[%s822 + $0x14] sm:$0xf]
        %v2153 = vld [vmem:[%s822 + $0x18] sm:$0xf]
        %v2154 = vld [vmem:[%s822 + $0x1c] sm:$0xf]
        %v2155 = vld [vmem:[%s822 + $0x20] sm:$0xf]
        %v2156 = vld [vmem:[%s822 + $0x24] sm:$0xf]
        %v2157 = vld [vmem:[%s822 + $0x28] sm:$0xf]
        %v2158 = vld [vmem:[%s822 + $0x2c] sm:$0xf]
        %v2159 = vld [vmem:[%s822 + $0x30] sm:$0xf]
        %v2160 = vld [vmem:[%s822 + $0x34] sm:$0xf]
        %v2161 = vld [vmem:[%s822 + $0x38] sm:$0xf]
        %v2162 = vld [vmem:[%s822 + $0x3c] sm:$0xf]
        %v2163 = vld [vmem:[%s831] sm:$0x1]
        %v2165 = vperm.slane %v2163, 0
        %v2183 = vunpack.c.l.b16 %v2147
        %v2184 = vunpack.c.l.b16 %v2148
        %v2185 = vunpack.c.l.b16 %v2149
        %v2186 = vunpack.c.l.b16 %v2150
        %v2187 = vunpack.c.l.b16 %v2151
        %v2188 = vunpack.c.l.b16 %v2152
        %v2189 = vunpack.c.l.b16 %v2153
        %v2190 = vunpack.c.l.b16 %v2154
        %v2191 = vunpack.c.l.b16 %v2155
        %v2192 = vunpack.c.l.b16 %v2156
        %v2193 = vunpack.c.l.b16 %v2157
        %v2194 = vunpack.c.l.b16 %v2158
        %v2195 = vunpack.c.l.b16 %v2159
        %v2196 = vunpack.c.l.b16 %v2160
        %v2197 = vunpack.c.l.b16 %v2161
        %v2198 = vunpack.c.l.b16 %v2162
        %v2199 = vpack.c.b16 %v2184, %v2183
        %v2200 = vpack.c.b16 %v2186, %v2185
        %v2201 = vpack.c.b16 %v2188, %v2187
        %v2202 = vpack.c.b16 %v2190, %v2189
        %v2203 = vpack.c.b16 %v2192, %v2191
        %v2204 = vpack.c.b16 %v2194, %v2193
        %v2205 = vpack.c.b16 %v2196, %v2195
        %v2206 = vpack.c.b16 %v2198, %v2197
        %2215 = vmatpush.bf16.msra.mxu0 %v2206
        %2216 = vmatpush.bf16.msra.mxu0 %v2205
        %2217 = vmatpush.bf16.msra.mxu0 %v2204
        %2218 = vmatpush.bf16.msra.mxu0 %v2203
        %2219 = vmatpush.bf16.msra.mxu0 %v2202
        %2220 = vmatpush.bf16.msra.mxu0 %v2201
        %2221 = vmatpush.bf16.msra.mxu0 %v2200
        %2222 = vmatpush.bf16.msra.mxu0 %v2199
        %2223 = vmatmul.bf16.gmra.mxu0 %v2145
        %v2224 = vpop.f32.mrf.mxu0
        %v2225 = vadd.f32 %v2165, %v2224
        %v2226 = vpop.f32.mrf.mxu0
        %v2227 = vadd.f32 %v2165, %v2226
        %2228 = vmatmul.bf16.gmra.mxu0 %v2146
        %v2229 = vpop.f32.mrf.mxu0
        %v2230 = vadd.f32 %v2165, %v2229
        %v2231 = vpop.f32.mrf.mxu0
        %v2232 = vadd.f32 %v2165, %v2231
        %2233 = vdwg.mxu0
        %v2234 = vadd.f32 %v2225, %v1146
        %v2235 = vadd.f32 %v2227, %v1147
        %v2236 = vadd.f32 %v2230, %v1148
        %v2237 = vadd.f32 %v2232, %v1149
        %v2238 = vld [vmem:[%s840] sm:$0x1]
        %v2239 = vld [vmem:[%s849] sm:$0x1]
        %2240 = vadd.xlane.f32.xlu0 %v2234
        %v2241 = vpop.xlane.xlu0 %2240
        %2242 = vadd.xlane.f32.xlu0 %v2235
        %v2243 = vpop.xlane.xlu0 %2242
        %2244 = vadd.xlane.f32.xlu0 %v2236
        %v2245 = vpop.xlane.xlu0 %2244
        %2246 = vadd.xlane.f32.xlu0 %v2237
        %v2247 = vpop.xlane.xlu0 %2246
        %v2248 = vrcp.pop 128.0
        %v2249 = vmul.f32 128.0, %v2248
        %v2250 = vsub.f32 1.0, %v2249
        %v2251 = vmul.f32 %v2248, %v2250
        %v2252 = vadd.f32 %v2248, %v2251
        %vm2253 = vweird.f32 %v2248
        %v2254 = vsel %vm2253, %v2248, %v2252
        %v2255 = vmul.f32 %v2241, %v2254
        %v2256 = vmul.f32 %v2243, %v2254
        %v2257 = vmul.f32 %v2245, %v2254
        %v2258 = vmul.f32 %v2247, %v2254
        %v2259 = vsub.f32 %v2234, %v2255
        %v2260 = vsub.f32 %v2235, %v2256
        %v2261 = vsub.f32 %v2236, %v2257
        %v2262 = vsub.f32 %v2237, %v2258
        %v2263 = vmul.f32 %v2259, %v2259
        %v2264 = vmul.f32 %v2260, %v2260
        %v2265 = vmul.f32 %v2261, %v2261
        %v2266 = vmul.f32 %v2262, %v2262
        %2267 = vadd.xlane.f32.xlu0 %v2263
        %v2268 = vpop.xlane.xlu0 %2267
        %2269 = vadd.xlane.f32.xlu0 %v2264
        %v2270 = vpop.xlane.xlu0 %2269
        %2271 = vadd.xlane.f32.xlu0 %v2265
        %v2272 = vpop.xlane.xlu0 %2271
        %2273 = vadd.xlane.f32.xlu0 %v2266
        %v2274 = vpop.xlane.xlu0 %2273
        %v2275 = vmul.f32 %v2268, %v2254
        %v2276 = vmul.f32 %v2270, %v2254
        %v2277 = vmul.f32 %v2272, %v2254
        %v2278 = vmul.f32 %v2274, %v2254
        %v2279 = vadd.f32 %v2275, 1e-12
        %v2280 = vadd.f32 %v2276, 1e-12
        %v2281 = vadd.f32 %v2277, 1e-12
        %v2282 = vadd.f32 %v2278, 1e-12
        %v2283 = vrsqrt.pop %v2279
        %v2284 = vmul.f32 %v2283, %v2279
        %v2285 = vmul.f32 %v2284, %v2283
        %v2286 = vmul.f32 0.5, %v2285
        %v2287 = vsub.f32 1.5, %v2286
        %v2288 = vmul.f32 %v2283, %v2287
        %vm2289 = vweird.f32 %v2279
        %vm2290 = vweird.f32 %v2283
        %vm2291 = vmor %vm2289, %vm2290
        %v2292 = vsel %vm2291, %v2283, %v2288
        %v2293 = vrsqrt.pop %v2280
        %v2294 = vmul.f32 %v2293, %v2280
        %v2295 = vmul.f32 %v2294, %v2293
        %v2296 = vmul.f32 0.5, %v2295
        %v2297 = vsub.f32 1.5, %v2296
        %v2298 = vmul.f32 %v2293, %v2297
        %vm2299 = vweird.f32 %v2280
        %vm2300 = vweird.f32 %v2293
        %vm2301 = vmor %vm2299, %vm2300
        %v2302 = vsel %vm2301, %v2293, %v2298
        %v2303 = vrsqrt.pop %v2281
        %v2304 = vmul.f32 %v2303, %v2281
        %v2305 = vmul.f32 %v2304, %v2303
        %v2306 = vmul.f32 0.5, %v2305
        %v2307 = vsub.f32 1.5, %v2306
        %v2308 = vmul.f32 %v2303, %v2307
        %vm2309 = vweird.f32 %v2281
        %vm2310 = vweird.f32 %v2303
        %vm2311 = vmor %vm2309, %vm2310
        %v2312 = vsel %vm2311, %v2303, %v2308
        %v2313 = vrsqrt.pop %v2282
        %v2314 = vmul.f32 %v2313, %v2282
        %v2315 = vmul.f32 %v2314, %v2313
        %v2316 = vmul.f32 0.5, %v2315
        %v2317 = vsub.f32 1.5, %v2316
        %v2318 = vmul.f32 %v2313, %v2317
        %vm2319 = vweird.f32 %v2282
        %vm2320 = vweird.f32 %v2313
        %vm2321 = vmor %vm2319, %vm2320
        %v2322 = vsel %vm2321, %v2313, %v2318
        %v2323 = vmul.f32 %v2259, %v2292
        %v2324 = vmul.f32 %v2260, %v2302
        %v2325 = vmul.f32 %v2261, %v2312
        %v2326 = vmul.f32 %v2262, %v2322
        %v2328 = vperm.slane %v2238, 0
        %v2330 = vmul.f32 %v2323, %v2328
        %v2331 = vmul.f32 %v2324, %v2328
        %v2332 = vmul.f32 %v2325, %v2328
        %v2333 = vmul.f32 %v2326, %v2328
        %v2335 = vperm.slane %v2239, 0
        %v2337 = vadd.f32 %v2330, %v2335
        %v2338 = vadd.f32 %v2331, %v2335
        %v2339 = vadd.f32 %v2332, %v2335
        %v2340 = vadd.f32 %v2333, %v2335
        %v2341 = vpack.c.bf16 %v2338, %v2337
        %v2342 = vpack.c.bf16 %v2340, %v2339
        %v2343 = vld [vmem:[%s1024] sm:$0xff]
        %v2344 = vld [vmem:[%s1024 + $0x8] sm:$0xff]
        %v2345 = vld [vmem:[%s1024 + $0x10] sm:$0xff]
        %v2346 = vld [vmem:[%s1024 + $0x18] sm:$0xff]
        %v2347 = vld [vmem:[%s1024 + $0x20] sm:$0xff]
        %v2348 = vld [vmem:[%s1024 + $0x28] sm:$0xff]
        %v2349 = vld [vmem:[%s1024 + $0x30] sm:$0xff]
        %v2350 = vld [vmem:[%s1024 + $0x38] sm:$0xff]
        %v2351 = vld [vmem:[%s1024 + $0x40] sm:$0xff]
        %v2352 = vld [vmem:[%s1024 + $0x48] sm:$0xff]
        %v2353 = vld [vmem:[%s1024 + $0x50] sm:$0xff]
        %v2354 = vld [vmem:[%s1024 + $0x58] sm:$0xff]
        %v2355 = vld [vmem:[%s1024 + $0x60] sm:$0xff]
        %v2356 = vld [vmem:[%s1024 + $0x68] sm:$0xff]
        %v2357 = vld [vmem:[%s1024 + $0x70] sm:$0xff]
        %v2358 = vld [vmem:[%s1024 + $0x78] sm:$0xff]
        %v2359 = vld [vmem:[%s1024 + $0x80] sm:$0xff]
        %v2360 = vld [vmem:[%s1024 + $0x88] sm:$0xff]
        %v2361 = vld [vmem:[%s1024 + $0x90] sm:$0xff]
        %v2362 = vld [vmem:[%s1024 + $0x98] sm:$0xff]
        %v2363 = vld [vmem:[%s1024 + $0xa0] sm:$0xff]
        %v2364 = vld [vmem:[%s1024 + $0xa8] sm:$0xff]
        %v2365 = vld [vmem:[%s1024 + $0xb0] sm:$0xff]
        %v2366 = vld [vmem:[%s1024 + $0xb8] sm:$0xff]
        %v2367 = vld [vmem:[%s1024 + $0xc0] sm:$0xff]
        %v2368 = vld [vmem:[%s1024 + $0xc8] sm:$0xff]
        %v2369 = vld [vmem:[%s1024 + $0xd0] sm:$0xff]
        %v2370 = vld [vmem:[%s1024 + $0xd8] sm:$0xff]
        %v2371 = vld [vmem:[%s1024 + $0xe0] sm:$0xff]
        %v2372 = vld [vmem:[%s1024 + $0xe8] sm:$0xff]
        %v2373 = vld [vmem:[%s1024 + $0xf0] sm:$0xff]
        %v2374 = vld [vmem:[%s1024 + $0xf8] sm:$0xff]
        %v2375 = vld [vmem:[%s1028] sm:$0xf]
        %v2377 = vperm.slane %v2375, 0
        %v2378 = vperm.slane %v2375, 1
        %v2379 = vperm.slane %v2375, 2
        %v2380 = vperm.slane %v2375, 3
        %v2417 = vunpack.c.l.b16 %v2343
        %v2418 = vunpack.c.h.b16 %v2343
        %v2419 = vunpack.c.l.b16 %v2344
        %v2420 = vunpack.c.h.b16 %v2344
        %v2421 = vunpack.c.l.b16 %v2345
        %v2422 = vunpack.c.h.b16 %v2345
        %v2423 = vunpack.c.l.b16 %v2346
        %v2424 = vunpack.c.h.b16 %v2346
        %v2425 = vunpack.c.l.b16 %v2347
        %v2426 = vunpack.c.h.b16 %v2347
        %v2427 = vunpack.c.l.b16 %v2348
        %v2428 = vunpack.c.h.b16 %v2348
        %v2429 = vunpack.c.l.b16 %v2349
        %v2430 = vunpack.c.h.b16 %v2349
        %v2431 = vunpack.c.l.b16 %v2350
        %v2432 = vunpack.c.h.b16 %v2350
        %v2433 = vunpack.c.l.b16 %v2351
        %v2434 = vunpack.c.h.b16 %v2351
        %v2435 = vunpack.c.l.b16 %v2352
        %v2436 = vunpack.c.h.b16 %v2352
        %v2437 = vunpack.c.l.b16 %v2353
        %v2438 = vunpack.c.h.b16 %v2353
        %v2439 = vunpack.c.l.b16 %v2354
        %v2440 = vunpack.c.h.b16 %v2354
        %v2441 = vunpack.c.l.b16 %v2355
        %v2442 = vunpack.c.h.b16 %v2355
        %v2443 = vunpack.c.l.b16 %v2356
        %v2444 = vunpack.c.h.b16 %v2356
        %v2445 = vunpack.c.l.b16 %v2357
        %v2446 = vunpack.c.h.b16 %v2357
        %v2447 = vunpack.c.l.b16 %v2358
        %v2448 = vunpack.c.h.b16 %v2358
        %v2449 = vunpack.c.l.b16 %v2359
        %v2450 = vunpack.c.h.b16 %v2359
        %v2451 = vunpack.c.l.b16 %v2360
        %v2452 = vunpack.c.h.b16 %v2360
        %v2453 = vunpack.c.l.b16 %v2361
        %v2454 = vunpack.c.h.b16 %v2361
        %v2455 = vunpack.c.l.b16 %v2362
        %v2456 = vunpack.c.h.b16 %v2362
        %v2457 = vunpack.c.l.b16 %v2363
        %v2458 = vunpack.c.h.b16 %v2363
        %v2459 = vunpack.c.l.b16 %v2364
        %v2460 = vunpack.c.h.b16 %v2364
        %v2461 = vunpack.c.l.b16 %v2365
        %v2462 = vunpack.c.h.b16 %v2365
        %v2463 = vunpack.c.l.b16 %v2366
        %v2464 = vunpack.c.h.b16 %v2366
        %v2465 = vunpack.c.l.b16 %v2367
        %v2466 = vunpack.c.h.b16 %v2367
        %v2467 = vunpack.c.l.b16 %v2368
        %v2468 = vunpack.c.h.b16 %v2368
        %v2469 = vunpack.c.l.b16 %v2369
        %v2470 = vunpack.c.h.b16 %v2369
        %v2471 = vunpack.c.l.b16 %v2370
        %v2472 = vunpack.c.h.b16 %v2370
        %v2473 = vunpack.c.l.b16 %v2371
        %v2474 = vunpack.c.h.b16 %v2371
        %v2475 = vunpack.c.l.b16 %v2372
        %v2476 = vunpack.c.h.b16 %v2372
        %v2477 = vunpack.c.l.b16 %v2373
        %v2478 = vunpack.c.h.b16 %v2373
        %v2479 = vunpack.c.l.b16 %v2374
        %v2480 = vunpack.c.h.b16 %v2374
        %v2481 = vpack.c.b16 %v2421, %v2417
        %v2482 = vpack.c.b16 %v2422, %v2418
        %v2483 = vpack.c.b16 %v2423, %v2419
        %v2484 = vpack.c.b16 %v2424, %v2420
        %v2485 = vpack.c.b16 %v2429, %v2425
        %v2486 = vpack.c.b16 %v2430, %v2426
        %v2487 = vpack.c.b16 %v2431, %v2427
        %v2488 = vpack.c.b16 %v2432, %v2428
        %v2489 = vpack.c.b16 %v2437, %v2433
        %v2490 = vpack.c.b16 %v2438, %v2434
        %v2491 = vpack.c.b16 %v2439, %v2435
        %v2492 = vpack.c.b16 %v2440, %v2436
        %v2493 = vpack.c.b16 %v2445, %v2441
        %v2494 = vpack.c.b16 %v2446, %v2442
        %v2495 = vpack.c.b16 %v2447, %v2443
        %v2496 = vpack.c.b16 %v2448, %v2444
        %v2497 = vpack.c.b16 %v2453, %v2449
        %v2498 = vpack.c.b16 %v2454, %v2450
        %v2499 = vpack.c.b16 %v2455, %v2451
        %v2500 = vpack.c.b16 %v2456, %v2452
        %v2501 = vpack.c.b16 %v2461, %v2457
        %v2502 = vpack.c.b16 %v2462, %v2458
        %v2503 = vpack.c.b16 %v2463, %v2459
        %v2504 = vpack.c.b16 %v2464, %v2460
        %v2505 = vpack.c.b16 %v2469, %v2465
        %v2506 = vpack.c.b16 %v2470, %v2466
        %v2507 = vpack.c.b16 %v2471, %v2467
        %v2508 = vpack.c.b16 %v2472, %v2468
        %v2509 = vpack.c.b16 %v2477, %v2473
        %v2510 = vpack.c.b16 %v2478, %v2474
        %v2511 = vpack.c.b16 %v2479, %v2475
        %v2512 = vpack.c.b16 %v2480, %v2476
        %2545 = vmatpush.bf16.msra.mxu0 %v2509
        %2546 = vmatpush.bf16.msra.mxu0 %v2505
        %2547 = vmatpush.bf16.msra.mxu0 %v2501
        %2548 = vmatpush.bf16.msra.mxu0 %v2497
        %2549 = vmatpush.bf16.msra.mxu0 %v2493
        %2550 = vmatpush.bf16.msra.mxu0 %v2489
        %2551 = vmatpush.bf16.msra.mxu0 %v2485
        %2552 = vmatpush.bf16.msra.mxu0 %v2481
        %2553 = vmatmul.bf16.gmra.mxu0 %v2341
        %v2554 = vpop.f32.mrf.mxu0
        %v2555 = vadd.f32 %v2377, %v2554
        %v2556 = vpop.f32.mrf.mxu0
        %v2557 = vadd.f32 %v2377, %v2556
        %2558 = vmatmul.bf16.gmra.mxu0 %v2342
        %v2559 = vpop.f32.mrf.mxu0
        %v2560 = vadd.f32 %v2377, %v2559
        %v2561 = vpop.f32.mrf.mxu0
        %v2562 = vadd.f32 %v2377, %v2561
        %2563 = vdwg.mxu0
        %2564 = vmatpush.bf16.msra.mxu0 %v2510
        %2565 = vmatpush.bf16.msra.mxu0 %v2506
        %2566 = vmatpush.bf16.msra.mxu0 %v2502
        %2567 = vmatpush.bf16.msra.mxu0 %v2498
        %2568 = vmatpush.bf16.msra.mxu0 %v2494
        %2569 = vmatpush.bf16.msra.mxu0 %v2490
        %2570 = vmatpush.bf16.msra.mxu0 %v2486
        %2571 = vmatpush.bf16.msra.mxu0 %v2482
        %2572 = vmatmul.bf16.gmra.mxu0 %v2341
        %v2573 = vpop.f32.mrf.mxu0
        %v2574 = vadd.f32 %v2378, %v2573
        %v2575 = vpop.f32.mrf.mxu0
        %v2576 = vadd.f32 %v2378, %v2575
        %2577 = vmatmul.bf16.gmra.mxu0 %v2342
        %v2578 = vpop.f32.mrf.mxu0
        %v2579 = vadd.f32 %v2378, %v2578
        %v2580 = vpop.f32.mrf.mxu0
        %v2581 = vadd.f32 %v2378, %v2580
        %2582 = vdwg.mxu0
        %2583 = vmatpush.bf16.msra.mxu0 %v2511
        %2584 = vmatpush.bf16.msra.mxu0 %v2507
        %2585 = vmatpush.bf16.msra.mxu0 %v2503
        %2586 = vmatpush.bf16.msra.mxu0 %v2499
        %2587 = vmatpush.bf16.msra.mxu0 %v2495
        %2588 = vmatpush.bf16.msra.mxu0 %v2491
        %2589 = vmatpush.bf16.msra.mxu0 %v2487
        %2590 = vmatpush.bf16.msra.mxu0 %v2483
        %2591 = vmatmul.bf16.gmra.mxu0 %v2341
        %v2592 = vpop.f32.mrf.mxu0
        %v2593 = vadd.f32 %v2379, %v2592
        %v2594 = vpop.f32.mrf.mxu0
        %v2595 = vadd.f32 %v2379, %v2594
        %2596 = vmatmul.bf16.gmra.mxu0 %v2342
        %v2597 = vpop.f32.mrf.mxu0
        %v2598 = vadd.f32 %v2379, %v2597
        %v2599 = vpop.f32.mrf.mxu0
        %v2600 = vadd.f32 %v2379, %v2599
        %2601 = vdwg.mxu0
        %2602 = vmatpush.bf16.msra.mxu0 %v2512
        %2603 = vmatpush.bf16.msra.mxu0 %v2508
        %2604 = vmatpush.bf16.msra.mxu0 %v2504
        %2605 = vmatpush.bf16.msra.mxu0 %v2500
        %2606 = vmatpush.bf16.msra.mxu0 %v2496
        %2607 = vmatpush.bf16.msra.mxu0 %v2492
        %2608 = vmatpush.bf16.msra.mxu0 %v2488
        %2609 = vmatpush.bf16.msra.mxu0 %v2484
        %2610 = vmatmul.bf16.gmra.mxu0 %v2341
        %v2611 = vpop.f32.mrf.mxu0
        %v2612 = vadd.f32 %v2380, %v2611
        %v2613 = vpop.f32.mrf.mxu0
        %v2614 = vadd.f32 %v2380, %v2613
        %2615 = vmatmul.bf16.gmra.mxu0 %v2342
        %v2616 = vpop.f32.mrf.mxu0
        %v2617 = vadd.f32 %v2380, %v2616
        %v2618 = vpop.f32.mrf.mxu0
        %v2619 = vadd.f32 %v2380, %v2618
        %2620 = vdwg.mxu0
        %v2621 = vmul.f32 %v2555, 0.5
        %v2622 = vmul.f32 %v2574, 0.5
        %v2623 = vmul.f32 %v2593, 0.5
        %v2624 = vmul.f32 %v2612, 0.5
        %v2625 = vmul.f32 %v2557, 0.5
        %v2626 = vmul.f32 %v2576, 0.5
        %v2627 = vmul.f32 %v2595, 0.5
        %v2628 = vmul.f32 %v2614, 0.5
        %v2629 = vmul.f32 %v2560, 0.5
        %v2630 = vmul.f32 %v2579, 0.5
        %v2631 = vmul.f32 %v2598, 0.5
        %v2632 = vmul.f32 %v2617, 0.5
        %v2633 = vmul.f32 %v2562, 0.5
        %v2634 = vmul.f32 %v2581, 0.5
        %v2635 = vmul.f32 %v2600, 0.5
        %v2636 = vmul.f32 %v2619, 0.5
        %v2637 = vmul.f32 %v2555, 0.044715
        %v2638 = vmul.f32 %v2574, 0.044715
        %v2639 = vmul.f32 %v2593, 0.044715
        %v2640 = vmul.f32 %v2612, 0.044715
        %v2641 = vmul.f32 %v2557, 0.044715
        %v2642 = vmul.f32 %v2576, 0.044715
        %v2643 = vmul.f32 %v2595, 0.044715
        %v2644 = vmul.f32 %v2614, 0.044715
        %v2645 = vmul.f32 %v2560, 0.044715
        %v2646 = vmul.f32 %v2579, 0.044715
        %v2647 = vmul.f32 %v2598, 0.044715
        %v2648 = vmul.f32 %v2617, 0.044715
        %v2649 = vmul.f32 %v2562, 0.044715
        %v2650 = vmul.f32 %v2581, 0.044715
        %v2651 = vmul.f32 %v2600, 0.044715
        %v2652 = vmul.f32 %v2619, 0.044715
        %v2653 = vmul.f32 %v2637, %v2555
        %v2654 = vmul.f32 %v2638, %v2574
        %v2655 = vmul.f32 %v2639, %v2593
        %v2656 = vmul.f32 %v2640, %v2612
        %v2657 = vmul.f32 %v2641, %v2557
        %v2658 = vmul.f32 %v2642, %v2576
        %v2659 = vmul.f32 %v2643, %v2595
        %v2660 = vmul.f32 %v2644, %v2614
        %v2661 = vmul.f32 %v2645, %v2560
        %v2662 = vmul.f32 %v2646, %v2579
        %v2663 = vmul.f32 %v2647, %v2598
        %v2664 = vmul.f32 %v2648, %v2617
        %v2665 = vmul.f32 %v2649, %v2562
        %v2666 = vmul.f32 %v2650, %v2581
        %v2667 = vmul.f32 %v2651, %v2600
        %v2668 = vmul.f32 %v2652, %v2619
        %v2669 = vmul.f32 %v2653, %v2555
        %v2670 = vmul.f32 %v2654, %v2574
        %v2671 = vmul.f32 %v2655, %v2593
        %v2672 = vmul.f32 %v2656, %v2612
        %v2673 = vmul.f32 %v2657, %v2557
        %v2674 = vmul.f32 %v2658, %v2576
        %v2675 = vmul.f32 %v2659, %v2595
        %v2676 = vmul.f32 %v2660, %v2614
        %v2677 = vmul.f32 %v2661, %v2560
        %v2678 = vmul.f32 %v2662, %v2579
        %v2679 = vmul.f32 %v2663, %v2598
        %v2680 = vmul.f32 %v2664, %v2617
        %v2681 = vmul.f32 %v2665, %v2562
        %v2682 = vmul.f32 %v2666, %v2581
        %v2683 = vmul.f32 %v2667, %v2600
        %v2684 = vmul.f32 %v2668, %v2619
        %v2685 = vadd.f32 %v2555, %v2669
        %v2686 = vadd.f32 %v2574, %v2670
        %v2687 = vadd.f32 %v2593, %v2671
        %v2688 = vadd.f32 %v2612, %v2672
        %v2689 = vadd.f32 %v2557, %v2673
        %v2690 = vadd.f32 %v2576, %v2674
        %v2691 = vadd.f32 %v2595, %v2675
        %v2692 = vadd.f32 %v2614, %v2676
        %v2693 = vadd.f32 %v2560, %v2677
        %v2694 = vadd.f32 %v2579, %v2678
        %v2695 = vadd.f32 %v2598, %v2679
        %v2696 = vadd.f32 %v2617, %v2680
        %v2697 = vadd.f32 %v2562, %v2681
        %v2698 = vadd.f32 %v2581, %v2682
        %v2699 = vadd.f32 %v2600, %v2683
        %v2700 = vadd.f32 %v2619, %v2684
        %v2701 = vmul.f32 %v2685, 0.7978846
        %v2702 = vmul.f32 %v2686, 0.7978846
        %v2703 = vmul.f32 %v2687, 0.7978846
        %v2704 = vmul.f32 %v2688, 0.7978846
        %v2705 = vmul.f32 %v2689, 0.7978846
        %v2706 = vmul.f32 %v2690, 0.7978846
        %v2707 = vmul.f32 %v2691, 0.7978846
        %v2708 = vmul.f32 %v2692, 0.7978846
        %v2709 = vmul.f32 %v2693, 0.7978846
        %v2710 = vmul.f32 %v2694, 0.7978846
        %v2711 = vmul.f32 %v2695, 0.7978846
        %v2712 = vmul.f32 %v2696, 0.7978846
        %v2713 = vmul.f32 %v2697, 0.7978846
        %v2714 = vmul.f32 %v2698, 0.7978846
        %v2715 = vmul.f32 %v2699, 0.7978846
        %v2716 = vmul.f32 %v2700, 0.7978846
        %v2717 = vtanh.pop %v2701
        %v2718 = vtanh.pop %v2702
        %v2719 = vtanh.pop %v2703
        %v2720 = vtanh.pop %v2704
        %v2721 = vtanh.pop %v2705
        %v2722 = vtanh.pop %v2706
        %v2723 = vtanh.pop %v2707
        %v2724 = vtanh.pop %v2708
        %v2725 = vtanh.pop %v2709
        %v2726 = vtanh.pop %v2710
        %v2727 = vtanh.pop %v2711
        %v2728 = vtanh.pop %v2712
        %v2729 = vtanh.pop %v2713
        %v2730 = vtanh.pop %v2714
        %v2731 = vtanh.pop %v2715
        %v2732 = vtanh.pop %v2716
        %v2733 = vadd.f32 %v2717, 1.0
        %v2734 = vadd.f32 %v2718, 1.0
        %v2735 = vadd.f32 %v2719, 1.0
        %v2736 = vadd.f32 %v2720, 1.0
        %v2737 = vadd.f32 %v2721, 1.0
        %v2738 = vadd.f32 %v2722, 1.0
        %v2739 = vadd.f32 %v2723, 1.0
        %v2740 = vadd.f32 %v2724, 1.0
        %v2741 = vadd.f32 %v2725, 1.0
        %v2742 = vadd.f32 %v2726, 1.0
        %v2743 = vadd.f32 %v2727, 1.0
        %v2744 = vadd.f32 %v2728, 1.0
        %v2745 = vadd.f32 %v2729, 1.0
        %v2746 = vadd.f32 %v2730, 1.0
        %v2747 = vadd.f32 %v2731, 1.0
        %v2748 = vadd.f32 %v2732, 1.0
        %v2749 = vmul.f32 %v2621, %v2733
        %v2750 = vmul.f32 %v2622, %v2734
        %v2751 = vmul.f32 %v2623, %v2735
        %v2752 = vmul.f32 %v2624, %v2736
        %v2753 = vmul.f32 %v2625, %v2737
        %v2754 = vmul.f32 %v2626, %v2738
        %v2755 = vmul.f32 %v2627, %v2739
        %v2756 = vmul.f32 %v2628, %v2740
        %v2757 = vmul.f32 %v2629, %v2741
        %v2758 = vmul.f32 %v2630, %v2742
        %v2759 = vmul.f32 %v2631, %v2743
        %v2760 = vmul.f32 %v2632, %v2744
        %v2761 = vmul.f32 %v2633, %v2745
        %v2762 = vmul.f32 %v2634, %v2746
        %v2763 = vmul.f32 %v2635, %v2747
        %v2764 = vmul.f32 %v2636, %v2748
        %v2765 = vpack.c.bf16 %v2753, %v2749
        %v2766 = vpack.c.bf16 %v2754, %v2750
        %v2767 = vpack.c.bf16 %v2755, %v2751
        %v2768 = vpack.c.bf16 %v2756, %v2752
        %v2769 = vpack.c.bf16 %v2761, %v2757
        %v2770 = vpack.c.bf16 %v2762, %v2758
        %v2771 = vpack.c.bf16 %v2763, %v2759
        %v2772 = vpack.c.bf16 %v2764, %v2760
        %v2773 = vld [vmem:[%s859] sm:$0xf]
        %v2774 = vld [vmem:[%s859 + $0x4] sm:$0xf]
        %v2775 = vld [vmem:[%s859 + $0x8] sm:$0xf]
        %v2776 = vld [vmem:[%s859 + $0xc] sm:$0xf]
        %v2777 = vld [vmem:[%s859 + $0x10] sm:$0xf]
        %v2778 = vld [vmem:[%s859 + $0x14] sm:$0xf]
        %v2779 = vld [vmem:[%s859 + $0x18] sm:$0xf]
        %v2780 = vld [vmem:[%s859 + $0x1c] sm:$0xf]
        %v2781 = vld [vmem:[%s859 + $0x20] sm:$0xf]
        %v2782 = vld [vmem:[%s859 + $0x24] sm:$0xf]
        %v2783 = vld [vmem:[%s859 + $0x28] sm:$0xf]
        %v2784 = vld [vmem:[%s859 + $0x2c] sm:$0xf]
        %v2785 = vld [vmem:[%s859 + $0x30] sm:$0xf]
        %v2786 = vld [vmem:[%s859 + $0x34] sm:$0xf]
        %v2787 = vld [vmem:[%s859 + $0x38] sm:$0xf]
        %v2788 = vld [vmem:[%s859 + $0x3c] sm:$0xf]
        %v2789 = vld [vmem:[%s859 + $0x40] sm:$0xf]
        %v2790 = vld [vmem:[%s859 + $0x44] sm:$0xf]
        %v2791 = vld [vmem:[%s859 + $0x48] sm:$0xf]
        %v2792 = vld [vmem:[%s859 + $0x4c] sm:$0xf]
        %v2793 = vld [vmem:[%s859 + $0x50] sm:$0xf]
        %v2794 = vld [vmem:[%s859 + $0x54] sm:$0xf]
        %v2795 = vld [vmem:[%s859 + $0x58] sm:$0xf]
        %v2796 = vld [vmem:[%s859 + $0x5c] sm:$0xf]
        %v2797 = vld [vmem:[%s859 + $0x60] sm:$0xf]
        %v2798 = vld [vmem:[%s859 + $0x64] sm:$0xf]
        %v2799 = vld [vmem:[%s859 + $0x68] sm:$0xf]
        %v2800 = vld [vmem:[%s859 + $0x6c] sm:$0xf]
        %v2801 = vld [vmem:[%s859 + $0x70] sm:$0xf]
        %v2802 = vld [vmem:[%s859 + $0x74] sm:$0xf]
        %v2803 = vld [vmem:[%s859 + $0x78] sm:$0xf]
        %v2804 = vld [vmem:[%s859 + $0x7c] sm:$0xf]
        %v2805 = vld [vmem:[%s859 + $0x80] sm:$0xf]
        %v2806 = vld [vmem:[%s859 + $0x84] sm:$0xf]
        %v2807 = vld [vmem:[%s859 + $0x88] sm:$0xf]
        %v2808 = vld [vmem:[%s859 + $0x8c] sm:$0xf]
        %v2809 = vld [vmem:[%s859 + $0x90] sm:$0xf]
        %v2810 = vld [vmem:[%s859 + $0x94] sm:$0xf]
        %v2811 = vld [vmem:[%s859 + $0x98] sm:$0xf]
        %v2812 = vld [vmem:[%s859 + $0x9c] sm:$0xf]
        %v2813 = vld [vmem:[%s859 + $0xa0] sm:$0xf]
        %v2814 = vld [vmem:[%s859 + $0xa4] sm:$0xf]
        %v2815 = vld [vmem:[%s859 + $0xa8] sm:$0xf]
        %v2816 = vld [vmem:[%s859 + $0xac] sm:$0xf]
        %v2817 = vld [vmem:[%s859 + $0xb0] sm:$0xf]
        %v2818 = vld [vmem:[%s859 + $0xb4] sm:$0xf]
        %v2819 = vld [vmem:[%s859 + $0xb8] sm:$0xf]
        %v2820 = vld [vmem:[%s859 + $0xbc] sm:$0xf]
        %v2821 = vld [vmem:[%s859 + $0xc0] sm:$0xf]
        %v2822 = vld [vmem:[%s859 + $0xc4] sm:$0xf]
        %v2823 = vld [vmem:[%s859 + $0xc8] sm:$0xf]
        %v2824 = vld [vmem:[%s859 + $0xcc] sm:$0xf]
        %v2825 = vld [vmem:[%s859 + $0xd0] sm:$0xf]
        %v2826 = vld [vmem:[%s859 + $0xd4] sm:$0xf]
        %v2827 = vld [vmem:[%s859 + $0xd8] sm:$0xf]
        %v2828 = vld [vmem:[%s859 + $0xdc] sm:$0xf]
        %v2829 = vld [vmem:[%s859 + $0xe0] sm:$0xf]
        %v2830 = vld [vmem:[%s859 + $0xe4] sm:$0xf]
        %v2831 = vld [vmem:[%s859 + $0xe8] sm:$0xf]
        %v2832 = vld [vmem:[%s859 + $0xec] sm:$0xf]
        %v2833 = vld [vmem:[%s859 + $0xf0] sm:$0xf]
        %v2834 = vld [vmem:[%s859 + $0xf4] sm:$0xf]
        %v2835 = vld [vmem:[%s859 + $0xf8] sm:$0xf]
        %v2836 = vld [vmem:[%s859 + $0xfc] sm:$0xf]
        %v2837 = vld [vmem:[%s868] sm:$0x1]
        %v2839 = vperm.slane %v2837, 0
        %v2905 = vunpack.c.l.b16 %v2773
        %v2906 = vunpack.c.l.b16 %v2774
        %v2907 = vunpack.c.l.b16 %v2775
        %v2908 = vunpack.c.l.b16 %v2776
        %v2909 = vunpack.c.l.b16 %v2777
        %v2910 = vunpack.c.l.b16 %v2778
        %v2911 = vunpack.c.l.b16 %v2779
        %v2912 = vunpack.c.l.b16 %v2780
        %v2913 = vunpack.c.l.b16 %v2781
        %v2914 = vunpack.c.l.b16 %v2782
        %v2915 = vunpack.c.l.b16 %v2783
        %v2916 = vunpack.c.l.b16 %v2784
        %v2917 = vunpack.c.l.b16 %v2785
        %v2918 = vunpack.c.l.b16 %v2786
        %v2919 = vunpack.c.l.b16 %v2787
        %v2920 = vunpack.c.l.b16 %v2788
        %v2921 = vunpack.c.l.b16 %v2789
        %v2922 = vunpack.c.l.b16 %v2790
        %v2923 = vunpack.c.l.b16 %v2791
        %v2924 = vunpack.c.l.b16 %v2792
        %v2925 = vunpack.c.l.b16 %v2793
        %v2926 = vunpack.c.l.b16 %v2794
        %v2927 = vunpack.c.l.b16 %v2795
        %v2928 = vunpack.c.l.b16 %v2796
        %v2929 = vunpack.c.l.b16 %v2797
        %v2930 = vunpack.c.l.b16 %v2798
        %v2931 = vunpack.c.l.b16 %v2799
        %v2932 = vunpack.c.l.b16 %v2800
        %v2933 = vunpack.c.l.b16 %v2801
        %v2934 = vunpack.c.l.b16 %v2802
        %v2935 = vunpack.c.l.b16 %v2803
        %v2936 = vunpack.c.l.b16 %v2804
        %v2937 = vunpack.c.l.b16 %v2805
        %v2938 = vunpack.c.l.b16 %v2806
        %v2939 = vunpack.c.l.b16 %v2807
        %v2940 = vunpack.c.l.b16 %v2808
        %v2941 = vunpack.c.l.b16 %v2809
        %v2942 = vunpack.c.l.b16 %v2810
        %v2943 = vunpack.c.l.b16 %v2811
        %v2944 = vunpack.c.l.b16 %v2812
        %v2945 = vunpack.c.l.b16 %v2813
        %v2946 = vunpack.c.l.b16 %v2814
        %v2947 = vunpack.c.l.b16 %v2815
        %v2948 = vunpack.c.l.b16 %v2816
        %v2949 = vunpack.c.l.b16 %v2817
        %v2950 = vunpack.c.l.b16 %v2818
        %v2951 = vunpack.c.l.b16 %v2819
        %v2952 = vunpack.c.l.b16 %v2820
        %v2953 = vunpack.c.l.b16 %v2821
        %v2954 = vunpack.c.l.b16 %v2822
        %v2955 = vunpack.c.l.b16 %v2823
        %v2956 = vunpack.c.l.b16 %v2824
        %v2957 = vunpack.c.l.b16 %v2825
        %v2958 = vunpack.c.l.b16 %v2826
        %v2959 = vunpack.c.l.b16 %v2827
        %v2960 = vunpack.c.l.b16 %v2828
        %v2961 = vunpack.c.l.b16 %v2829
        %v2962 = vunpack.c.l.b16 %v2830
        %v2963 = vunpack.c.l.b16 %v2831
        %v2964 = vunpack.c.l.b16 %v2832
        %v2965 = vunpack.c.l.b16 %v2833
        %v2966 = vunpack.c.l.b16 %v2834
        %v2967 = vunpack.c.l.b16 %v2835
        %v2968 = vunpack.c.l.b16 %v2836
        %v2969 = vpack.c.b16 %v2906, %v2905
        %v2970 = vpack.c.b16 %v2908, %v2907
        %v2971 = vpack.c.b16 %v2910, %v2909
        %v2972 = vpack.c.b16 %v2912, %v2911
        %v2973 = vpack.c.b16 %v2914, %v2913
        %v2974 = vpack.c.b16 %v2916, %v2915
        %v2975 = vpack.c.b16 %v2918, %v2917
        %v2976 = vpack.c.b16 %v2920, %v2919
        %v2977 = vpack.c.b16 %v2922, %v2921
        %v2978 = vpack.c.b16 %v2924, %v2923
        %v2979 = vpack.c.b16 %v2926, %v2925
        %v2980 = vpack.c.b16 %v2928, %v2927
        %v2981 = vpack.c.b16 %v2930, %v2929
        %v2982 = vpack.c.b16 %v2932, %v2931
        %v2983 = vpack.c.b16 %v2934, %v2933
        %v2984 = vpack.c.b16 %v2936, %v2935
        %v2985 = vpack.c.b16 %v2938, %v2937
        %v2986 = vpack.c.b16 %v2940, %v2939
        %v2987 = vpack.c.b16 %v2942, %v2941
        %v2988 = vpack.c.b16 %v2944, %v2943
        %v2989 = vpack.c.b16 %v2946, %v2945
        %v2990 = vpack.c.b16 %v2948, %v2947
        %v2991 = vpack.c.b16 %v2950, %v2949
        %v2992 = vpack.c.b16 %v2952, %v2951
        %v2993 = vpack.c.b16 %v2954, %v2953
        %v2994 = vpack.c.b16 %v2956, %v2955
        %v2995 = vpack.c.b16 %v2958, %v2957
        %v2996 = vpack.c.b16 %v2960, %v2959
        %v2997 = vpack.c.b16 %v2962, %v2961
        %v2998 = vpack.c.b16 %v2964, %v2963
        %v2999 = vpack.c.b16 %v2966, %v2965
        %v3000 = vpack.c.b16 %v2968, %v2967
        %3033 = vmatpush.bf16.msra.mxu0 %v2976
        %3034 = vmatpush.bf16.msra.mxu0 %v2975
        %3035 = vmatpush.bf16.msra.mxu0 %v2974
        %3036 = vmatpush.bf16.msra.mxu0 %v2973
        %3037 = vmatpush.bf16.msra.mxu0 %v2972
        %3038 = vmatpush.bf16.msra.mxu0 %v2971
        %3039 = vmatpush.bf16.msra.mxu0 %v2970
        %3040 = vmatpush.bf16.msra.mxu0 %v2969
        %3041 = vmatmul.bf16.gmra.mxu0 %v2765
        %v3042 = vpop.f32.mrf.mxu0
        %v3043 = vadd.f32 %v2839, %v3042
        %v3044 = vpop.f32.mrf.mxu0
        %v3045 = vadd.f32 %v2839, %v3044
        %3046 = vmatmul.bf16.gmra.mxu0 %v2769
        %v3047 = vpop.f32.mrf.mxu0
        %v3048 = vadd.f32 %v2839, %v3047
        %v3049 = vpop.f32.mrf.mxu0
        %v3050 = vadd.f32 %v2839, %v3049
        %3051 = vdwg.mxu0
        %3052 = vmatpush.bf16.msra.mxu0 %v2984
        %3053 = vmatpush.bf16.msra.mxu0 %v2983
        %3054 = vmatpush.bf16.msra.mxu0 %v2982
        %3055 = vmatpush.bf16.msra.mxu0 %v2981
        %3056 = vmatpush.bf16.msra.mxu0 %v2980
        %3057 = vmatpush.bf16.msra.mxu0 %v2979
        %3058 = vmatpush.bf16.msra.mxu0 %v2978
        %3059 = vmatpush.bf16.msra.mxu0 %v2977
        %3060 = vmatmul.bf16.gmra.mxu0 %v2766
        %v3061 = vpop.f32.mrf.mxu0
        %v3062 = vadd.f32 %v3043, %v3061
        %v3063 = vpop.f32.mrf.mxu0
        %v3064 = vadd.f32 %v3045, %v3063
        %3065 = vmatmul.bf16.gmra.mxu0 %v2770
        %v3066 = vpop.f32.mrf.mxu0
        %v3067 = vadd.f32 %v3048, %v3066
        %v3068 = vpop.f32.mrf.mxu0
        %v3069 = vadd.f32 %v3050, %v3068
        %3070 = vdwg.mxu0
        %3071 = vmatpush.bf16.msra.mxu0 %v2992
        %3072 = vmatpush.bf16.msra.mxu0 %v2991
        %3073 = vmatpush.bf16.msra.mxu0 %v2990
        %3074 = vmatpush.bf16.msra.mxu0 %v2989
        %3075 = vmatpush.bf16.msra.mxu0 %v2988
        %3076 = vmatpush.bf16.msra.mxu0 %v2987
        %3077 = vmatpush.bf16.msra.mxu0 %v2986
        %3078 = vmatpush.bf16.msra.mxu0 %v2985
        %3079 = vmatmul.bf16.gmra.mxu0 %v2767
        %v3080 = vpop.f32.mrf.mxu0
        %v3081 = vadd.f32 %v3062, %v3080
        %v3082 = vpop.f32.mrf.mxu0
        %v3083 = vadd.f32 %v3064, %v3082
        %3084 = vmatmul.bf16.gmra.mxu0 %v2771
        %v3085 = vpop.f32.mrf.mxu0
        %v3086 = vadd.f32 %v3067, %v3085
        %v3087 = vpop.f32.mrf.mxu0
        %v3088 = vadd.f32 %v3069, %v3087
        %3089 = vdwg.mxu0
        %3090 = vmatpush.bf16.msra.mxu0 %v3000
        %3091 = vmatpush.bf16.msra.mxu0 %v2999
        %3092 = vmatpush.bf16.msra.mxu0 %v2998
        %3093 = vmatpush.bf16.msra.mxu0 %v2997
        %3094 = vmatpush.bf16.msra.mxu0 %v2996
        %3095 = vmatpush.bf16.msra.mxu0 %v2995
        %3096 = vmatpush.bf16.msra.mxu0 %v2994
        %3097 = vmatpush.bf16.msra.mxu0 %v2993
        %3098 = vmatmul.bf16.gmra.mxu0 %v2768
        %v3099 = vpop.f32.mrf.mxu0
        %v3100 = vadd.f32 %v3081, %v3099
        %v3101 = vpop.f32.mrf.mxu0
        %v3102 = vadd.f32 %v3083, %v3101
        %3103 = vmatmul.bf16.gmra.mxu0 %v2772
        %v3104 = vpop.f32.mrf.mxu0
        %v3105 = vadd.f32 %v3086, %v3104
        %v3106 = vpop.f32.mrf.mxu0
        %v3107 = vadd.f32 %v3088, %v3106
        %3108 = vdwg.mxu0
        %v3109 = vadd.f32 %v3100, %v2337
        %v3110 = vadd.f32 %v3102, %v2338
        %v3111 = vadd.f32 %v3105, %v2339
        %v3112 = vadd.f32 %v3107, %v2340
        %v3113 = vld [vmem:[%s877] sm:$0x1]
        %v3114 = vld [vmem:[%s886] sm:$0x1]
        %3115 = vadd.xlane.f32.xlu0 %v3109
        %v3116 = vpop.xlane.xlu0 %3115
        %3117 = vadd.xlane.f32.xlu0 %v3110
        %v3118 = vpop.xlane.xlu0 %3117
        %3119 = vadd.xlane.f32.xlu0 %v3111
        %v3120 = vpop.xlane.xlu0 %3119
        %3121 = vadd.xlane.f32.xlu0 %v3112
        %v3122 = vpop.xlane.xlu0 %3121
        %v3123 = vmul.f32 %v3116, %v2254
        %v3124 = vmul.f32 %v3118, %v2254
        %v3125 = vmul.f32 %v3120, %v2254
        %v3126 = vmul.f32 %v3122, %v2254
        %v3127 = vsub.f32 %v3109, %v3123
        %v3128 = vsub.f32 %v3110, %v3124
        %v3129 = vsub.f32 %v3111, %v3125
        %v3130 = vsub.f32 %v3112, %v3126
        %v3131 = vmul.f32 %v3127, %v3127
        %v3132 = vmul.f32 %v3128, %v3128
        %v3133 = vmul.f32 %v3129, %v3129
        %v3134 = vmul.f32 %v3130, %v3130
        %3135 = vadd.xlane.f32.xlu0 %v3131
        %v3136 = vpop.xlane.xlu0 %3135
        %3137 = vadd.xlane.f32.xlu0 %v3132
        %v3138 = vpop.xlane.xlu0 %3137
        %3139 = vadd.xlane.f32.xlu0 %v3133
        %v3140 = vpop.xlane.xlu0 %3139
        %3141 = vadd.xlane.f32.xlu0 %v3134
        %v3142 = vpop.xlane.xlu0 %3141
        %v3143 = vmul.f32 %v3136, %v2254
        %v3144 = vmul.f32 %v3138, %v2254
        %v3145 = vmul.f32 %v3140, %v2254
        %v3146 = vmul.f32 %v3142, %v2254
        %v3147 = vadd.f32 %v3143, 1e-12
        %v3148 = vadd.f32 %v3144, 1e-12
        %v3149 = vadd.f32 %v3145, 1e-12
        %v3150 = vadd.f32 %v3146, 1e-12
        %v3151 = vrsqrt.pop %v3147
        %v3152 = vmul.f32 %v3151, %v3147
        %v3153 = vmul.f32 %v3152, %v3151
        %v3154 = vmul.f32 0.5, %v3153
        %v3155 = vsub.f32 1.5, %v3154
        %v3156 = vmul.f32 %v3151, %v3155
        %vm3157 = vweird.f32 %v3147
        %vm3158 = vweird.f32 %v3151
        %vm3159 = vmor %vm3157, %vm3158
        %v3160 = vsel %vm3159, %v3151, %v3156
        %v3161 = vrsqrt.pop %v3148
        %v3162 = vmul.f32 %v3161, %v3148
        %v3163 = vmul.f32 %v3162, %v3161
        %v3164 = vmul.f32 0.5, %v3163
        %v3165 = vsub.f32 1.5, %v3164
        %v3166 = vmul.f32 %v3161, %v3165
        %vm3167 = vweird.f32 %v3148
        %vm3168 = vweird.f32 %v3161
        %vm3169 = vmor %vm3167, %vm3168
        %v3170 = vsel %vm3169, %v3161, %v3166
        %v3171 = vrsqrt.pop %v3149
        %v3172 = vmul.f32 %v3171, %v3149
        %v3173 = vmul.f32 %v3172, %v3171
        %v3174 = vmul.f32 0.5, %v3173
        %v3175 = vsub.f32 1.5, %v3174
        %v3176 = vmul.f32 %v3171, %v3175
        %vm3177 = vweird.f32 %v3149
        %vm3178 = vweird.f32 %v3171
        %vm3179 = vmor %vm3177, %vm3178
        %v3180 = vsel %vm3179, %v3171, %v3176
        %v3181 = vrsqrt.pop %v3150
        %v3182 = vmul.f32 %v3181, %v3150
        %v3183 = vmul.f32 %v3182, %v3181
        %v3184 = vmul.f32 0.5, %v3183
        %v3185 = vsub.f32 1.5, %v3184
        %v3186 = vmul.f32 %v3181, %v3185
        %vm3187 = vweird.f32 %v3150
        %vm3188 = vweird.f32 %v3181
        %vm3189 = vmor %vm3187, %vm3188
        %v3190 = vsel %vm3189, %v3181, %v3186
        %v3191 = vmul.f32 %v3127, %v3160
        %v3192 = vmul.f32 %v3128, %v3170
        %v3193 = vmul.f32 %v3129, %v3180
        %v3194 = vmul.f32 %v3130, %v3190
        %v3196 = vperm.slane %v3113, 0
        %v3198 = vmul.f32 %v3191, %v3196
        %v3199 = vmul.f32 %v3192, %v3196
        %v3200 = vmul.f32 %v3193, %v3196
        %v3201 = vmul.f32 %v3194, %v3196
        %v3203 = vperm.slane %v3114, 0
        %v3205 = vadd.f32 %v3198, %v3203
        %v3206 = vadd.f32 %v3199, %v3203
        %v3207 = vadd.f32 %v3200, %v3203
        %v3208 = vadd.f32 %v3201, %v3203
        %3209 = vst [vmem:[#allocation2] sm:$0xff] %v3205
        %3210 = vst [vmem:[#allocation2 + $0x8] sm:$0xff] %v3206
        %3211 = vst [vmem:[#allocation2 + $0x10] sm:$0xff] %v3207
        %3212 = vst [vmem:[#allocation2 + $0x18] sm:$0xff] %v3208
        %p3213 = scmp.eq.s32.totalorder %s49, 1
        // Predicated region
        $region157: #{squeezebert_class_forward.1} parent=99 // pred_check
          %p3214 = pneg %p3213
        $region158: #{squeezebert_class_forward.1} parent=99 // pred_check_branch
          %3216 = sbr.rel (%p3214) target = $region160
        $region159: #{squeezebert_class_forward.1} parent=99 // pred_region
          %v3217 = vld [vmem:[#allocation2] ss:$16 sm:$0x3]
          %v3218 = vpack.c.bf16 %v3217, %v3217
          %v3219 = vld [vmem:[%s16] sm:$0xf]
          %v3220 = vld [vmem:[%s16 + $0x4] sm:$0xf]
          %v3221 = vld [vmem:[%s16 + $0x8] sm:$0xf]
          %v3222 = vld [vmem:[%s16 + $0xc] sm:$0xf]
          %v3223 = vld [vmem:[%s16 + $0x10] sm:$0xf]
          %v3224 = vld [vmem:[%s16 + $0x14] sm:$0xf]
          %v3225 = vld [vmem:[%s16 + $0x18] sm:$0xf]
          %v3226 = vld [vmem:[%s16 + $0x1c] sm:$0xf]
          %v3227 = vld [vmem:[%s16 + $0x20] sm:$0xf]
          %v3228 = vld [vmem:[%s16 + $0x24] sm:$0xf]
          %v3229 = vld [vmem:[%s16 + $0x28] sm:$0xf]
          %v3230 = vld [vmem:[%s16 + $0x2c] sm:$0xf]
          %v3231 = vld [vmem:[%s16 + $0x30] sm:$0xf]
          %v3232 = vld [vmem:[%s16 + $0x34] sm:$0xf]
          %v3233 = vld [vmem:[%s16 + $0x38] sm:$0xf]
          %v3234 = vld [vmem:[%s16 + $0x3c] sm:$0xf]
          %v3235 = vld [vmem:[#allocation20] sm:$0x1]
          %v3237 = vperm.slane %v3235, 0
          %v3255 = vunpack.c.l.b16 %v3219
          %v3256 = vunpack.c.l.b16 %v3220
          %v3257 = vunpack.c.l.b16 %v3221
          %v3258 = vunpack.c.l.b16 %v3222
          %v3259 = vunpack.c.l.b16 %v3223
          %v3260 = vunpack.c.l.b16 %v3224
          %v3261 = vunpack.c.l.b16 %v3225
          %v3262 = vunpack.c.l.b16 %v3226
          %v3263 = vunpack.c.l.b16 %v3227
          %v3264 = vunpack.c.l.b16 %v3228
          %v3265 = vunpack.c.l.b16 %v3229
          %v3266 = vunpack.c.l.b16 %v3230
          %v3267 = vunpack.c.l.b16 %v3231
          %v3268 = vunpack.c.l.b16 %v3232
          %v3269 = vunpack.c.l.b16 %v3233
          %v3270 = vunpack.c.l.b16 %v3234
          %v3271 = vpack.c.b16 %v3256, %v3255
          %v3272 = vpack.c.b16 %v3258, %v3257
          %v3273 = vpack.c.b16 %v3260, %v3259
          %v3274 = vpack.c.b16 %v3262, %v3261
          %v3275 = vpack.c.b16 %v3264, %v3263
          %v3276 = vpack.c.b16 %v3266, %v3265
          %v3277 = vpack.c.b16 %v3268, %v3267
          %v3278 = vpack.c.b16 %v3270, %v3269
          %3287 = vmatpush.bf16.msra.mxu0 %v3278
          %3288 = vmatpush.bf16.msra.mxu0 %v3277
          %3289 = vmatpush.bf16.msra.mxu0 %v3276
          %3290 = vmatpush.bf16.msra.mxu0 %v3275
          %3291 = vmatpush.bf16.msra.mxu0 %v3274
          %3292 = vmatpush.bf16.msra.mxu0 %v3273
          %3293 = vmatpush.bf16.msra.mxu0 %v3272
          %3294 = vmatpush.bf16.msra.mxu0 %v3271
          %3295 = vmatmul.bf16.gmra.mxu0 %v3218
          %v3296 = vpop.f32.mrf.mxu0
          %v3297 = vadd.f32 %v3237, %v3296
          %v3298 = vpop.f32.mrf.mxu0
          %3299 = vdwg.mxu0
          %v3300 = vmul.f32 %v3297, 0.5
          %v3301 = vmul.f32 %v3297, 0.044715
          %v3302 = vmul.f32 %v3301, %v3297
          %v3303 = vmul.f32 %v3302, %v3297
          %v3304 = vadd.f32 %v3297, %v3303
          %v3305 = vmul.f32 %v3304, 0.7978846
          %v3306 = vtanh.pop %v3305
          %v3307 = vadd.f32 %v3306, 1.0
          %v3308 = vmul.f32 %v3300, %v3307
          %v3309 = vpack.c.bf16 %v3308, %v3308
          %v3310 = vld [vmem:[#allocation21] sm:$0xf]
          %v3311 = vld [vmem:[#allocation21 + $0x4] sm:$0xf]
          %v3312 = vld [vmem:[#allocation21 + $0x8] sm:$0xf]
          %v3313 = vld [vmem:[#allocation21 + $0xc] sm:$0xf]
          %v3314 = vld [vmem:[#allocation21 + $0x10] sm:$0xf]
          %v3315 = vld [vmem:[#allocation21 + $0x14] sm:$0xf]
          %v3316 = vld [vmem:[#allocation21 + $0x18] sm:$0xf]
          %v3317 = vld [vmem:[#allocation21 + $0x1c] sm:$0xf]
          %v3318 = vld [vmem:[#allocation21 + $0x20] sm:$0xf]
          %v3319 = vld [vmem:[#allocation21 + $0x24] sm:$0xf]
          %v3320 = vld [vmem:[#allocation21 + $0x28] sm:$0xf]
          %v3321 = vld [vmem:[#allocation21 + $0x2c] sm:$0xf]
          %v3322 = vld [vmem:[#allocation21 + $0x30] sm:$0xf]
          %v3323 = vld [vmem:[#allocation21 + $0x34] sm:$0xf]
          %v3324 = vld [vmem:[#allocation21 + $0x38] sm:$0xf]
          %v3325 = vld [vmem:[#allocation21 + $0x3c] sm:$0xf]
          %v3326 = vld [vmem:[#allocation23] sm:$0x1]
          %v3328 = vperm.slane %v3326, 0
          %v3346 = vunpack.c.l.b16 %v3310
          %v3347 = vunpack.c.l.b16 %v3311
          %v3348 = vunpack.c.l.b16 %v3312
          %v3349 = vunpack.c.l.b16 %v3313
          %v3350 = vunpack.c.l.b16 %v3314
          %v3351 = vunpack.c.l.b16 %v3315
          %v3352 = vunpack.c.l.b16 %v3316
          %v3353 = vunpack.c.l.b16 %v3317
          %v3354 = vunpack.c.l.b16 %v3318
          %v3355 = vunpack.c.l.b16 %v3319
          %v3356 = vunpack.c.l.b16 %v3320
          %v3357 = vunpack.c.l.b16 %v3321
          %v3358 = vunpack.c.l.b16 %v3322
          %v3359 = vunpack.c.l.b16 %v3323
          %v3360 = vunpack.c.l.b16 %v3324
          %v3361 = vunpack.c.l.b16 %v3325
          %v3362 = vpack.c.b16 %v3347, %v3346
          %v3363 = vpack.c.b16 %v3349, %v3348
          %v3364 = vpack.c.b16 %v3351, %v3350
          %v3365 = vpack.c.b16 %v3353, %v3352
          %v3366 = vpack.c.b16 %v3355, %v3354
          %v3367 = vpack.c.b16 %v3357, %v3356
          %v3368 = vpack.c.b16 %v3359, %v3358
          %v3369 = vpack.c.b16 %v3361, %v3360
          %3378 = vmatpush.bf16.msra.mxu0 %v3369
          %3379 = vmatpush.bf16.msra.mxu0 %v3368
          %3380 = vmatpush.bf16.msra.mxu0 %v3367
          %3381 = vmatpush.bf16.msra.mxu0 %v3366
          %3382 = vmatpush.bf16.msra.mxu0 %v3365
          %3383 = vmatpush.bf16.msra.mxu0 %v3364
          %3384 = vmatpush.bf16.msra.mxu0 %v3363
          %3385 = vmatpush.bf16.msra.mxu0 %v3362
          %3386 = vmatmul.bf16.gmra.mxu0 %v3309
          %v3387 = vpop.f32.mrf.mxu0
          %v3388 = vadd.f32 %v3328, %v3387
          %v3389 = vpop.f32.mrf.mxu0
          %3390 = vdwg.mxu0
          %3391 = vst [vmem:[#allocation24] sm:$0x3] %v3388
        $region160: #{squeezebert_class_forward.1} parent=99 // pred_fallthru
          _
        // Predicated region
        $region161: #{squeezebert_class_forward.1} parent=99 // pred_check
          %p3392 = pneg %p542
        $region162: #{squeezebert_class_forward.1} parent=99 // pred_check_branch
          %3394 = sbr.rel (%p3392) target = $region164
        $region163: #{squeezebert_class_forward.1} parent=99 // pred_region
          %3396 = vsyncadd [#allocation5], 0
          %s3398 = sshll.u32 [#allocation24], 4
          %s3399 = int_to_ptr.vmem [resolvable:$true] %s3398
          %s3400 = sshll.u32 %s20, 4
          %s3401 = int_to_ptr.hbm [resolvable:$true] %s3400
          %3403 = dma.vmem_to_hbm [thread:$0]  %s3399, 32, %s3401, [#allocation5]
        $region164: #{squeezebert_class_forward.1} parent=99 // pred_fallthru
          _
        // Predicated region
        $region165: #{squeezebert_class_forward.1} parent=99 // pred_check
          %p3404 = pneg %p542
        $region166: #{squeezebert_class_forward.1} parent=99 // pred_check_branch
          %3406 = sbr.rel (%p3404) target = $region168
        $region167: #{squeezebert_class_forward.1} parent=99 // pred_region
          %3408 = dma.done [#allocation5], 32
        $region168: #{squeezebert_class_forward.1} parent=99 // pred_fallthru
          _
      $region100: #{squeezebert_class_forward.1} parent=5 // pred_fallthru
        _
      %p3409 = scmp.le.s32.totalorder 2, %s44
      // Predicated region
      $region169: #{squeezebert_class_forward.1} parent=5 // pred_check
        %p3410 = pneg %p3409
      $region170: #{squeezebert_class_forward.1} parent=5 // pred_check_branch
        %3412 = sbr.rel (%p3410) target = $region172
      $region171: #{squeezebert_class_forward.1} parent=5 // pred_region
        %s3413 = ssub.s32 %s44, 2
      $region172: #{squeezebert_class_forward.1} parent=5 // pred_fallthru
        _
    $region6: #{squeezebert_class_forward.1} parent=1 // loop_footer
      %s48 = sadd.s32 1, %s44
    $region7: #{squeezebert_class_forward.1} parent=1 // loop_footer_branch
      %43 = sbr.rel target = $region3
    $region8: #{squeezebert_class_forward.1} parent=1 // loop_exit
      _
    %3414 = vsyncpa [#allocation4], 1
    %s3415 = scalar_lea.sflag [#allocation4], 1
    %3416 = vsyncpa %s3415, 1
    %3417 = vsyncpa [#allocation7], 1
    %s3418 = scalar_lea.sflag [#allocation7], 1
    %3419 = vsyncpa %s3418, 1
    %3420 = vsyncpa [#allocation10], 1
    %s3421 = scalar_lea.sflag [#allocation10], 1
    %3422 = vsyncpa %s3421, 1
    %3423 = vsyncpa [#allocation13], 1
    %s3424 = scalar_lea.sflag [#allocation13], 1
    %3425 = vsyncpa %s3424, 1
    %3426 = vsyncpa [#allocation16], 1
    %s3427 = scalar_lea.sflag [#allocation16], 1
    %3428 = vsyncpa %s3427, 1
    %3429 = vsyncpa [#allocation19], 1
    %3430 = vsyncpa [#allocation22], 1
    %3431 = vsyncpa [#allocation5], 1
    %s3432 = scalar_lea.sflag [#allocation5], 1
    %3433 = vsyncpa %s3432, 1

</llo_original>
